<compile_context>
chip_gen: v7x
topology: tpu7x:2x2x1
jax: 0.10.0
libtpu: 0.0.40
codegen_flags: <defaults>
</compile_context>

<pallas_src>
import numpy as np
import jax
import jax.numpy as jnp
from jax import lax
from jax.experimental import pallas as pl
from jax.experimental.pallas import tpu as pltpu


# ----------------------------------------------------------------------------
# Pallas kernel
# ----------------------------------------------------------------------------
def _make_resblock_kernel(H, W, Cin, Cout, stride):
    assert stride in (1, 2), "only stride 1 or 2 supported (matches typical usage)"
    HW = H * W
    bf16 = jnp.bfloat16
    f32 = jnp.float32

    def zero_border(ref, C):
        # Only the 1-px border must be zero (conv padding); the interior is fully
        # overwritten every step.  Border-only zeroing is ~5-10x cheaper than the
        # old full-buffer re-zero and stays correct under megacore batch sharding
        # (each TensorCore owns its own scratch).
        ref[0:1, :, :] = jnp.zeros((1, W + 2, C), ref.dtype)
        ref[H + 1:H + 2, :, :] = jnp.zeros((1, W + 2, C), ref.dtype)
        ref[:, 0:1, :] = jnp.zeros((H + 2, 1, C), ref.dtype)
        ref[:, W + 1:W + 2, :] = jnp.zeros((H + 2, 1, C), ref.dtype)

    def im2col(pad_ref, C):
        # (H+2, W+2, C) zero-padded activations -> (H*W, 9*C) bf16 patch matrix,
        # so the whole 3x3 conv becomes a single MXU matmul (K = 9*C).
        # The cast to bf16 happens once here (per conv, per tile), not per tap.
        xp = pad_ref[...]
        cols = [xp[dy:dy + H, dx:dx + W, :].reshape(HW, C)
                for dy in range(3) for dx in range(3)]
        return jnp.concatenate(cols, axis=-1).astype(bf16)

    def avgpool2(t, C):
        # 2x2 average pool, stride 2, no padding: (H, W, C) -> (H//2, W//2, C)
        t = t.reshape(H // 2, 2, W // 2, 2, C)
        return (t[:, 0, :, 0, :] + t[:, 0, :, 1, :]
                + t[:, 1, :, 0, :] + t[:, 1, :, 1, :]) * 0.25

    def main_path(x, w1_ref, b1_ref, w2_ref, b2_ref, xpad_ref, hpad_ref):
        zero_border(xpad_ref, Cin)
        zero_border(hpad_ref, Cout)
        # ReLU commutes with zero padding (relu(0) == 0): pad relu(x).
        xpad_ref[1:H + 1, 1:W + 1, :] = jnp.maximum(x, 0.0)
        h1 = jnp.dot(im2col(xpad_ref, Cin), w1_ref[...],
                     preferred_element_type=f32) + b1_ref[0]          # (HW, Cout) f32
        hpad_ref[1:H + 1, 1:W + 1, :] = jnp.maximum(h1, 0.0).reshape(H, W, Cout)
        h2 = jnp.dot(im2col(hpad_ref, Cout), w2_ref[...],
                     preferred_element_type=f32) + b2_ref[0]          # (HW, Cout) f32
        return h2

    if stride == 1:
        def kernel(x_ref, w1_ref, b1_ref, w2_ref, b2_ref, o_ref,
                   xpad_ref, hpad_ref):
            x = x_ref[0]                                              # (H, W, Cin) f32, raw
            h2 = main_path(x, w1_ref, b1_ref, w2_ref, b2_ref, xpad_ref, hpad_ref)
            # Identity bypass uses the raw (un-ReLU'd, f32) input.
            o_ref[0] = (h2 + x.reshape(HW, Cin)).astype(o_ref.dtype)
    else:
        def kernel(x_ref, w1_ref, b1_ref, w2_ref, b2_ref, wb_ref, bb_ref,
                   o_ref, xpad_ref, hpad_ref):
            x = x_ref[0]                                              # (H, W, Cin) f32, raw
            h2 = main_path(x, w1_ref, b1_ref, w2_ref, b2_ref, xpad_ref, hpad_ref)
            main_pooled = avgpool2(h2.reshape(H, W, Cout), Cout).reshape(HW // 4, Cout)
            # avgpool2 is linear and commutes with the 1x1 conv: pool the raw
            # input first, then matmul on 4x fewer rows.
            x_pooled = avgpool2(x, Cin).reshape(HW // 4, Cin).astype(bf16)
            byp = jnp.dot(x_pooled, wb_ref[...],
                          preferred_element_type=f32) + bb_ref[0]
            o_ref[0] = (main_pooled + byp).astype(o_ref.dtype)

    return kernel


# ----------------------------------------------------------------------------
# Wrapper (glue: NCHW<->NHWC transpose, 2-D weight repack, pallas_call plumbing)
# ----------------------------------------------------------------------------
def resblock_discriminator(x_nchw, params, stride):
    N, Cin, H, W = x_nchw.shape
    Cout = params["b1"].shape[0]
    if stride == 1:
        assert Cin == Cout, "stride==1 identity bypass requires in_channels == out_channels"
        Ho, Wo = H, W
    else:
        assert H % 2 == 0 and W % 2 == 0, "AvgPool2d(2, 2) path requires even H and W"
        Ho, Wo = H // 2, W // 2

    # NHWC, un-padded (padding happens inside the kernel — no extra HBM trip).
    x = jnp.transpose(x_nchw, (0, 2, 3, 1)).astype(jnp.float32)

    # Flat 2-D bf16 weights: row index ((dy*3 + dx)*C + c_in) matches the
    # im2col column order inside the kernel.
    w1 = params["w1"].reshape(9 * Cin, Cout).astype(jnp.bfloat16)
    w2 = params["w2"].reshape(9 * Cout, Cout).astype(jnp.bfloat16)
    b1 = params["b1"].reshape(1, Cout).astype(jnp.float32)
    b2 = params["b2"].reshape(1, Cout).astype(jnp.float32)

    kernel = _make_resblock_kernel(H, W, Cin, Cout, stride)

    def full(shape):
        return pl.BlockSpec(shape, lambda n: (0,) * len(shape))

    in_specs = [
        pl.BlockSpec((1, H, W, Cin), lambda n: (n, 0, 0, 0)),
        full((9 * Cin, Cout)), full((1, Cout)),
        full((9 * Cout, Cout)), full((1, Cout)),
    ]
    args = [x, w1, b1, w2, b2]
    if stride != 1:
        wb = params["wb"].astype(jnp.bfloat16)                 # (Cin, Cout) 1x1 conv
        bb = params["bb"].reshape(1, Cout).astype(jnp.float32)
        in_specs += [full((Cin, Cout)), full((1, Cout))]
        args += [wb, bb]

    out = pl.pallas_call(
        kernel,
        out_shape=jax.ShapeDtypeStruct((N, Ho * Wo, Cout), jnp.float32),
        grid_spec=pltpu.PrefetchScalarGridSpec(
            num_scalar_prefetch=0,
            grid=(N,),                                         # one grid step per batch element
            in_specs=in_specs,
            out_specs=pl.BlockSpec((1, Ho * Wo, Cout), lambda n: (n, 0, 0)),
            scratch_shapes=[
                pltpu.VMEM((H + 2, W + 2, Cin), jnp.float32),  # padded relu(x)
                pltpu.VMEM((H + 2, W + 2, Cout), jnp.float32), # padded relu(conv1)
            ],
        ),
        compiler_params=pltpu.CompilerParams(dimension_semantics=("parallel",)),
    )(*args)
    out = out.reshape(N, Ho, Wo, Cout)
    return jnp.transpose(out, (0, 3, 1, 2))                    # back to NCHW


# ----------------------------------------------------------------------------
# Deterministic parameter init (mirrors shapes / init style of the nn.Module)
# ----------------------------------------------------------------------------
def init_params(key, Cin, Cout, stride):
    ks = jax.random.split(key, 6)

    def xavier(k, shape, fan_in, fan_out, gain):
        bound = gain * np.sqrt(6.0 / (fan_in + fan_out))
        return jax.random.uniform(k, shape, jnp.float32, -bound, bound)

    def bias(k, shape, fan_in):
        bound = 1.0 / np.sqrt(fan_in)
        return jax.random.uniform(k, shape, jnp.float32, -bound, bound)

    p = {
        "w1": xavier(ks[0], (3, 3, Cin, Cout), Cin * 9, Cout * 9, 1.0),   # HWIO
        "b1": bias(ks[1], (Cout,), Cin * 9),
        "w2": xavier(ks[2], (3, 3, Cout, Cout), Cout * 9, Cout * 9, 1.0),
        "b2": bias(ks[3], (Cout,), Cout * 9),
    }
    if stride != 1:
        p["wb"] = xavier(ks[4], (Cin, Cout), Cin, Cout, np.sqrt(2.0))     # 1x1 conv
        p["bb"] = bias(ks[5], (Cout,), Cin)
    return p


# ----------------------------------------------------------------------------
# Pure-JAX f32 reference for correctness check
# ----------------------------------------------------------------------------
def ref_forward(x, params, stride):
    dn = ("NCHW", "HWIO", "NCHW")
    conv3 = lambda t, w: lax.conv_general_dilated(
        t, w, (1, 1), ((1, 1), (1, 1)), dimension_numbers=dn)
    relu = lambda t: jnp.maximum(t, 0.0)
    h = conv3(relu(x), params["w1"]) + params["b1"][None, :, None, None]
    h = conv3(relu(h), params["w2"]) + params["b2"][None, :, None, None]
    if stride == 1:
        return h + x
    pool = lambda t: t.reshape(t.shape[0], t.shape[1], t.shape[2] // 2, 2,
                               t.shape[3] // 2, 2).mean(axis=(3, 5))
    byp = lax.conv_general_dilated(
        x, params["wb"][None, None], (1, 1), ((0, 0), (0, 0)),
        dimension_numbers=dn) + params["bb"][None, :, None, None]
    return pool(h) + pool(byp)


if __name__ == "__main__":
    key = jax.random.PRNGKey(0)
    kx, kp1, kp2 = jax.random.split(key, 3)

    N, Cin, H, W = 2, 4, 16, 16
    x = jax.random.normal(kx, (N, Cin, H, W), jnp.float32)

    # Kernel uses bf16 MXU operands (f32 accumulation), so compare against the
    # f32 reference with bf16-appropriate tolerances.
    RTOL = ATOL = 2e-2

    # stride=2 block (downsampling, with 1x1 bypass conv): 4 -> 8 channels
    params2 = init_params(kp1, Cin, 8, stride=2)
    out2 = jax.block_until_ready(resblock_discriminator(x, params2, stride=2))
    ref2 = ref_forward(x, params2, stride=2)
    np.testing.assert_allclose(np.asarray(out2), np.asarray(ref2), rtol=RTOL, atol=ATOL)
    assert out2.shape == (N, 8, H // 2, W // 2)

    # stride=1 block (identity bypass): 4 -> 4 channels
    params1 = init_params(kp2, Cin, Cin, stride=1)
    out1 = jax.block_until_ready(resblock_discriminator(x, params1, stride=1))
    ref1 = ref_forward(x, params1, stride=1)
    np.testing.assert_allclose(np.asarray(out1), np.asarray(ref1), rtol=RTOL, atol=ATOL)
    assert out1.shape == (N, Cin, H, W)

    print("KERNEL_OK")
</pallas_src>

<mosaic_0001>
module attributes {stable_mosaic.version = 11 : i64} {
  func.func @kernel(%arg0: i32, %arg1: memref<1x16x16x4xf32, #tpu.memory_space<vmem>>, %arg2: memref<36x8xbf16, #tpu.memory_space<vmem>>, %arg3: memref<1x8xf32, #tpu.memory_space<vmem>>, %arg4: memref<72x8xbf16, #tpu.memory_space<vmem>>, %arg5: memref<1x8xf32, #tpu.memory_space<vmem>>, %arg6: memref<4x8xbf16, #tpu.memory_space<vmem>>, %arg7: memref<1x8xf32, #tpu.memory_space<vmem>>, %arg8: memref<1x64x8xf32, #tpu.memory_space<vmem>>, %arg9: memref<18x18x4xf32, #tpu.memory_space<vmem>>, %arg10: memref<18x18x8xf32, #tpu.memory_space<vmem>>) attributes {dimension_semantics = [#tpu.dimension_semantics<parallel>], iteration_bounds = array<i64: 2>, scalar_prefetch = 0 : i64, scratch_operands = 2 : i64, tpu.core_type = #tpu.core_type<tc>, window_params = [{transform_indices = @transform_0, window_bounds = array<i64: 1, 16, 16, 4>}, {pipeline_mode = #tpu.pipeline_mode<synchronous>, transform_indices = @transform_1, window_bounds = array<i64: 36, 8>}, {pipeline_mode = #tpu.pipeline_mode<synchronous>, transform_indices = @transform_2, window_bounds = array<i64: 1, 8>}, {pipeline_mode = #tpu.pipeline_mode<synchronous>, transform_indices = @transform_3, window_bounds = array<i64: 72, 8>}, {pipeline_mode = #tpu.pipeline_mode<synchronous>, transform_indices = @transform_4, window_bounds = array<i64: 1, 8>}, {pipeline_mode = #tpu.pipeline_mode<synchronous>, transform_indices = @transform_5, window_bounds = array<i64: 4, 8>}, {pipeline_mode = #tpu.pipeline_mode<synchronous>, transform_indices = @transform_6, window_bounds = array<i64: 1, 8>}, {transform_indices = @transform_7, window_bounds = array<i64: 1, 64, 8>}]} {
    %c0 = arith.constant 0 : index
    %c0_0 = arith.constant 0 : index
    %c0_1 = arith.constant 0 : index
    %c0_2 = arith.constant 0 : index
    %0 = vector.load %arg1[%c0, %c0_0, %c0_1, %c0_2] : memref<1x16x16x4xf32, #tpu.memory_space<vmem>>, vector<1x16x16x4xf32>
    %1 = vector.shape_cast %0 : vector<1x16x16x4xf32> to vector<16x16x4xf32>
    %cst = arith.constant 0.000000e+00 : f32
    %2 = vector.broadcast %cst : f32 to vector<1x18x4xf32>
    %c0_3 = arith.constant 0 : index
    %c0_4 = arith.constant 0 : index
    %c0_5 = arith.constant 0 : index
    %3 = vector.load %arg9[%c0_3, %c0_4, %c0_5] : memref<18x18x4xf32, #tpu.memory_space<vmem>>, vector<1x18x4xf32>
    tpu.vector_store %arg9[%c0_3, %c0_4, %c0_5], %2 {strides = array<i32>} : memref<18x18x4xf32, #tpu.memory_space<vmem>>, vector<1x18x4xf32>,
    %cst_6 = arith.constant 0.000000e+00 : f32
    %4 = vector.broadcast %cst_6 : f32 to vector<1x18x4xf32>
    %c17 = arith.constant 17 : index
    %c0_7 = arith.constant 0 : index
    %c0_8 = arith.constant 0 : index
    %5 = vector.load %arg9[%c17, %c0_7, %c0_8] : memref<18x18x4xf32, #tpu.memory_space<vmem>>, vector<1x18x4xf32>
    tpu.vector_store %arg9[%c17, %c0_7, %c0_8], %4 {strides = array<i32>} : memref<18x18x4xf32, #tpu.memory_space<vmem>>, vector<1x18x4xf32>,
    %cst_9 = arith.constant 0.000000e+00 : f32
    %6 = vector.broadcast %cst_9 : f32 to vector<18x1x4xf32>
    %c0_10 = arith.constant 0 : index
    %c0_11 = arith.constant 0 : index
    %c0_12 = arith.constant 0 : index
    %7 = vector.load %arg9[%c0_10, %c0_11, %c0_12] : memref<18x18x4xf32, #tpu.memory_space<vmem>>, vector<18x1x4xf32>
    tpu.vector_store %arg9[%c0_10, %c0_11, %c0_12], %6 {strides = array<i32>} : memref<18x18x4xf32, #tpu.memory_space<vmem>>, vector<18x1x4xf32>,
    %cst_13 = arith.constant 0.000000e+00 : f32
    %8 = vector.broadcast %cst_13 : f32 to vector<18x1x4xf32>
    %c0_14 = arith.constant 0 : index
    %c17_15 = arith.constant 17 : index
    %c0_16 = arith.constant 0 : index
    %9 = vector.load %arg9[%c0_14, %c17_15, %c0_16] : memref<18x18x4xf32, #tpu.memory_space<vmem>>, vector<18x1x4xf32>
    tpu.vector_store %arg9[%c0_14, %c17_15, %c0_16], %8 {strides = array<i32>} : memref<18x18x4xf32, #tpu.memory_space<vmem>>, vector<18x1x4xf32>,
    %cst_17 = arith.constant 0.000000e+00 : f32
    %10 = vector.broadcast %cst_17 : f32 to vector<1x18x8xf32>
    %c0_18 = arith.constant 0 : index
    %c0_19 = arith.constant 0 : index
    %c0_20 = arith.constant 0 : index
    %11 = vector.load %arg10[%c0_18, %c0_19, %c0_20] : memref<18x18x8xf32, #tpu.memory_space<vmem>>, vector<1x18x8xf32>
    tpu.vector_store %arg10[%c0_18, %c0_19, %c0_20], %10 {strides = array<i32>} : memref<18x18x8xf32, #tpu.memory_space<vmem>>, vector<1x18x8xf32>,
    %cst_21 = arith.constant 0.000000e+00 : f32
    %12 = vector.broadcast %cst_21 : f32 to vector<1x18x8xf32>
    %c17_22 = arith.constant 17 : index
    %c0_23 = arith.constant 0 : index
    %c0_24 = arith.constant 0 : index
    %13 = vector.load %arg10[%c17_22, %c0_23, %c0_24] : memref<18x18x8xf32, #tpu.memory_space<vmem>>, vector<1x18x8xf32>
    tpu.vector_store %arg10[%c17_22, %c0_23, %c0_24], %12 {strides = array<i32>} : memref<18x18x8xf32, #tpu.memory_space<vmem>>, vector<1x18x8xf32>,
    %cst_25 = arith.constant 0.000000e+00 : f32
    %14 = vector.broadcast %cst_25 : f32 to vector<18x1x8xf32>
    %c0_26 = arith.constant 0 : index
    %c0_27 = arith.constant 0 : index
    %c0_28 = arith.constant 0 : index
    %15 = vector.load %arg10[%c0_26, %c0_27, %c0_28] : memref<18x18x8xf32, #tpu.memory_space<vmem>>, vector<18x1x8xf32>
    tpu.vector_store %arg10[%c0_26, %c0_27, %c0_28], %14 {strides = array<i32>} : memref<18x18x8xf32, #tpu.memory_space<vmem>>, vector<18x1x8xf32>,
    %cst_29 = arith.constant 0.000000e+00 : f32
    %16 = vector.broadcast %cst_29 : f32 to vector<18x1x8xf32>
    %c0_30 = arith.constant 0 : index
    %c17_31 = arith.constant 17 : index
    %c0_32 = arith.constant 0 : index
    %17 = vector.load %arg10[%c0_30, %c17_31, %c0_32] : memref<18x18x8xf32, #tpu.memory_space<vmem>>, vector<18x1x8xf32>
    tpu.vector_store %arg10[%c0_30, %c17_31, %c0_32], %16 {strides = array<i32>} : memref<18x18x8xf32, #tpu.memory_space<vmem>>, vector<18x1x8xf32>,
    %cst_33 = arith.constant 0.000000e+00 : f32
    %18 = vector.broadcast %cst_33 : f32 to vector<16x16x4xf32>
    %19 = arith.maximumf %1, %18 : vector<16x16x4xf32>
    %c1 = arith.constant 1 : index
    %c1_34 = arith.constant 1 : index
    %c0_35 = arith.constant 0 : index
    %20 = vector.load %arg9[%c1, %c1_34, %c0_35] : memref<18x18x4xf32, #tpu.memory_space<vmem>>, vector<16x16x4xf32>
    tpu.vector_store %arg9[%c1, %c1_34, %c0_35], %19 {strides = array<i32>} : memref<18x18x4xf32, #tpu.memory_space<vmem>>, vector<16x16x4xf32>,
    %c0_36 = arith.constant 0 : index
    %c0_37 = arith.constant 0 : index
    %c0_38 = arith.constant 0 : index
    %21 = vector.load %arg9[%c0_36, %c0_37, %c0_38] : memref<18x18x4xf32, #tpu.memory_space<vmem>>, vector<18x18x4xf32>
    %22 = vector.extract_strided_slice %21 {offsets = [0, 0, 0], sizes = [16, 16, 4], strides = [1, 1, 1]} : vector<18x18x4xf32> to vector<16x16x4xf32>
    %23 = vector.shape_cast %22 : vector<16x16x4xf32> to vector<256x4xf32>
    %24 = vector.extract_strided_slice %21 {offsets = [0, 1, 0], sizes = [16, 16, 4], strides = [1, 1, 1]} : vector<18x18x4xf32> to vector<16x16x4xf32>
    %25 = vector.shape_cast %24 : vector<16x16x4xf32> to vector<256x4xf32>
    %26 = vector.extract_strided_slice %21 {offsets = [0, 2, 0], sizes = [16, 16, 4], strides = [1, 1, 1]} : vector<18x18x4xf32> to vector<16x16x4xf32>
    %27 = vector.shape_cast %26 : vector<16x16x4xf32> to vector<256x4xf32>
    %28 = vector.extract_strided_slice %21 {offsets = [1, 0, 0], sizes = [16, 16, 4], strides = [1, 1, 1]} : vector<18x18x4xf32> to vector<16x16x4xf32>
    %29 = vector.shape_cast %28 : vector<16x16x4xf32> to vector<256x4xf32>
    %30 = vector.extract_strided_slice %21 {offsets = [1, 1, 0], sizes = [16, 16, 4], strides = [1, 1, 1]} : vector<18x18x4xf32> to vector<16x16x4xf32>
    %31 = vector.shape_cast %30 : vector<16x16x4xf32> to vector<256x4xf32>
    %32 = vector.extract_strided_slice %21 {offsets = [1, 2, 0], sizes = [16, 16, 4], strides = [1, 1, 1]} : vector<18x18x4xf32> to vector<16x16x4xf32>
    %33 = vector.shape_cast %32 : vector<16x16x4xf32> to vector<256x4xf32>
    %34 = vector.extract_strided_slice %21 {offsets = [2, 0, 0], sizes = [16, 16, 4], strides = [1, 1, 1]} : vector<18x18x4xf32> to vector<16x16x4xf32>
    %35 = vector.shape_cast %34 : vector<16x16x4xf32> to vector<256x4xf32>
    %36 = vector.extract_strided_slice %21 {offsets = [2, 1, 0], sizes = [16, 16, 4], strides = [1, 1, 1]} : vector<18x18x4xf32> to vector<16x16x4xf32>
    %37 = vector.shape_cast %36 : vector<16x16x4xf32> to vector<256x4xf32>
    %38 = vector.extract_strided_slice %21 {offsets = [2, 2, 0], sizes = [16, 16, 4], strides = [1, 1, 1]} : vector<18x18x4xf32> to vector<16x16x4xf32>
    %39 = vector.shape_cast %38 : vector<16x16x4xf32> to vector<256x4xf32>
    %40 = tpu.concatenate %23, %25, %27, %29, %31, %33, %35, %37, %39 in 1 : vector<256x4xf32>, vector<256x4xf32>, vector<256x4xf32>, vector<256x4xf32>, vector<256x4xf32>, vector<256x4xf32>, vector<256x4xf32>, vector<256x4xf32>, vector<256x4xf32> -> vector<256x36xf32>
    %41 = arith.truncf %40 : vector<256x36xf32> to vector<256x36xbf16>
    %c0_39 = arith.constant 0 : index
    %c0_40 = arith.constant 0 : index
    %42 = vector.load %arg2[%c0_39, %c0_40] : memref<36x8xbf16, #tpu.memory_space<vmem>>, vector<36x8xbf16>
    %cst_41 = arith.constant dense<0.000000e+00> : vector<256x8xf32>
    %43 = tpu.matmul %41, %42, %cst_41 {dimension_numbers = #tpu.dot_dimension_numbers<[1], [0], [0], [1], [0, 0, 1, 1], [], []>} : vector<256x36xbf16>, vector<36x8xbf16>, vector<256x8xf32> -> vector<256x8xf32>
    %c0_42 = arith.constant 0 : index
    %c0_43 = arith.constant 0 : index
    %44 = vector.load %arg3[%c0_42, %c0_43] : memref<1x8xf32, #tpu.memory_space<vmem>>, vector<1x8xf32>
    %45 = vector.shape_cast %44 : vector<1x8xf32> to vector<8xf32>
    %46 = vector.shape_cast %45 : vector<8xf32> to vector<1x8xf32>
    %47 = vector.broadcast %46 : vector<1x8xf32> to vector<256x8xf32>
    %48 = arith.addf %43, %47 : vector<256x8xf32>
    %cst_44 = arith.constant 0.000000e+00 : f32
    %49 = vector.broadcast %cst_44 : f32 to vector<256x8xf32>
    %50 = arith.maximumf %48, %49 : vector<256x8xf32>
    %51 = vector.shape_cast %50 : vector<256x8xf32> to vector<16x16x8xf32>
    %c1_45 = arith.constant 1 : index
    %c1_46 = arith.constant 1 : index
    %c0_47 = arith.constant 0 : index
    %52 = vector.load %arg10[%c1_45, %c1_46, %c0_47] : memref<18x18x8xf32, #tpu.memory_space<vmem>>, vector<16x16x8xf32>
    tpu.vector_store %arg10[%c1_45, %c1_46, %c0_47], %51 {strides = array<i32>} : memref<18x18x8xf32, #tpu.memory_space<vmem>>, vector<16x16x8xf32>,
    %c0_48 = arith.constant 0 : index
    %c0_49 = arith.constant 0 : index
    %c0_50 = arith.constant 0 : index
    %53 = vector.load %arg10[%c0_48, %c0_49, %c0_50] : memref<18x18x8xf32, #tpu.memory_space<vmem>>, vector<18x18x8xf32>
    %54 = vector.extract_strided_slice %53 {offsets = [0, 0, 0], sizes = [16, 16, 8], strides = [1, 1, 1]} : vector<18x18x8xf32> to vector<16x16x8xf32>
    %55 = vector.shape_cast %54 : vector<16x16x8xf32> to vector<256x8xf32>
    %56 = vector.extract_strided_slice %53 {offsets = [0, 1, 0], sizes = [16, 16, 8], strides = [1, 1, 1]} : vector<18x18x8xf32> to vector<16x16x8xf32>
    %57 = vector.shape_cast %56 : vector<16x16x8xf32> to vector<256x8xf32>
    %58 = vector.extract_strided_slice %53 {offsets = [0, 2, 0], sizes = [16, 16, 8], strides = [1, 1, 1]} : vector<18x18x8xf32> to vector<16x16x8xf32>
    %59 = vector.shape_cast %58 : vector<16x16x8xf32> to vector<256x8xf32>
    %60 = vector.extract_strided_slice %53 {offsets = [1, 0, 0], sizes = [16, 16, 8], strides = [1, 1, 1]} : vector<18x18x8xf32> to vector<16x16x8xf32>
    %61 = vector.shape_cast %60 : vector<16x16x8xf32> to vector<256x8xf32>
    %62 = vector.extract_strided_slice %53 {offsets = [1, 1, 0], sizes = [16, 16, 8], strides = [1, 1, 1]} : vector<18x18x8xf32> to vector<16x16x8xf32>
    %63 = vector.shape_cast %62 : vector<16x16x8xf32> to vector<256x8xf32>
    %64 = vector.extract_strided_slice %53 {offsets = [1, 2, 0], sizes = [16, 16, 8], strides = [1, 1, 1]} : vector<18x18x8xf32> to vector<16x16x8xf32>
    %65 = vector.shape_cast %64 : vector<16x16x8xf32> to vector<256x8xf32>
    %66 = vector.extract_strided_slice %53 {offsets = [2, 0, 0], sizes = [16, 16, 8], strides = [1, 1, 1]} : vector<18x18x8xf32> to vector<16x16x8xf32>
    %67 = vector.shape_cast %66 : vector<16x16x8xf32> to vector<256x8xf32>
    %68 = vector.extract_strided_slice %53 {offsets = [2, 1, 0], sizes = [16, 16, 8], strides = [1, 1, 1]} : vector<18x18x8xf32> to vector<16x16x8xf32>
    %69 = vector.shape_cast %68 : vector<16x16x8xf32> to vector<256x8xf32>
    %70 = vector.extract_strided_slice %53 {offsets = [2, 2, 0], sizes = [16, 16, 8], strides = [1, 1, 1]} : vector<18x18x8xf32> to vector<16x16x8xf32>
    %71 = vector.shape_cast %70 : vector<16x16x8xf32> to vector<256x8xf32>
    %72 = tpu.concatenate %55, %57, %59, %61, %63, %65, %67, %69, %71 in 1 : vector<256x8xf32>, vector<256x8xf32>, vector<256x8xf32>, vector<256x8xf32>, vector<256x8xf32>, vector<256x8xf32>, vector<256x8xf32>, vector<256x8xf32>, vector<256x8xf32> -> vector<256x72xf32>
    %73 = arith.truncf %72 : vector<256x72xf32> to vector<256x72xbf16>
    %c0_51 = arith.constant 0 : index
    %c0_52 = arith.constant 0 : index
    %74 = vector.load %arg4[%c0_51, %c0_52] : memref<72x8xbf16, #tpu.memory_space<vmem>>, vector<72x8xbf16>
    %cst_53 = arith.constant dense<0.000000e+00> : vector<256x8xf32>
    %75 = tpu.matmul %73, %74, %cst_53 {dimension_numbers = #tpu.dot_dimension_numbers<[1], [0], [0], [1], [0, 0, 1, 1], [], []>} : vector<256x72xbf16>, vector<72x8xbf16>, vector<256x8xf32> -> vector<256x8xf32>
    %c0_54 = arith.constant 0 : index
    %c0_55 = arith.constant 0 : index
    %76 = vector.load %arg5[%c0_54, %c0_55] : memref<1x8xf32, #tpu.memory_space<vmem>>, vector<1x8xf32>
    %77 = vector.shape_cast %76 : vector<1x8xf32> to vector<8xf32>
    %78 = vector.shape_cast %77 : vector<8xf32> to vector<1x8xf32>
    %79 = vector.broadcast %78 : vector<1x8xf32> to vector<256x8xf32>
    %80 = arith.addf %75, %79 : vector<256x8xf32>
    %81 = vector.shape_cast %80 : vector<256x8xf32> to vector<16x16x8xf32>
    %82 = vector.shape_cast %81 : vector<16x16x8xf32> to vector<8x2x8x2x8xf32>
    %83 = vector.extract_strided_slice %82 {offsets = [0, 0, 0, 0, 0], sizes = [8, 1, 8, 1, 8], strides = [1, 1, 1, 1, 1]} : vector<8x2x8x2x8xf32> to vector<8x1x8x1x8xf32>
    %84 = vector.shape_cast %83 : vector<8x1x8x1x8xf32> to vector<8x8x8xf32>
    %85 = vector.extract_strided_slice %82 {offsets = [0, 0, 0, 1, 0], sizes = [8, 1, 8, 1, 8], strides = [1, 1, 1, 1, 1]} : vector<8x2x8x2x8xf32> to vector<8x1x8x1x8xf32>
    %86 = vector.shape_cast %85 : vector<8x1x8x1x8xf32> to vector<8x8x8xf32>
    %87 = arith.addf %84, %86 : vector<8x8x8xf32>
    %88 = vector.extract_strided_slice %82 {offsets = [0, 1, 0, 0, 0], sizes = [8, 1, 8, 1, 8], strides = [1, 1, 1, 1, 1]} : vector<8x2x8x2x8xf32> to vector<8x1x8x1x8xf32>
    %89 = vector.shape_cast %88 : vector<8x1x8x1x8xf32> to vector<8x8x8xf32>
    %90 = arith.addf %87, %89 : vector<8x8x8xf32>
    %91 = vector.extract_strided_slice %82 {offsets = [0, 1, 0, 1, 0], sizes = [8, 1, 8, 1, 8], strides = [1, 1, 1, 1, 1]} : vector<8x2x8x2x8xf32> to vector<8x1x8x1x8xf32>
    %92 = vector.shape_cast %91 : vector<8x1x8x1x8xf32> to vector<8x8x8xf32>
    %93 = arith.addf %90, %92 : vector<8x8x8xf32>
    %cst_56 = arith.constant 2.500000e-01 : f32
    %94 = vector.broadcast %cst_56 : f32 to vector<8x8x8xf32>
    %95 = arith.mulf %93, %94 : vector<8x8x8xf32>
    %96 = vector.shape_cast %95 : vector<8x8x8xf32> to vector<64x8xf32>
    %97 = vector.shape_cast %1 : vector<16x16x4xf32> to vector<8x2x8x2x4xf32>
    %98 = vector.extract_strided_slice %97 {offsets = [0, 0, 0, 0, 0], sizes = [8, 1, 8, 1, 4], strides = [1, 1, 1, 1, 1]} : vector<8x2x8x2x4xf32> to vector<8x1x8x1x4xf32>
    %99 = vector.shape_cast %98 : vector<8x1x8x1x4xf32> to vector<8x8x4xf32>
    %100 = vector.extract_strided_slice %97 {offsets = [0, 0, 0, 1, 0], sizes = [8, 1, 8, 1, 4], strides = [1, 1, 1, 1, 1]} : vector<8x2x8x2x4xf32> to vector<8x1x8x1x4xf32>
    %101 = vector.shape_cast %100 : vector<8x1x8x1x4xf32> to vector<8x8x4xf32>
    %102 = arith.addf %99, %101 : vector<8x8x4xf32>
    %103 = vector.extract_strided_slice %97 {offsets = [0, 1, 0, 0, 0], sizes = [8, 1, 8, 1, 4], strides = [1, 1, 1, 1, 1]} : vector<8x2x8x2x4xf32> to vector<8x1x8x1x4xf32>
    %104 = vector.shape_cast %103 : vector<8x1x8x1x4xf32> to vector<8x8x4xf32>
    %105 = arith.addf %102, %104 : vector<8x8x4xf32>
    %106 = vector.extract_strided_slice %97 {offsets = [0, 1, 0, 1, 0], sizes = [8, 1, 8, 1, 4], strides = [1, 1, 1, 1, 1]} : vector<8x2x8x2x4xf32> to vector<8x1x8x1x4xf32>
    %107 = vector.shape_cast %106 : vector<8x1x8x1x4xf32> to vector<8x8x4xf32>
    %108 = arith.addf %105, %107 : vector<8x8x4xf32>
    %cst_57 = arith.constant 2.500000e-01 : f32
    %109 = vector.broadcast %cst_57 : f32 to vector<8x8x4xf32>
    %110 = arith.mulf %108, %109 : vector<8x8x4xf32>
    %111 = vector.shape_cast %110 : vector<8x8x4xf32> to vector<64x4xf32>
    %112 = arith.truncf %111 : vector<64x4xf32> to vector<64x4xbf16>
    %c0_58 = arith.constant 0 : index
    %c0_59 = arith.constant 0 : index
    %113 = vector.load %arg6[%c0_58, %c0_59] : memref<4x8xbf16, #tpu.memory_space<vmem>>, vector<4x8xbf16>
    %cst_60 = arith.constant dense<0.000000e+00> : vector<64x8xf32>
    %114 = tpu.matmul %112, %113, %cst_60 {dimension_numbers = #tpu.dot_dimension_numbers<[1], [0], [0], [1], [0, 0, 1, 1], [], []>} : vector<64x4xbf16>, vector<4x8xbf16>, vector<64x8xf32> -> vector<64x8xf32>
    %c0_61 = arith.constant 0 : index
    %c0_62 = arith.constant 0 : index
    %115 = vector.load %arg7[%c0_61, %c0_62] : memref<1x8xf32, #tpu.memory_space<vmem>>, vector<1x8xf32>
    %116 = vector.shape_cast %115 : vector<1x8xf32> to vector<8xf32>
    %117 = vector.shape_cast %116 : vector<8xf32> to vector<1x8xf32>
    %118 = vector.broadcast %117 : vector<1x8xf32> to vector<64x8xf32>
    %119 = arith.addf %114, %118 : vector<64x8xf32>
    %120 = arith.addf %96, %119 : vector<64x8xf32>
    %c0_63 = arith.constant 0 : index
    %c0_64 = arith.constant 0 : index
    %c0_65 = arith.constant 0 : index
    %121 = vector.load %arg8[%c0_63, %c0_64, %c0_65] : memref<1x64x8xf32, #tpu.memory_space<vmem>>, vector<1x64x8xf32>
    %122 = vector.shape_cast %121 : vector<1x64x8xf32> to vector<64x8xf32>
    %123 = vector.shape_cast %120 : vector<64x8xf32> to vector<1x64x8xf32>
    tpu.vector_store %arg8[%c0_63, %c0_64, %c0_65], %123 {strides = array<i32>} : memref<1x64x8xf32, #tpu.memory_space<vmem>>, vector<1x64x8xf32>,
    return
  }
  func.func @transform_0(%arg0: i32) -> (i32, i32, i32, i32) {
    %c0_i32 = arith.constant 0 : i32
    %c0_i32_0 = arith.constant 0 : i32
    %c0_i32_1 = arith.constant 0 : i32
    %c0_i32_2 = arith.constant 0 : i32
    return %arg0, %c0_i32, %c0_i32_0, %c0_i32_1 : i32, i32, i32, i32
  }
  func.func @transform_1(%arg0: i32) -> (i32, i32) {
    %c0_i32 = arith.constant 0 : i32
    %c0_i32_0 = arith.constant 0 : i32
    %c0_i32_1 = arith.constant 0 : i32
    return %c0_i32, %c0_i32_0 : i32, i32
  }
  func.func @transform_2(%arg0: i32) -> (i32, i32) {
    %c0_i32 = arith.constant 0 : i32
    %c0_i32_0 = arith.constant 0 : i32
    %c0_i32_1 = arith.constant 0 : i32
    return %c0_i32, %c0_i32_0 : i32, i32
  }
  func.func @transform_3(%arg0: i32) -> (i32, i32) {
    %c0_i32 = arith.constant 0 : i32
    %c0_i32_0 = arith.constant 0 : i32
    %c0_i32_1 = arith.constant 0 : i32
    return %c0_i32, %c0_i32_0 : i32, i32
  }
  func.func @transform_4(%arg0: i32) -> (i32, i32) {
    %c0_i32 = arith.constant 0 : i32
    %c0_i32_0 = arith.constant 0 : i32
    %c0_i32_1 = arith.constant 0 : i32
    return %c0_i32, %c0_i32_0 : i32, i32
  }
  func.func @transform_5(%arg0: i32) -> (i32, i32) {
    %c0_i32 = arith.constant 0 : i32
    %c0_i32_0 = arith.constant 0 : i32
    %c0_i32_1 = arith.constant 0 : i32
    return %c0_i32, %c0_i32_0 : i32, i32
  }
  func.func @transform_6(%arg0: i32) -> (i32, i32) {
    %c0_i32 = arith.constant 0 : i32
    %c0_i32_0 = arith.constant 0 : i32
    %c0_i32_1 = arith.constant 0 : i32
    return %c0_i32, %c0_i32_0 : i32, i32
  }
  func.func @transform_7(%arg0: i32) -> (i32, i32, i32) {
    %c0_i32 = arith.constant 0 : i32
    %c0_i32_0 = arith.constant 0 : i32
    %c0_i32_1 = arith.constant 0 : i32
    return %arg0, %c0_i32, %c0_i32_0 : i32, i32, i32
  }
}

</mosaic_0001>

<llo_original>
// kernel: tpu_custom_call.1
$region0: #{tpu_custom_call.1}
  #allocation0 [shape = 'u32[]', space=smem, size = 0x4, offset = 0x4, fixed_abs, tag = 'smem constant byte address 0x4 - core index']
  #allocation1 [shape = 'u32[144,128]{1,0:T(1,128)}', space=vmem, size = 0x12000, scoped, tag = 'internal scratch']
  #allocation2 [shape = 'f32[18,18,4]{2,1,0:T(8,128)}', space=vmem, size = 0x36000, scoped, tag = 'scratch operand']
  #allocation3 [shape = 'f32[18,18,8]{2,1,0:T(8,128)}', space=vmem, size = 0x36000, scoped, tag = 'scratch operand']
  %s0 = inlined_call_operand.vmem [shape: f32[2,16,16,4], index: 0, kind: input, shape index: {}]
  %s1 = inlined_call_operand.vmem [shape: bf16[36,8], index: 1, kind: input, shape index: {}]
  %s2 = inlined_call_operand.vmem [shape: f32[1,8], index: 2, kind: input, shape index: {}]
  %s3 = inlined_call_operand.vmem [shape: bf16[72,8], index: 3, kind: input, shape index: {}]
  %s4 = inlined_call_operand.vmem [shape: f32[1,8], index: 4, kind: input, shape index: {}]
  %s5 = inlined_call_operand.vmem [shape: bf16[4,8], index: 5, kind: input, shape index: {}]
  %s6 = inlined_call_operand.vmem [shape: f32[1,8], index: 6, kind: input, shape index: {}]
  %s7 = inlined_call_operand.vmem [shape: f32[2,64,8], index: 7, kind: output, shape index: {}]
  %s8 = sld [smem:[#allocation0]]
  $region61: #{tpu_custom_call.1} parent=0
    _
  %s10 = ssub.s32 1, %s8
  %s11 = scalar_select 0, %s10, %s8
  loop: start=0, step=1, limit=4
  $region2: #{tpu_custom_call.1} parent=0 // loop_pre_header
    _
  $region3: #{tpu_custom_call.1} parent=0 // loop_header
    %s13 = sphi 0, %s17
    %p14 = scmp.ge.s32.totalorder %s13, 4
    %s23 = sphi 0, %s25
    %s26 = sphi 0, %s23
    %s27 = sphi 0, %s26
    %s43 = sphi 0, %s27
    %s47 = sphi 0, %s47
    %s49 = sphi 0, %s47
    %s50 = sphi 0, %s49
    %s64 = sphi 0, %s50
    %s68 = sphi 0, %s68
    %s70 = sphi 0, %s68
    %s71 = sphi 0, %s70
    %s85 = sphi 0, %s71
    %s89 = sphi 0, %s89
    %s91 = sphi 0, %s89
    %s92 = sphi 0, %s91
    %s106 = sphi 0, %s92
    %s110 = sphi 0, %s110
    %s112 = sphi 0, %s110
    %s113 = sphi 0, %s112
    %s127 = sphi 0, %s113
    %s131 = sphi 0, %s131
    %s133 = sphi 0, %s131
    %s134 = sphi 0, %s133
    %s148 = sphi 0, %s134
    %s152 = sphi 0, %s152
    %s154 = sphi 0, %s152
    %s155 = sphi 0, %s154
    %s169 = sphi 0, %s155
    %s175 = sphi 0, %s177
    %s178 = sphi 0, %s175
    %s179 = sphi 0, %s178
    %s195 = sphi 0, %s179
  $region4: #{tpu_custom_call.1} parent=0 // loop_header_branch
    %16 = sbr.rel (%p14) target = $region8
  $region5: #{tpu_custom_call.1} parent=0 // loop_body
    %s18 = ssub.s32 %s13, 1
    %s19 = ssub.s32 %s13, 2
    %s20 = sadd.s32 %s13, 1
    %s21 = ssub.s32 %s13, %s20
    %p22 = scmp.eq.s32.totalorder %s21, 0
    %s24 = sadd.s32 %s23, 1
    %s25 = scalar_select %p22, %s23, %s24
    %p28 = pneg %p22
    %p29 = scmp.eq.s32.totalorder %s13, 1
    %p30 = por %p28, %p29
    %p31 = scmp.ne.s32.totalorder %s23, %s26
    %p32 = scmp.eq.s32.totalorder %s13, 0
    %p33 = por %p31, %p32
    %p34 = scmp.ne.s32.totalorder %s23, %s26
    %p35 = scmp.eq.s32.totalorder %s18, 1
    %p36 = por %p34, %p35
    %p37 = scmp.ne.s32.totalorder %s26, %s27
    %p38 = scmp.eq.s32.totalorder %s18, 0
    %p39 = por %p37, %p38
    %p40 = scmp.ne.s32.totalorder %s26, %s27
    %p41 = scmp.eq.s32.totalorder %s19, 1
    %p42 = por %p40, %p41
    %p44 = scmp.ne.s32.totalorder %s27, %s43
    %p45 = scmp.eq.s32.totalorder %s19, 0
    %p46 = por %p44, %p45
    %s48 = sadd.s32 %s47, 1
    %p51 = scmp.eq.s32.totalorder %s13, 1
    %p52 = scmp.ne.s32.totalorder %s47, %s49
    %p53 = scmp.eq.s32.totalorder %s13, 0
    %p54 = por %p52, %p53
    %p55 = scmp.ne.s32.totalorder %s47, %s49
    %p56 = scmp.eq.s32.totalorder %s18, 1
    %p57 = por %p55, %p56
    %p58 = scmp.ne.s32.totalorder %s49, %s50
    %p59 = scmp.eq.s32.totalorder %s18, 0
    %p60 = por %p58, %p59
    %p61 = scmp.ne.s32.totalorder %s49, %s50
    %p62 = scmp.eq.s32.totalorder %s19, 1
    %p63 = por %p61, %p62
    %p65 = scmp.ne.s32.totalorder %s50, %s64
    %p66 = scmp.eq.s32.totalorder %s19, 0
    %p67 = por %p65, %p66
    %s69 = sadd.s32 %s68, 1
    %p72 = scmp.eq.s32.totalorder %s13, 1
    %p73 = scmp.ne.s32.totalorder %s68, %s70
    %p74 = scmp.eq.s32.totalorder %s13, 0
    %p75 = por %p73, %p74
    %p76 = scmp.ne.s32.totalorder %s68, %s70
    %p77 = scmp.eq.s32.totalorder %s18, 1
    %p78 = por %p76, %p77
    %p79 = scmp.ne.s32.totalorder %s70, %s71
    %p80 = scmp.eq.s32.totalorder %s18, 0
    %p81 = por %p79, %p80
    %p82 = scmp.ne.s32.totalorder %s70, %s71
    %p83 = scmp.eq.s32.totalorder %s19, 1
    %p84 = por %p82, %p83
    %p86 = scmp.ne.s32.totalorder %s71, %s85
    %p87 = scmp.eq.s32.totalorder %s19, 0
    %p88 = por %p86, %p87
    %s90 = sadd.s32 %s89, 1
    %p93 = scmp.eq.s32.totalorder %s13, 1
    %p94 = scmp.ne.s32.totalorder %s89, %s91
    %p95 = scmp.eq.s32.totalorder %s13, 0
    %p96 = por %p94, %p95
    %p97 = scmp.ne.s32.totalorder %s89, %s91
    %p98 = scmp.eq.s32.totalorder %s18, 1
    %p99 = por %p97, %p98
    %p100 = scmp.ne.s32.totalorder %s91, %s92
    %p101 = scmp.eq.s32.totalorder %s18, 0
    %p102 = por %p100, %p101
    %p103 = scmp.ne.s32.totalorder %s91, %s92
    %p104 = scmp.eq.s32.totalorder %s19, 1
    %p105 = por %p103, %p104
    %p107 = scmp.ne.s32.totalorder %s92, %s106
    %p108 = scmp.eq.s32.totalorder %s19, 0
    %p109 = por %p107, %p108
    %s111 = sadd.s32 %s110, 1
    %p114 = scmp.eq.s32.totalorder %s13, 1
    %p115 = scmp.ne.s32.totalorder %s110, %s112
    %p116 = scmp.eq.s32.totalorder %s13, 0
    %p117 = por %p115, %p116
    %p118 = scmp.ne.s32.totalorder %s110, %s112
    %p119 = scmp.eq.s32.totalorder %s18, 1
    %p120 = por %p118, %p119
    %p121 = scmp.ne.s32.totalorder %s112, %s113
    %p122 = scmp.eq.s32.totalorder %s18, 0
    %p123 = por %p121, %p122
    %p124 = scmp.ne.s32.totalorder %s112, %s113
    %p125 = scmp.eq.s32.totalorder %s19, 1
    %p126 = por %p124, %p125
    %p128 = scmp.ne.s32.totalorder %s113, %s127
    %p129 = scmp.eq.s32.totalorder %s19, 0
    %p130 = por %p128, %p129
    %s132 = sadd.s32 %s131, 1
    %p135 = scmp.eq.s32.totalorder %s13, 1
    %p136 = scmp.ne.s32.totalorder %s131, %s133
    %p137 = scmp.eq.s32.totalorder %s13, 0
    %p138 = por %p136, %p137
    %p139 = scmp.ne.s32.totalorder %s131, %s133
    %p140 = scmp.eq.s32.totalorder %s18, 1
    %p141 = por %p139, %p140
    %p142 = scmp.ne.s32.totalorder %s133, %s134
    %p143 = scmp.eq.s32.totalorder %s18, 0
    %p144 = por %p142, %p143
    %p145 = scmp.ne.s32.totalorder %s133, %s134
    %p146 = scmp.eq.s32.totalorder %s19, 1
    %p147 = por %p145, %p146
    %p149 = scmp.ne.s32.totalorder %s134, %s148
    %p150 = scmp.eq.s32.totalorder %s19, 0
    %p151 = por %p149, %p150
    %s153 = sadd.s32 %s152, 1
    %p156 = scmp.eq.s32.totalorder %s13, 1
    %p157 = scmp.ne.s32.totalorder %s152, %s154
    %p158 = scmp.eq.s32.totalorder %s13, 0
    %p159 = por %p157, %p158
    %p160 = scmp.ne.s32.totalorder %s152, %s154
    %p161 = scmp.eq.s32.totalorder %s18, 1
    %p162 = por %p160, %p161
    %p163 = scmp.ne.s32.totalorder %s154, %s155
    %p164 = scmp.eq.s32.totalorder %s18, 0
    %p165 = por %p163, %p164
    %p166 = scmp.ne.s32.totalorder %s154, %s155
    %p167 = scmp.eq.s32.totalorder %s19, 1
    %p168 = por %p166, %p167
    %p170 = scmp.ne.s32.totalorder %s155, %s169
    %p171 = scmp.eq.s32.totalorder %s19, 0
    %p172 = por %p170, %p171
    %s173 = ssub.s32 %s13, %s20
    %p174 = scmp.eq.s32.totalorder %s173, 0
    %s176 = sadd.s32 %s175, 1
    %s177 = scalar_select %p174, %s175, %s176
    %p180 = pneg %p174
    %p181 = scmp.eq.s32.totalorder %s13, 1
    %p182 = por %p180, %p181
    %p183 = scmp.ne.s32.totalorder %s175, %s178
    %p184 = scmp.eq.s32.totalorder %s13, 0
    %p185 = por %p183, %p184
    %p186 = scmp.ne.s32.totalorder %s175, %s178
    %p187 = scmp.eq.s32.totalorder %s18, 1
    %p188 = por %p186, %p187
    %p189 = scmp.ne.s32.totalorder %s178, %s179
    %p190 = scmp.eq.s32.totalorder %s18, 0
    %p191 = por %p189, %p190
    %p192 = scmp.ne.s32.totalorder %s178, %s179
    %p193 = scmp.eq.s32.totalorder %s19, 1
    %p194 = por %p192, %p193
    %p196 = scmp.ne.s32.totalorder %s179, %s195
    %p197 = scmp.eq.s32.totalorder %s19, 0
    %p198 = por %p196, %p197
    %p199 = scmp.le.s32.totalorder 1, %s13
    %p200 = scmp.lt.s32.totalorder %s13, 3
    %p201 = pnand %p199, %p200
    %p202 = pneg %p201
    // Predicated region
    $region9: #{tpu_custom_call.1} parent=5 // pred_check
      _
    $region10: #{tpu_custom_call.1} parent=5 // pred_check_branch
      %204 = sbr.rel (%p201) target = $region12
    $region11: #{tpu_custom_call.1} parent=5 // pred_region
      %s205 = ssub.s32 %s13, 1
      // Predicated region
      $region13: #{tpu_custom_call.1} parent=11 // pred_check
        %p206 = pneg %p60
      $region14: #{tpu_custom_call.1} parent=11 // pred_check_branch
        %208 = sbr.rel (%p206) target = $region16
      $region15: #{tpu_custom_call.1} parent=11 // pred_region
        _
      $region16: #{tpu_custom_call.1} parent=11 // pred_fallthru
        _
      // Predicated region
      $region17: #{tpu_custom_call.1} parent=11 // pred_check
        %p209 = pneg %p81
      $region18: #{tpu_custom_call.1} parent=11 // pred_check_branch
        %211 = sbr.rel (%p209) target = $region20
      $region19: #{tpu_custom_call.1} parent=11 // pred_region
        _
      $region20: #{tpu_custom_call.1} parent=11 // pred_fallthru
        _
      // Predicated region
      $region21: #{tpu_custom_call.1} parent=11 // pred_check
        %p212 = pneg %p102
      $region22: #{tpu_custom_call.1} parent=11 // pred_check_branch
        %214 = sbr.rel (%p212) target = $region24
      $region23: #{tpu_custom_call.1} parent=11 // pred_region
        _
      $region24: #{tpu_custom_call.1} parent=11 // pred_fallthru
        _
      // Predicated region
      $region25: #{tpu_custom_call.1} parent=11 // pred_check
        %p215 = pneg %p123
      $region26: #{tpu_custom_call.1} parent=11 // pred_check_branch
        %217 = sbr.rel (%p215) target = $region28
      $region27: #{tpu_custom_call.1} parent=11 // pred_region
        _
      $region28: #{tpu_custom_call.1} parent=11 // pred_fallthru
        _
      // Predicated region
      $region29: #{tpu_custom_call.1} parent=11 // pred_check
        %p218 = pneg %p144
      $region30: #{tpu_custom_call.1} parent=11 // pred_check_branch
        %220 = sbr.rel (%p218) target = $region32
      $region31: #{tpu_custom_call.1} parent=11 // pred_region
        _
      $region32: #{tpu_custom_call.1} parent=11 // pred_fallthru
        _
      // Predicated region
      $region33: #{tpu_custom_call.1} parent=11 // pred_check
        %p221 = pneg %p165
      $region34: #{tpu_custom_call.1} parent=11 // pred_check_branch
        %223 = sbr.rel (%p221) target = $region36
      $region35: #{tpu_custom_call.1} parent=11 // pred_region
        _
      $region36: #{tpu_custom_call.1} parent=11 // pred_fallthru
        _
    $region12: #{tpu_custom_call.1} parent=5 // pred_fallthru
      _
    %p224 = scmp.lt.s32.totalorder %s13, 2
    // Predicated region
    $region37: #{tpu_custom_call.1} parent=5 // pred_check
      %p225 = pneg %p224
    $region38: #{tpu_custom_call.1} parent=5 // pred_check_branch
      %227 = sbr.rel (%p225) target = $region40
    $region39: #{tpu_custom_call.1} parent=5 // pred_region
      // Predicated region
      $region41: #{tpu_custom_call.1} parent=39 // pred_check
        %p228 = pneg %p33
      $region42: #{tpu_custom_call.1} parent=39 // pred_check_branch
        %230 = sbr.rel (%p228) target = $region44
      $region43: #{tpu_custom_call.1} parent=39 // pred_region
        %p231 = scmp.lt.s32.totalorder %s13, 1
        %s232 = scalar_select %p231, %s13, 1
        %s233 = smul.addr %s232, 32
        %s234 = smul.addr %s233, 8
        %s235 = scalar_lea.vmem %s0, %s234
      $region44: #{tpu_custom_call.1} parent=39 // pred_fallthru
        _
    $region40: #{tpu_custom_call.1} parent=5 // pred_fallthru
      _
    %p236 = scmp.le.s32.totalorder 1, %s13
    %p237 = scmp.lt.s32.totalorder %s13, 3
    %p238 = pnand %p236, %p237
    %p239 = pneg %p238
    // Predicated region
    $region45: #{tpu_custom_call.1} parent=5 // pred_check
      _
    $region46: #{tpu_custom_call.1} parent=5 // pred_check_branch
      %241 = sbr.rel (%p238) target = $region48
    $region47: #{tpu_custom_call.1} parent=5 // pred_region
      %s242 = ssub.s32 %s13, 1
      %p243 = scmp.lt.s32.totalorder %s18, 1
      %s244 = scalar_select %p243, %s18, 1
      %s245 = smul.addr %s244, 32
      %s246 = smul.addr %s245, 8
      %s247 = scalar_lea.vmem %s0, %s246
      %p248 = pneg %p39
      %p249 = pneg %p36
      %p250 = pneg %p60
      %p251 = pneg %p57
      %p252 = pneg %p81
      %p253 = pneg %p78
      %p254 = pneg %p102
      %p255 = pneg %p99
      %p256 = pneg %p123
      %p257 = pneg %p120
      %p258 = pneg %p144
      %p259 = pneg %p141
      %p260 = pneg %p165
      %p261 = pneg %p162
      %p262 = pneg %p191
      %p263 = pneg %p188
      %p264 = scmp.lt.s32.totalorder %s18, 1
      %s265 = scalar_select %p264, %s18, 1
      %s266 = smul.addr %s265, 8
      %s267 = smul.addr %s266, 8
      %s268 = scalar_lea.vmem %s7, %s267
      %p269 = scmp.lt.s32.totalorder %s18, 1
      %s270 = scalar_select %p269, %s18, 1
      %s271 = smul.addr %s270, 32
      %s272 = smul.addr %s271, 8
      %s273 = scalar_lea.vmem %s0, %s272
      %p274 = scmp.lt.s32.totalorder %s18, 1
      %s275 = scalar_select %p274, %s18, 1
      %s276 = smul.addr %s275, 8
      %s277 = smul.addr %s276, 8
      %s278 = scalar_lea.vmem %s7, %s277
      %v280 = vld [vmem:[%s273] sm:$0xff]
      %v281 = vld [vmem:[%s273 + $0x8] sm:$0xff]
      %v282 = vld [vmem:[%s273 + $0x10] sm:$0xff]
      %v283 = vld [vmem:[%s273 + $0x18] sm:$0xff]
      %v284 = vld [vmem:[%s273 + $0x20] sm:$0xff]
      %v285 = vld [vmem:[%s273 + $0x28] sm:$0xff]
      %v286 = vld [vmem:[%s273 + $0x30] sm:$0xff]
      %v287 = vld [vmem:[%s273 + $0x38] sm:$0xff]
      %v288 = vld [vmem:[%s273 + $0x40] sm:$0xff]
      %v289 = vld [vmem:[%s273 + $0x48] sm:$0xff]
      %v290 = vld [vmem:[%s273 + $0x50] sm:$0xff]
      %v291 = vld [vmem:[%s273 + $0x58] sm:$0xff]
      %v292 = vld [vmem:[%s273 + $0x60] sm:$0xff]
      %v293 = vld [vmem:[%s273 + $0x68] sm:$0xff]
      %v294 = vld [vmem:[%s273 + $0x70] sm:$0xff]
      %v295 = vld [vmem:[%s273 + $0x78] sm:$0xff]
      %v296 = vld [vmem:[%s273 + $0x80] sm:$0xff]
      %v297 = vld [vmem:[%s273 + $0x88] sm:$0xff]
      %v298 = vld [vmem:[%s273 + $0x90] sm:$0xff]
      %v299 = vld [vmem:[%s273 + $0x98] sm:$0xff]
      %v300 = vld [vmem:[%s273 + $0xa0] sm:$0xff]
      %v301 = vld [vmem:[%s273 + $0xa8] sm:$0xff]
      %v302 = vld [vmem:[%s273 + $0xb0] sm:$0xff]
      %v303 = vld [vmem:[%s273 + $0xb8] sm:$0xff]
      %v304 = vld [vmem:[%s273 + $0xc0] sm:$0xff]
      %v305 = vld [vmem:[%s273 + $0xc8] sm:$0xff]
      %v306 = vld [vmem:[%s273 + $0xd0] sm:$0xff]
      %v307 = vld [vmem:[%s273 + $0xd8] sm:$0xff]
      %v308 = vld [vmem:[%s273 + $0xe0] sm:$0xff]
      %v309 = vld [vmem:[%s273 + $0xe8] sm:$0xff]
      %v310 = vld [vmem:[%s273 + $0xf0] sm:$0xff]
      %v311 = vld [vmem:[%s273 + $0xf8] sm:$0xff]
      %vm312 = vcmask 31744
      %313 = vst.msk [vmem:[#allocation2] sm:$0xff] %vm312, 0.0
      %314 = vst.msk [vmem:[#allocation2 + $0x8] sm:$0xff] %vm312, 0.0
      %vm315 = vcmask 25600
      %316 = vst.msk [vmem:[#allocation2 + $0x10] sm:$0x3] %vm315, 0.0
      %s317 = scalar_lea.vmem [#allocation2], 408
      %318 = vst.msk [vmem:[%s317] sm:$0xff] %vm312, 0.0
      %319 = vst.msk [vmem:[%s317 + $0x8] sm:$0xff] %vm312, 0.0
      %320 = vst.msk [vmem:[%s317 + $0x10] sm:$0x3] %vm315, 0.0
      %vm321 = vcmask 24576
      %322 = vst.msk [vmem:[#allocation2] sm:$0x1] %vm321, 0.0
      %323 = vst.msk [vmem:[#allocation2 + $0x18] sm:$0x1] %vm321, 0.0
      %324 = vst.msk [vmem:[#allocation2 + $0x30] sm:$0x1] %vm321, 0.0
      %325 = vst.msk [vmem:[#allocation2 + $0x48] sm:$0x1] %vm321, 0.0
      %326 = vst.msk [vmem:[#allocation2 + $0x60] sm:$0x1] %vm321, 0.0
      %327 = vst.msk [vmem:[#allocation2 + $0x78] sm:$0x1] %vm321, 0.0
      %328 = vst.msk [vmem:[#allocation2 + $0x90] sm:$0x1] %vm321, 0.0
      %329 = vst.msk [vmem:[#allocation2 + $0xa8] sm:$0x1] %vm321, 0.0
      %330 = vst.msk [vmem:[#allocation2 + $0xc0] sm:$0x1] %vm321, 0.0
      %331 = vst.msk [vmem:[#allocation2 + $0xd8] sm:$0x1] %vm321, 0.0
      %332 = vst.msk [vmem:[#allocation2 + $0xf0] sm:$0x1] %vm321, 0.0
      %333 = vst.msk [vmem:[#allocation2 + $0x108] sm:$0x1] %vm321, 0.0
      %334 = vst.msk [vmem:[#allocation2 + $0x120] sm:$0x1] %vm321, 0.0
      %335 = vst.msk [vmem:[#allocation2 + $0x138] sm:$0x1] %vm321, 0.0
      %336 = vst.msk [vmem:[#allocation2 + $0x150] sm:$0x1] %vm321, 0.0
      %337 = vst.msk [vmem:[#allocation2 + $0x168] sm:$0x1] %vm321, 0.0
      %338 = vst.msk [vmem:[#allocation2 + $0x180] sm:$0x1] %vm321, 0.0
      %339 = vst.msk [vmem:[#allocation2 + $0x198] sm:$0x1] %vm321, 0.0
      %340 = vst.msk [vmem:[#allocation2 + $0x11] sm:$0x1] %vm321, 0.0
      %341 = vst.msk [vmem:[#allocation2 + $0x29] sm:$0x1] %vm321, 0.0
      %342 = vst.msk [vmem:[#allocation2 + $0x41] sm:$0x1] %vm321, 0.0
      %343 = vst.msk [vmem:[#allocation2 + $0x59] sm:$0x1] %vm321, 0.0
      %344 = vst.msk [vmem:[#allocation2 + $0x71] sm:$0x1] %vm321, 0.0
      %345 = vst.msk [vmem:[#allocation2 + $0x89] sm:$0x1] %vm321, 0.0
      %346 = vst.msk [vmem:[#allocation2 + $0xa1] sm:$0x1] %vm321, 0.0
      %347 = vst.msk [vmem:[#allocation2 + $0xb9] sm:$0x1] %vm321, 0.0
      %348 = vst.msk [vmem:[#allocation2 + $0xd1] sm:$0x1] %vm321, 0.0
      %349 = vst.msk [vmem:[#allocation2 + $0xe9] sm:$0x1] %vm321, 0.0
      %350 = vst.msk [vmem:[#allocation2 + $0x101] sm:$0x1] %vm321, 0.0
      %351 = vst.msk [vmem:[#allocation2 + $0x119] sm:$0x1] %vm321, 0.0
      %352 = vst.msk [vmem:[#allocation2 + $0x131] sm:$0x1] %vm321, 0.0
      %353 = vst.msk [vmem:[#allocation2 + $0x149] sm:$0x1] %vm321, 0.0
      %354 = vst.msk [vmem:[#allocation2 + $0x161] sm:$0x1] %vm321, 0.0
      %355 = vst.msk [vmem:[#allocation2 + $0x179] sm:$0x1] %vm321, 0.0
      %356 = vst.msk [vmem:[#allocation2 + $0x191] sm:$0x1] %vm321, 0.0
      %357 = vst.msk [vmem:[#allocation2 + $0x1a9] sm:$0x1] %vm321, 0.0
      %vm358 = vcmask 64512
      %359 = vst.msk [vmem:[#allocation3] sm:$0xff] %vm358, 0.0
      %360 = vst.msk [vmem:[#allocation3 + $0x8] sm:$0xff] %vm358, 0.0
      %vm361 = vcmask 58368
      %362 = vst.msk [vmem:[#allocation3 + $0x10] sm:$0x3] %vm361, 0.0
      %s363 = scalar_lea.vmem [#allocation3], 408
      %364 = vst.msk [vmem:[%s363] sm:$0xff] %vm358, 0.0
      %365 = vst.msk [vmem:[%s363 + $0x8] sm:$0xff] %vm358, 0.0
      %366 = vst.msk [vmem:[%s363 + $0x10] sm:$0x3] %vm361, 0.0
      %vm367 = vcmask 57344
      %368 = vst.msk [vmem:[#allocation3] sm:$0x1] %vm367, 0.0
      %369 = vst.msk [vmem:[#allocation3 + $0x18] sm:$0x1] %vm367, 0.0
      %370 = vst.msk [vmem:[#allocation3 + $0x30] sm:$0x1] %vm367, 0.0
      %371 = vst.msk [vmem:[#allocation3 + $0x48] sm:$0x1] %vm367, 0.0
      %372 = vst.msk [vmem:[#allocation3 + $0x60] sm:$0x1] %vm367, 0.0
      %373 = vst.msk [vmem:[#allocation3 + $0x78] sm:$0x1] %vm367, 0.0
      %374 = vst.msk [vmem:[#allocation3 + $0x90] sm:$0x1] %vm367, 0.0
      %375 = vst.msk [vmem:[#allocation3 + $0xa8] sm:$0x1] %vm367, 0.0
      %376 = vst.msk [vmem:[#allocation3 + $0xc0] sm:$0x1] %vm367, 0.0
      %377 = vst.msk [vmem:[#allocation3 + $0xd8] sm:$0x1] %vm367, 0.0
      %378 = vst.msk [vmem:[#allocation3 + $0xf0] sm:$0x1] %vm367, 0.0
      %379 = vst.msk [vmem:[#allocation3 + $0x108] sm:$0x1] %vm367, 0.0
      %380 = vst.msk [vmem:[#allocation3 + $0x120] sm:$0x1] %vm367, 0.0
      %381 = vst.msk [vmem:[#allocation3 + $0x138] sm:$0x1] %vm367, 0.0
      %382 = vst.msk [vmem:[#allocation3 + $0x150] sm:$0x1] %vm367, 0.0
      %383 = vst.msk [vmem:[#allocation3 + $0x168] sm:$0x1] %vm367, 0.0
      %384 = vst.msk [vmem:[#allocation3 + $0x180] sm:$0x1] %vm367, 0.0
      %385 = vst.msk [vmem:[#allocation3 + $0x198] sm:$0x1] %vm367, 0.0
      %386 = vst.msk [vmem:[#allocation3 + $0x11] sm:$0x1] %vm367, 0.0
      %387 = vst.msk [vmem:[#allocation3 + $0x29] sm:$0x1] %vm367, 0.0
      %388 = vst.msk [vmem:[#allocation3 + $0x41] sm:$0x1] %vm367, 0.0
      %389 = vst.msk [vmem:[#allocation3 + $0x59] sm:$0x1] %vm367, 0.0
      %390 = vst.msk [vmem:[#allocation3 + $0x71] sm:$0x1] %vm367, 0.0
      %391 = vst.msk [vmem:[#allocation3 + $0x89] sm:$0x1] %vm367, 0.0
      %392 = vst.msk [vmem:[#allocation3 + $0xa1] sm:$0x1] %vm367, 0.0
      %393 = vst.msk [vmem:[#allocation3 + $0xb9] sm:$0x1] %vm367, 0.0
      %394 = vst.msk [vmem:[#allocation3 + $0xd1] sm:$0x1] %vm367, 0.0
      %395 = vst.msk [vmem:[#allocation3 + $0xe9] sm:$0x1] %vm367, 0.0
      %396 = vst.msk [vmem:[#allocation3 + $0x101] sm:$0x1] %vm367, 0.0
      %397 = vst.msk [vmem:[#allocation3 + $0x119] sm:$0x1] %vm367, 0.0
      %398 = vst.msk [vmem:[#allocation3 + $0x131] sm:$0x1] %vm367, 0.0
      %399 = vst.msk [vmem:[#allocation3 + $0x149] sm:$0x1] %vm367, 0.0
      %400 = vst.msk [vmem:[#allocation3 + $0x161] sm:$0x1] %vm367, 0.0
      %401 = vst.msk [vmem:[#allocation3 + $0x179] sm:$0x1] %vm367, 0.0
      %402 = vst.msk [vmem:[#allocation3 + $0x191] sm:$0x1] %vm367, 0.0
      %403 = vst.msk [vmem:[#allocation3 + $0x1a9] sm:$0x1] %vm367, 0.0
      %v404 = vmax.f32 %v280, 0.0
      %v405 = vmax.f32 %v281, 0.0
      %v406 = vmax.f32 %v282, 0.0
      %v407 = vmax.f32 %v283, 0.0
      %v408 = vmax.f32 %v284, 0.0
      %v409 = vmax.f32 %v285, 0.0
      %v410 = vmax.f32 %v286, 0.0
      %v411 = vmax.f32 %v287, 0.0
      %v412 = vmax.f32 %v288, 0.0
      %v413 = vmax.f32 %v289, 0.0
      %v414 = vmax.f32 %v290, 0.0
      %v415 = vmax.f32 %v291, 0.0
      %v416 = vmax.f32 %v292, 0.0
      %v417 = vmax.f32 %v293, 0.0
      %v418 = vmax.f32 %v294, 0.0
      %v419 = vmax.f32 %v295, 0.0
      %v420 = vmax.f32 %v296, 0.0
      %v421 = vmax.f32 %v297, 0.0
      %v422 = vmax.f32 %v298, 0.0
      %v423 = vmax.f32 %v299, 0.0
      %v424 = vmax.f32 %v300, 0.0
      %v425 = vmax.f32 %v301, 0.0
      %v426 = vmax.f32 %v302, 0.0
      %v427 = vmax.f32 %v303, 0.0
      %v428 = vmax.f32 %v304, 0.0
      %v429 = vmax.f32 %v305, 0.0
      %v430 = vmax.f32 %v306, 0.0
      %v431 = vmax.f32 %v307, 0.0
      %v432 = vmax.f32 %v308, 0.0
      %v433 = vmax.f32 %v309, 0.0
      %v434 = vmax.f32 %v310, 0.0
      %v435 = vmax.f32 %v311, 0.0
      %s436 = scalar_lea.vmem [#allocation2], 24
      %437 = vst.msk [vmem:[%s436 + $0x1] sm:$0xff] %vm312, %v404
      %438 = vst.msk [vmem:[%s436 + $0x9] sm:$0xff] %vm312, %v405
      %439 = vst.msk [vmem:[%s436 + $0x19] sm:$0xff] %vm312, %v406
      %440 = vst.msk [vmem:[%s436 + $0x21] sm:$0xff] %vm312, %v407
      %441 = vst.msk [vmem:[%s436 + $0x31] sm:$0xff] %vm312, %v408
      %442 = vst.msk [vmem:[%s436 + $0x39] sm:$0xff] %vm312, %v409
      %443 = vst.msk [vmem:[%s436 + $0x49] sm:$0xff] %vm312, %v410
      %444 = vst.msk [vmem:[%s436 + $0x51] sm:$0xff] %vm312, %v411
      %445 = vst.msk [vmem:[%s436 + $0x61] sm:$0xff] %vm312, %v412
      %446 = vst.msk [vmem:[%s436 + $0x69] sm:$0xff] %vm312, %v413
      %447 = vst.msk [vmem:[%s436 + $0x79] sm:$0xff] %vm312, %v414
      %448 = vst.msk [vmem:[%s436 + $0x81] sm:$0xff] %vm312, %v415
      %449 = vst.msk [vmem:[%s436 + $0x91] sm:$0xff] %vm312, %v416
      %450 = vst.msk [vmem:[%s436 + $0x99] sm:$0xff] %vm312, %v417
      %451 = vst.msk [vmem:[%s436 + $0xa9] sm:$0xff] %vm312, %v418
      %452 = vst.msk [vmem:[%s436 + $0xb1] sm:$0xff] %vm312, %v419
      %453 = vst.msk [vmem:[%s436 + $0xc1] sm:$0xff] %vm312, %v420
      %454 = vst.msk [vmem:[%s436 + $0xc9] sm:$0xff] %vm312, %v421
      %455 = vst.msk [vmem:[%s436 + $0xd9] sm:$0xff] %vm312, %v422
      %456 = vst.msk [vmem:[%s436 + $0xe1] sm:$0xff] %vm312, %v423
      %457 = vst.msk [vmem:[%s436 + $0xf1] sm:$0xff] %vm312, %v424
      %458 = vst.msk [vmem:[%s436 + $0xf9] sm:$0xff] %vm312, %v425
      %459 = vst.msk [vmem:[%s436 + $0x109] sm:$0xff] %vm312, %v426
      %460 = vst.msk [vmem:[%s436 + $0x111] sm:$0xff] %vm312, %v427
      %461 = vst.msk [vmem:[%s436 + $0x121] sm:$0xff] %vm312, %v428
      %462 = vst.msk [vmem:[%s436 + $0x129] sm:$0xff] %vm312, %v429
      %463 = vst.msk [vmem:[%s436 + $0x139] sm:$0xff] %vm312, %v430
      %464 = vst.msk [vmem:[%s436 + $0x141] sm:$0xff] %vm312, %v431
      %465 = vst.msk [vmem:[%s436 + $0x151] sm:$0xff] %vm312, %v432
      %466 = vst.msk [vmem:[%s436 + $0x159] sm:$0xff] %vm312, %v433
      %467 = vst.msk [vmem:[%s436 + $0x169] sm:$0xff] %vm312, %v434
      %468 = vst.msk [vmem:[%s436 + $0x171] sm:$0xff] %vm312, %v435
      %v469 = vld [vmem:[#allocation2] sm:$0xff]
      %v470 = vld [vmem:[#allocation2 + $0x8] sm:$0xff]
      %v471 = vld [vmem:[#allocation2 + $0x10] sm:$0x3]
      %v472 = vld [vmem:[#allocation2 + $0x18] sm:$0xff]
      %v473 = vld [vmem:[#allocation2 + $0x20] sm:$0xff]
      %v474 = vld [vmem:[#allocation2 + $0x28] sm:$0x3]
      %v475 = vld [vmem:[#allocation2 + $0x30] sm:$0xff]
      %v476 = vld [vmem:[#allocation2 + $0x38] sm:$0xff]
      %v477 = vld [vmem:[#allocation2 + $0x40] sm:$0x3]
      %v478 = vld [vmem:[#allocation2 + $0x48] sm:$0xff]
      %v479 = vld [vmem:[#allocation2 + $0x50] sm:$0xff]
      %v480 = vld [vmem:[#allocation2 + $0x58] sm:$0x3]
      %v481 = vld [vmem:[#allocation2 + $0x60] sm:$0xff]
      %v482 = vld [vmem:[#allocation2 + $0x68] sm:$0xff]
      %v483 = vld [vmem:[#allocation2 + $0x70] sm:$0x3]
      %v484 = vld [vmem:[#allocation2 + $0x78] sm:$0xff]
      %v485 = vld [vmem:[#allocation2 + $0x80] sm:$0xff]
      %v486 = vld [vmem:[#allocation2 + $0x88] sm:$0x3]
      %v487 = vld [vmem:[#allocation2 + $0x90] sm:$0xff]
      %v488 = vld [vmem:[#allocation2 + $0x98] sm:$0xff]
      %v489 = vld [vmem:[#allocation2 + $0xa0] sm:$0x3]
      %v490 = vld [vmem:[#allocation2 + $0xa8] sm:$0xff]
      %v491 = vld [vmem:[#allocation2 + $0xb0] sm:$0xff]
      %v492 = vld [vmem:[#allocation2 + $0xb8] sm:$0x3]
      %v493 = vld [vmem:[#allocation2 + $0xc0] sm:$0xff]
      %v494 = vld [vmem:[#allocation2 + $0xc8] sm:$0xff]
      %v495 = vld [vmem:[#allocation2 + $0xd0] sm:$0x3]
      %v496 = vld [vmem:[#allocation2 + $0xd8] sm:$0xff]
      %v497 = vld [vmem:[#allocation2 + $0xe0] sm:$0xff]
      %v498 = vld [vmem:[#allocation2 + $0xe8] sm:$0x3]
      %v499 = vld [vmem:[#allocation2 + $0xf0] sm:$0xff]
      %v500 = vld [vmem:[#allocation2 + $0xf8] sm:$0xff]
      %v501 = vld [vmem:[#allocation2 + $0x100] sm:$0x3]
      %v502 = vld [vmem:[#allocation2 + $0x108] sm:$0xff]
      %v503 = vld [vmem:[#allocation2 + $0x110] sm:$0xff]
      %v504 = vld [vmem:[#allocation2 + $0x118] sm:$0x3]
      %v505 = vld [vmem:[#allocation2 + $0x120] sm:$0xff]
      %v506 = vld [vmem:[#allocation2 + $0x128] sm:$0xff]
      %v507 = vld [vmem:[#allocation2 + $0x130] sm:$0x3]
      %v508 = vld [vmem:[#allocation2 + $0x138] sm:$0xff]
      %v509 = vld [vmem:[#allocation2 + $0x140] sm:$0xff]
      %v510 = vld [vmem:[#allocation2 + $0x148] sm:$0x3]
      %v511 = vld [vmem:[#allocation2 + $0x150] sm:$0xff]
      %v512 = vld [vmem:[#allocation2 + $0x158] sm:$0xff]
      %v513 = vld [vmem:[#allocation2 + $0x160] sm:$0x3]
      %v514 = vld [vmem:[#allocation2 + $0x168] sm:$0xff]
      %v515 = vld [vmem:[#allocation2 + $0x170] sm:$0xff]
      %v516 = vld [vmem:[#allocation2 + $0x178] sm:$0x3]
      %v517 = vld [vmem:[#allocation2 + $0x180] sm:$0xff]
      %v518 = vld [vmem:[#allocation2 + $0x188] sm:$0xff]
      %v519 = vld [vmem:[#allocation2 + $0x190] sm:$0x3]
      %v520 = vld [vmem:[#allocation2 + $0x198] sm:$0xff]
      %v521 = vld [vmem:[#allocation2 + $0x1a0] sm:$0xff]
      %v522 = vld [vmem:[#allocation2 + $0x1a8] sm:$0x3]
      %vm571 = vcmask 1046528
      %v572 = vrot.slane %v469, 1
      %v573 = vrot.slane %v470, 1
      %v574 = vsel %vm571, %v572, %v573
      %v575 = vrot.slane %v471, 1
      %v576 = vsel %vm571, %v573, %v575
      %v577 = vrot.slane %v472, 1
      %v578 = vrot.slane %v473, 1
      %v579 = vsel %vm571, %v577, %v578
      %v580 = vrot.slane %v474, 1
      %v581 = vsel %vm571, %v578, %v580
      %v582 = vrot.slane %v475, 1
      %v583 = vrot.slane %v476, 1
      %v584 = vsel %vm571, %v582, %v583
      %v585 = vrot.slane %v477, 1
      %v586 = vsel %vm571, %v583, %v585
      %v587 = vrot.slane %v478, 1
      %v588 = vrot.slane %v479, 1
      %v589 = vsel %vm571, %v587, %v588
      %v590 = vrot.slane %v480, 1
      %v591 = vsel %vm571, %v588, %v590
      %v592 = vrot.slane %v481, 1
      %v593 = vrot.slane %v482, 1
      %v594 = vsel %vm571, %v592, %v593
      %v595 = vrot.slane %v483, 1
      %v596 = vsel %vm571, %v593, %v595
      %v597 = vrot.slane %v484, 1
      %v598 = vrot.slane %v485, 1
      %v599 = vsel %vm571, %v597, %v598
      %v600 = vrot.slane %v486, 1
      %v601 = vsel %vm571, %v598, %v600
      %v602 = vrot.slane %v487, 1
      %v603 = vrot.slane %v488, 1
      %v604 = vsel %vm571, %v602, %v603
      %v605 = vrot.slane %v489, 1
      %v606 = vsel %vm571, %v603, %v605
      %v607 = vrot.slane %v490, 1
      %v608 = vrot.slane %v491, 1
      %v609 = vsel %vm571, %v607, %v608
      %v610 = vrot.slane %v492, 1
      %v611 = vsel %vm571, %v608, %v610
      %v612 = vrot.slane %v493, 1
      %v613 = vrot.slane %v494, 1
      %v614 = vsel %vm571, %v612, %v613
      %v615 = vrot.slane %v495, 1
      %v616 = vsel %vm571, %v613, %v615
      %v617 = vrot.slane %v496, 1
      %v618 = vrot.slane %v497, 1
      %v619 = vsel %vm571, %v617, %v618
      %v620 = vrot.slane %v498, 1
      %v621 = vsel %vm571, %v618, %v620
      %v622 = vrot.slane %v499, 1
      %v623 = vrot.slane %v500, 1
      %v624 = vsel %vm571, %v622, %v623
      %v625 = vrot.slane %v501, 1
      %v626 = vsel %vm571, %v623, %v625
      %v627 = vrot.slane %v502, 1
      %v628 = vrot.slane %v503, 1
      %v629 = vsel %vm571, %v627, %v628
      %v630 = vrot.slane %v504, 1
      %v631 = vsel %vm571, %v628, %v630
      %v632 = vrot.slane %v505, 1
      %v633 = vrot.slane %v506, 1
      %v634 = vsel %vm571, %v632, %v633
      %v635 = vrot.slane %v507, 1
      %v636 = vsel %vm571, %v633, %v635
      %v637 = vrot.slane %v508, 1
      %v638 = vrot.slane %v509, 1
      %v639 = vsel %vm571, %v637, %v638
      %v640 = vrot.slane %v510, 1
      %v641 = vsel %vm571, %v638, %v640
      %v642 = vrot.slane %v511, 1
      %v643 = vrot.slane %v512, 1
      %v644 = vsel %vm571, %v642, %v643
      %v645 = vrot.slane %v513, 1
      %v646 = vsel %vm571, %v643, %v645
      %v647 = vrot.slane %v514, 1
      %v648 = vrot.slane %v515, 1
      %v649 = vsel %vm571, %v647, %v648
      %v650 = vrot.slane %v516, 1
      %v651 = vsel %vm571, %v648, %v650
      %vm652 = vcmask 1045504
      %v653 = vrot.slane %v469, 2
      %v654 = vrot.slane %v470, 2
      %v655 = vsel %vm652, %v653, %v654
      %v656 = vrot.slane %v471, 2
      %v657 = vsel %vm652, %v654, %v656
      %v658 = vrot.slane %v472, 2
      %v659 = vrot.slane %v473, 2
      %v660 = vsel %vm652, %v658, %v659
      %v661 = vrot.slane %v474, 2
      %v662 = vsel %vm652, %v659, %v661
      %v663 = vrot.slane %v475, 2
      %v664 = vrot.slane %v476, 2
      %v665 = vsel %vm652, %v663, %v664
      %v666 = vrot.slane %v477, 2
      %v667 = vsel %vm652, %v664, %v666
      %v668 = vrot.slane %v478, 2
      %v669 = vrot.slane %v479, 2
      %v670 = vsel %vm652, %v668, %v669
      %v671 = vrot.slane %v480, 2
      %v672 = vsel %vm652, %v669, %v671
      %v673 = vrot.slane %v481, 2
      %v674 = vrot.slane %v482, 2
      %v675 = vsel %vm652, %v673, %v674
      %v676 = vrot.slane %v483, 2
      %v677 = vsel %vm652, %v674, %v676
      %v678 = vrot.slane %v484, 2
      %v679 = vrot.slane %v485, 2
      %v680 = vsel %vm652, %v678, %v679
      %v681 = vrot.slane %v486, 2
      %v682 = vsel %vm652, %v679, %v681
      %v683 = vrot.slane %v487, 2
      %v684 = vrot.slane %v488, 2
      %v685 = vsel %vm652, %v683, %v684
      %v686 = vrot.slane %v489, 2
      %v687 = vsel %vm652, %v684, %v686
      %v688 = vrot.slane %v490, 2
      %v689 = vrot.slane %v491, 2
      %v690 = vsel %vm652, %v688, %v689
      %v691 = vrot.slane %v492, 2
      %v692 = vsel %vm652, %v689, %v691
      %v693 = vrot.slane %v493, 2
      %v694 = vrot.slane %v494, 2
      %v695 = vsel %vm652, %v693, %v694
      %v696 = vrot.slane %v495, 2
      %v697 = vsel %vm652, %v694, %v696
      %v698 = vrot.slane %v496, 2
      %v699 = vrot.slane %v497, 2
      %v700 = vsel %vm652, %v698, %v699
      %v701 = vrot.slane %v498, 2
      %v702 = vsel %vm652, %v699, %v701
      %v703 = vrot.slane %v499, 2
      %v704 = vrot.slane %v500, 2
      %v705 = vsel %vm652, %v703, %v704
      %v706 = vrot.slane %v501, 2
      %v707 = vsel %vm652, %v704, %v706
      %v708 = vrot.slane %v502, 2
      %v709 = vrot.slane %v503, 2
      %v710 = vsel %vm652, %v708, %v709
      %v711 = vrot.slane %v504, 2
      %v712 = vsel %vm652, %v709, %v711
      %v713 = vrot.slane %v505, 2
      %v714 = vrot.slane %v506, 2
      %v715 = vsel %vm652, %v713, %v714
      %v716 = vrot.slane %v507, 2
      %v717 = vsel %vm652, %v714, %v716
      %v718 = vrot.slane %v508, 2
      %v719 = vrot.slane %v509, 2
      %v720 = vsel %vm652, %v718, %v719
      %v721 = vrot.slane %v510, 2
      %v722 = vsel %vm652, %v719, %v721
      %v723 = vrot.slane %v511, 2
      %v724 = vrot.slane %v512, 2
      %v725 = vsel %vm652, %v723, %v724
      %v726 = vrot.slane %v513, 2
      %v727 = vsel %vm652, %v724, %v726
      %v728 = vrot.slane %v514, 2
      %v729 = vrot.slane %v515, 2
      %v730 = vsel %vm652, %v728, %v729
      %v731 = vrot.slane %v516, 2
      %v732 = vsel %vm652, %v729, %v731
      %v736 = vrot.slane %v517, 1
      %v737 = vrot.slane %v518, 1
      %v738 = vsel %vm571, %v736, %v737
      %v739 = vrot.slane %v519, 1
      %v740 = vsel %vm571, %v737, %v739
      %v741 = vrot.slane %v517, 2
      %v742 = vrot.slane %v518, 2
      %v743 = vsel %vm652, %v741, %v742
      %v744 = vrot.slane %v519, 2
      %v745 = vsel %vm652, %v742, %v744
      %v749 = vrot.slane %v520, 1
      %v750 = vrot.slane %v521, 1
      %v751 = vsel %vm571, %v749, %v750
      %v752 = vrot.slane %v522, 1
      %v753 = vsel %vm571, %v750, %v752
      %v754 = vrot.slane %v520, 2
      %v755 = vrot.slane %v521, 2
      %v756 = vsel %vm652, %v754, %v755
      %v757 = vrot.slane %v522, 2
      %v758 = vsel %vm652, %v755, %v757
      %759 = vrot.lane.b32.xlu0 %v574, 4
      %v760 = vpop.permute.xlu0 %759
      %761 = vrot.lane.b32.xlu0 %v576, 4
      %v762 = vpop.permute.xlu0 %761
      %763 = vrot.lane.b32.xlu0 %v579, 4
      %v764 = vpop.permute.xlu0 %763
      %765 = vrot.lane.b32.xlu0 %v581, 4
      %v766 = vpop.permute.xlu0 %765
      %767 = vrot.lane.b32.xlu0 %v584, 4
      %v768 = vpop.permute.xlu0 %767
      %769 = vrot.lane.b32.xlu0 %v586, 4
      %v770 = vpop.permute.xlu0 %769
      %771 = vrot.lane.b32.xlu0 %v589, 4
      %v772 = vpop.permute.xlu0 %771
      %773 = vrot.lane.b32.xlu0 %v591, 4
      %v774 = vpop.permute.xlu0 %773
      %775 = vrot.lane.b32.xlu0 %v594, 4
      %v776 = vpop.permute.xlu0 %775
      %777 = vrot.lane.b32.xlu0 %v596, 4
      %v778 = vpop.permute.xlu0 %777
      %779 = vrot.lane.b32.xlu0 %v599, 4
      %v780 = vpop.permute.xlu0 %779
      %781 = vrot.lane.b32.xlu0 %v601, 4
      %v782 = vpop.permute.xlu0 %781
      %783 = vrot.lane.b32.xlu0 %v604, 4
      %v784 = vpop.permute.xlu0 %783
      %785 = vrot.lane.b32.xlu0 %v606, 4
      %v786 = vpop.permute.xlu0 %785
      %787 = vrot.lane.b32.xlu0 %v609, 4
      %v788 = vpop.permute.xlu0 %787
      %789 = vrot.lane.b32.xlu0 %v611, 4
      %v790 = vpop.permute.xlu0 %789
      %791 = vrot.lane.b32.xlu0 %v614, 4
      %v792 = vpop.permute.xlu0 %791
      %793 = vrot.lane.b32.xlu0 %v616, 4
      %v794 = vpop.permute.xlu0 %793
      %795 = vrot.lane.b32.xlu0 %v619, 4
      %v796 = vpop.permute.xlu0 %795
      %797 = vrot.lane.b32.xlu0 %v621, 4
      %v798 = vpop.permute.xlu0 %797
      %799 = vrot.lane.b32.xlu0 %v624, 4
      %v800 = vpop.permute.xlu0 %799
      %801 = vrot.lane.b32.xlu0 %v626, 4
      %v802 = vpop.permute.xlu0 %801
      %803 = vrot.lane.b32.xlu0 %v629, 4
      %v804 = vpop.permute.xlu0 %803
      %805 = vrot.lane.b32.xlu0 %v631, 4
      %v806 = vpop.permute.xlu0 %805
      %807 = vrot.lane.b32.xlu0 %v634, 4
      %v808 = vpop.permute.xlu0 %807
      %809 = vrot.lane.b32.xlu0 %v636, 4
      %v810 = vpop.permute.xlu0 %809
      %811 = vrot.lane.b32.xlu0 %v639, 4
      %v812 = vpop.permute.xlu0 %811
      %813 = vrot.lane.b32.xlu0 %v641, 4
      %v814 = vpop.permute.xlu0 %813
      %815 = vrot.lane.b32.xlu0 %v644, 4
      %v816 = vpop.permute.xlu0 %815
      %817 = vrot.lane.b32.xlu0 %v646, 4
      %v818 = vpop.permute.xlu0 %817
      %819 = vrot.lane.b32.xlu0 %v649, 4
      %v820 = vpop.permute.xlu0 %819
      %821 = vrot.lane.b32.xlu0 %v651, 4
      %v822 = vpop.permute.xlu0 %821
      %855 = vrot.lane.b32.xlu0 %v655, 8
      %v856 = vpop.permute.xlu0 %855
      %857 = vrot.lane.b32.xlu0 %v657, 8
      %v858 = vpop.permute.xlu0 %857
      %859 = vrot.lane.b32.xlu0 %v660, 8
      %v860 = vpop.permute.xlu0 %859
      %861 = vrot.lane.b32.xlu0 %v662, 8
      %v862 = vpop.permute.xlu0 %861
      %863 = vrot.lane.b32.xlu0 %v665, 8
      %v864 = vpop.permute.xlu0 %863
      %865 = vrot.lane.b32.xlu0 %v667, 8
      %v866 = vpop.permute.xlu0 %865
      %867 = vrot.lane.b32.xlu0 %v670, 8
      %v868 = vpop.permute.xlu0 %867
      %869 = vrot.lane.b32.xlu0 %v672, 8
      %v870 = vpop.permute.xlu0 %869
      %871 = vrot.lane.b32.xlu0 %v675, 8
      %v872 = vpop.permute.xlu0 %871
      %873 = vrot.lane.b32.xlu0 %v677, 8
      %v874 = vpop.permute.xlu0 %873
      %875 = vrot.lane.b32.xlu0 %v680, 8
      %v876 = vpop.permute.xlu0 %875
      %877 = vrot.lane.b32.xlu0 %v682, 8
      %v878 = vpop.permute.xlu0 %877
      %879 = vrot.lane.b32.xlu0 %v685, 8
      %v880 = vpop.permute.xlu0 %879
      %881 = vrot.lane.b32.xlu0 %v687, 8
      %v882 = vpop.permute.xlu0 %881
      %883 = vrot.lane.b32.xlu0 %v690, 8
      %v884 = vpop.permute.xlu0 %883
      %885 = vrot.lane.b32.xlu0 %v692, 8
      %v886 = vpop.permute.xlu0 %885
      %887 = vrot.lane.b32.xlu0 %v695, 8
      %v888 = vpop.permute.xlu0 %887
      %889 = vrot.lane.b32.xlu0 %v697, 8
      %v890 = vpop.permute.xlu0 %889
      %891 = vrot.lane.b32.xlu0 %v700, 8
      %v892 = vpop.permute.xlu0 %891
      %893 = vrot.lane.b32.xlu0 %v702, 8
      %v894 = vpop.permute.xlu0 %893
      %895 = vrot.lane.b32.xlu0 %v705, 8
      %v896 = vpop.permute.xlu0 %895
      %897 = vrot.lane.b32.xlu0 %v707, 8
      %v898 = vpop.permute.xlu0 %897
      %899 = vrot.lane.b32.xlu0 %v710, 8
      %v900 = vpop.permute.xlu0 %899
      %901 = vrot.lane.b32.xlu0 %v712, 8
      %v902 = vpop.permute.xlu0 %901
      %903 = vrot.lane.b32.xlu0 %v715, 8
      %v904 = vpop.permute.xlu0 %903
      %905 = vrot.lane.b32.xlu0 %v717, 8
      %v906 = vpop.permute.xlu0 %905
      %907 = vrot.lane.b32.xlu0 %v720, 8
      %v908 = vpop.permute.xlu0 %907
      %909 = vrot.lane.b32.xlu0 %v722, 8
      %v910 = vpop.permute.xlu0 %909
      %911 = vrot.lane.b32.xlu0 %v725, 8
      %v912 = vpop.permute.xlu0 %911
      %913 = vrot.lane.b32.xlu0 %v727, 8
      %v914 = vpop.permute.xlu0 %913
      %915 = vrot.lane.b32.xlu0 %v730, 8
      %v916 = vpop.permute.xlu0 %915
      %917 = vrot.lane.b32.xlu0 %v732, 8
      %v918 = vpop.permute.xlu0 %917
      %951 = vrot.lane.b32.xlu0 %v472, 12
      %v952 = vpop.permute.xlu0 %951
      %953 = vrot.lane.b32.xlu0 %v473, 12
      %v954 = vpop.permute.xlu0 %953
      %955 = vrot.lane.b32.xlu0 %v475, 12
      %v956 = vpop.permute.xlu0 %955
      %957 = vrot.lane.b32.xlu0 %v476, 12
      %v958 = vpop.permute.xlu0 %957
      %959 = vrot.lane.b32.xlu0 %v478, 12
      %v960 = vpop.permute.xlu0 %959
      %961 = vrot.lane.b32.xlu0 %v479, 12
      %v962 = vpop.permute.xlu0 %961
      %963 = vrot.lane.b32.xlu0 %v481, 12
      %v964 = vpop.permute.xlu0 %963
      %965 = vrot.lane.b32.xlu0 %v482, 12
      %v966 = vpop.permute.xlu0 %965
      %967 = vrot.lane.b32.xlu0 %v484, 12
      %v968 = vpop.permute.xlu0 %967
      %969 = vrot.lane.b32.xlu0 %v485, 12
      %v970 = vpop.permute.xlu0 %969
      %971 = vrot.lane.b32.xlu0 %v487, 12
      %v972 = vpop.permute.xlu0 %971
      %973 = vrot.lane.b32.xlu0 %v488, 12
      %v974 = vpop.permute.xlu0 %973
      %975 = vrot.lane.b32.xlu0 %v490, 12
      %v976 = vpop.permute.xlu0 %975
      %977 = vrot.lane.b32.xlu0 %v491, 12
      %v978 = vpop.permute.xlu0 %977
      %979 = vrot.lane.b32.xlu0 %v493, 12
      %v980 = vpop.permute.xlu0 %979
      %981 = vrot.lane.b32.xlu0 %v494, 12
      %v982 = vpop.permute.xlu0 %981
      %983 = vrot.lane.b32.xlu0 %v496, 12
      %v984 = vpop.permute.xlu0 %983
      %985 = vrot.lane.b32.xlu0 %v497, 12
      %v986 = vpop.permute.xlu0 %985
      %987 = vrot.lane.b32.xlu0 %v499, 12
      %v988 = vpop.permute.xlu0 %987
      %989 = vrot.lane.b32.xlu0 %v500, 12
      %v990 = vpop.permute.xlu0 %989
      %991 = vrot.lane.b32.xlu0 %v502, 12
      %v992 = vpop.permute.xlu0 %991
      %993 = vrot.lane.b32.xlu0 %v503, 12
      %v994 = vpop.permute.xlu0 %993
      %995 = vrot.lane.b32.xlu0 %v505, 12
      %v996 = vpop.permute.xlu0 %995
      %997 = vrot.lane.b32.xlu0 %v506, 12
      %v998 = vpop.permute.xlu0 %997
      %999 = vrot.lane.b32.xlu0 %v508, 12
      %v1000 = vpop.permute.xlu0 %999
      %1001 = vrot.lane.b32.xlu0 %v509, 12
      %v1002 = vpop.permute.xlu0 %1001
      %1003 = vrot.lane.b32.xlu0 %v511, 12
      %v1004 = vpop.permute.xlu0 %1003
      %1005 = vrot.lane.b32.xlu0 %v512, 12
      %v1006 = vpop.permute.xlu0 %1005
      %1007 = vrot.lane.b32.xlu0 %v514, 12
      %v1008 = vpop.permute.xlu0 %1007
      %1009 = vrot.lane.b32.xlu0 %v515, 12
      %v1010 = vpop.permute.xlu0 %1009
      %1011 = vrot.lane.b32.xlu0 %v517, 12
      %v1012 = vpop.permute.xlu0 %1011
      %1013 = vrot.lane.b32.xlu0 %v518, 12
      %v1014 = vpop.permute.xlu0 %1013
      %1047 = vrot.lane.b32.xlu0 %v579, 16
      %v1048 = vpop.permute.xlu0 %1047
      %1049 = vrot.lane.b32.xlu0 %v581, 16
      %v1050 = vpop.permute.xlu0 %1049
      %1051 = vrot.lane.b32.xlu0 %v584, 16
      %v1052 = vpop.permute.xlu0 %1051
      %1053 = vrot.lane.b32.xlu0 %v586, 16
      %v1054 = vpop.permute.xlu0 %1053
      %1055 = vrot.lane.b32.xlu0 %v589, 16
      %v1056 = vpop.permute.xlu0 %1055
      %1057 = vrot.lane.b32.xlu0 %v591, 16
      %v1058 = vpop.permute.xlu0 %1057
      %1059 = vrot.lane.b32.xlu0 %v594, 16
      %v1060 = vpop.permute.xlu0 %1059
      %1061 = vrot.lane.b32.xlu0 %v596, 16
      %v1062 = vpop.permute.xlu0 %1061
      %1063 = vrot.lane.b32.xlu0 %v599, 16
      %v1064 = vpop.permute.xlu0 %1063
      %1065 = vrot.lane.b32.xlu0 %v601, 16
      %v1066 = vpop.permute.xlu0 %1065
      %1067 = vrot.lane.b32.xlu0 %v604, 16
      %v1068 = vpop.permute.xlu0 %1067
      %1069 = vrot.lane.b32.xlu0 %v606, 16
      %v1070 = vpop.permute.xlu0 %1069
      %1071 = vrot.lane.b32.xlu0 %v609, 16
      %v1072 = vpop.permute.xlu0 %1071
      %1073 = vrot.lane.b32.xlu0 %v611, 16
      %v1074 = vpop.permute.xlu0 %1073
      %1075 = vrot.lane.b32.xlu0 %v614, 16
      %v1076 = vpop.permute.xlu0 %1075
      %1077 = vrot.lane.b32.xlu0 %v616, 16
      %v1078 = vpop.permute.xlu0 %1077
      %1079 = vrot.lane.b32.xlu0 %v619, 16
      %v1080 = vpop.permute.xlu0 %1079
      %1081 = vrot.lane.b32.xlu0 %v621, 16
      %v1082 = vpop.permute.xlu0 %1081
      %1083 = vrot.lane.b32.xlu0 %v624, 16
      %v1084 = vpop.permute.xlu0 %1083
      %1085 = vrot.lane.b32.xlu0 %v626, 16
      %v1086 = vpop.permute.xlu0 %1085
      %1087 = vrot.lane.b32.xlu0 %v629, 16
      %v1088 = vpop.permute.xlu0 %1087
      %1089 = vrot.lane.b32.xlu0 %v631, 16
      %v1090 = vpop.permute.xlu0 %1089
      %1091 = vrot.lane.b32.xlu0 %v634, 16
      %v1092 = vpop.permute.xlu0 %1091
      %1093 = vrot.lane.b32.xlu0 %v636, 16
      %v1094 = vpop.permute.xlu0 %1093
      %1095 = vrot.lane.b32.xlu0 %v639, 16
      %v1096 = vpop.permute.xlu0 %1095
      %1097 = vrot.lane.b32.xlu0 %v641, 16
      %v1098 = vpop.permute.xlu0 %1097
      %1099 = vrot.lane.b32.xlu0 %v644, 16
      %v1100 = vpop.permute.xlu0 %1099
      %1101 = vrot.lane.b32.xlu0 %v646, 16
      %v1102 = vpop.permute.xlu0 %1101
      %1103 = vrot.lane.b32.xlu0 %v649, 16
      %v1104 = vpop.permute.xlu0 %1103
      %1105 = vrot.lane.b32.xlu0 %v651, 16
      %v1106 = vpop.permute.xlu0 %1105
      %1107 = vrot.lane.b32.xlu0 %v738, 16
      %v1108 = vpop.permute.xlu0 %1107
      %1109 = vrot.lane.b32.xlu0 %v740, 16
      %v1110 = vpop.permute.xlu0 %1109
      %1143 = vrot.lane.b32.xlu0 %v660, 20
      %v1144 = vpop.permute.xlu0 %1143
      %1145 = vrot.lane.b32.xlu0 %v662, 20
      %v1146 = vpop.permute.xlu0 %1145
      %1147 = vrot.lane.b32.xlu0 %v665, 20
      %v1148 = vpop.permute.xlu0 %1147
      %1149 = vrot.lane.b32.xlu0 %v667, 20
      %v1150 = vpop.permute.xlu0 %1149
      %1151 = vrot.lane.b32.xlu0 %v670, 20
      %v1152 = vpop.permute.xlu0 %1151
      %1153 = vrot.lane.b32.xlu0 %v672, 20
      %v1154 = vpop.permute.xlu0 %1153
      %1155 = vrot.lane.b32.xlu0 %v675, 20
      %v1156 = vpop.permute.xlu0 %1155
      %1157 = vrot.lane.b32.xlu0 %v677, 20
      %v1158 = vpop.permute.xlu0 %1157
      %1159 = vrot.lane.b32.xlu0 %v680, 20
      %v1160 = vpop.permute.xlu0 %1159
      %1161 = vrot.lane.b32.xlu0 %v682, 20
      %v1162 = vpop.permute.xlu0 %1161
      %1163 = vrot.lane.b32.xlu0 %v685, 20
      %v1164 = vpop.permute.xlu0 %1163
      %1165 = vrot.lane.b32.xlu0 %v687, 20
      %v1166 = vpop.permute.xlu0 %1165
      %1167 = vrot.lane.b32.xlu0 %v690, 20
      %v1168 = vpop.permute.xlu0 %1167
      %1169 = vrot.lane.b32.xlu0 %v692, 20
      %v1170 = vpop.permute.xlu0 %1169
      %1171 = vrot.lane.b32.xlu0 %v695, 20
      %v1172 = vpop.permute.xlu0 %1171
      %1173 = vrot.lane.b32.xlu0 %v697, 20
      %v1174 = vpop.permute.xlu0 %1173
      %1175 = vrot.lane.b32.xlu0 %v700, 20
      %v1176 = vpop.permute.xlu0 %1175
      %1177 = vrot.lane.b32.xlu0 %v702, 20
      %v1178 = vpop.permute.xlu0 %1177
      %1179 = vrot.lane.b32.xlu0 %v705, 20
      %v1180 = vpop.permute.xlu0 %1179
      %1181 = vrot.lane.b32.xlu0 %v707, 20
      %v1182 = vpop.permute.xlu0 %1181
      %1183 = vrot.lane.b32.xlu0 %v710, 20
      %v1184 = vpop.permute.xlu0 %1183
      %1185 = vrot.lane.b32.xlu0 %v712, 20
      %v1186 = vpop.permute.xlu0 %1185
      %1187 = vrot.lane.b32.xlu0 %v715, 20
      %v1188 = vpop.permute.xlu0 %1187
      %1189 = vrot.lane.b32.xlu0 %v717, 20
      %v1190 = vpop.permute.xlu0 %1189
      %1191 = vrot.lane.b32.xlu0 %v720, 20
      %v1192 = vpop.permute.xlu0 %1191
      %1193 = vrot.lane.b32.xlu0 %v722, 20
      %v1194 = vpop.permute.xlu0 %1193
      %1195 = vrot.lane.b32.xlu0 %v725, 20
      %v1196 = vpop.permute.xlu0 %1195
      %1197 = vrot.lane.b32.xlu0 %v727, 20
      %v1198 = vpop.permute.xlu0 %1197
      %1199 = vrot.lane.b32.xlu0 %v730, 20
      %v1200 = vpop.permute.xlu0 %1199
      %1201 = vrot.lane.b32.xlu0 %v732, 20
      %v1202 = vpop.permute.xlu0 %1201
      %1203 = vrot.lane.b32.xlu0 %v743, 20
      %v1204 = vpop.permute.xlu0 %1203
      %1205 = vrot.lane.b32.xlu0 %v745, 20
      %v1206 = vpop.permute.xlu0 %1205
      %1239 = vrot.lane.b32.xlu0 %v475, 24
      %v1240 = vpop.permute.xlu0 %1239
      %1241 = vrot.lane.b32.xlu0 %v476, 24
      %v1242 = vpop.permute.xlu0 %1241
      %1243 = vrot.lane.b32.xlu0 %v478, 24
      %v1244 = vpop.permute.xlu0 %1243
      %1245 = vrot.lane.b32.xlu0 %v479, 24
      %v1246 = vpop.permute.xlu0 %1245
      %1247 = vrot.lane.b32.xlu0 %v481, 24
      %v1248 = vpop.permute.xlu0 %1247
      %1249 = vrot.lane.b32.xlu0 %v482, 24
      %v1250 = vpop.permute.xlu0 %1249
      %1251 = vrot.lane.b32.xlu0 %v484, 24
      %v1252 = vpop.permute.xlu0 %1251
      %1253 = vrot.lane.b32.xlu0 %v485, 24
      %v1254 = vpop.permute.xlu0 %1253
      %1255 = vrot.lane.b32.xlu0 %v487, 24
      %v1256 = vpop.permute.xlu0 %1255
      %1257 = vrot.lane.b32.xlu0 %v488, 24
      %v1258 = vpop.permute.xlu0 %1257
      %1259 = vrot.lane.b32.xlu0 %v490, 24
      %v1260 = vpop.permute.xlu0 %1259
      %1261 = vrot.lane.b32.xlu0 %v491, 24
      %v1262 = vpop.permute.xlu0 %1261
      %1263 = vrot.lane.b32.xlu0 %v493, 24
      %v1264 = vpop.permute.xlu0 %1263
      %1265 = vrot.lane.b32.xlu0 %v494, 24
      %v1266 = vpop.permute.xlu0 %1265
      %1267 = vrot.lane.b32.xlu0 %v496, 24
      %v1268 = vpop.permute.xlu0 %1267
      %1269 = vrot.lane.b32.xlu0 %v497, 24
      %v1270 = vpop.permute.xlu0 %1269
      %1271 = vrot.lane.b32.xlu0 %v499, 24
      %v1272 = vpop.permute.xlu0 %1271
      %1273 = vrot.lane.b32.xlu0 %v500, 24
      %v1274 = vpop.permute.xlu0 %1273
      %1275 = vrot.lane.b32.xlu0 %v502, 24
      %v1276 = vpop.permute.xlu0 %1275
      %1277 = vrot.lane.b32.xlu0 %v503, 24
      %v1278 = vpop.permute.xlu0 %1277
      %1279 = vrot.lane.b32.xlu0 %v505, 24
      %v1280 = vpop.permute.xlu0 %1279
      %1281 = vrot.lane.b32.xlu0 %v506, 24
      %v1282 = vpop.permute.xlu0 %1281
      %1283 = vrot.lane.b32.xlu0 %v508, 24
      %v1284 = vpop.permute.xlu0 %1283
      %1285 = vrot.lane.b32.xlu0 %v509, 24
      %v1286 = vpop.permute.xlu0 %1285
      %1287 = vrot.lane.b32.xlu0 %v511, 24
      %v1288 = vpop.permute.xlu0 %1287
      %1289 = vrot.lane.b32.xlu0 %v512, 24
      %v1290 = vpop.permute.xlu0 %1289
      %1291 = vrot.lane.b32.xlu0 %v514, 24
      %v1292 = vpop.permute.xlu0 %1291
      %1293 = vrot.lane.b32.xlu0 %v515, 24
      %v1294 = vpop.permute.xlu0 %1293
      %1295 = vrot.lane.b32.xlu0 %v517, 24
      %v1296 = vpop.permute.xlu0 %1295
      %1297 = vrot.lane.b32.xlu0 %v518, 24
      %v1298 = vpop.permute.xlu0 %1297
      %1299 = vrot.lane.b32.xlu0 %v520, 24
      %v1300 = vpop.permute.xlu0 %1299
      %1301 = vrot.lane.b32.xlu0 %v521, 24
      %v1302 = vpop.permute.xlu0 %1301
      %1335 = vrot.lane.b32.xlu0 %v584, 28
      %v1336 = vpop.permute.xlu0 %1335
      %1337 = vrot.lane.b32.xlu0 %v586, 28
      %v1338 = vpop.permute.xlu0 %1337
      %1339 = vrot.lane.b32.xlu0 %v589, 28
      %v1340 = vpop.permute.xlu0 %1339
      %1341 = vrot.lane.b32.xlu0 %v591, 28
      %v1342 = vpop.permute.xlu0 %1341
      %1343 = vrot.lane.b32.xlu0 %v594, 28
      %v1344 = vpop.permute.xlu0 %1343
      %1345 = vrot.lane.b32.xlu0 %v596, 28
      %v1346 = vpop.permute.xlu0 %1345
      %1347 = vrot.lane.b32.xlu0 %v599, 28
      %v1348 = vpop.permute.xlu0 %1347
      %1349 = vrot.lane.b32.xlu0 %v601, 28
      %v1350 = vpop.permute.xlu0 %1349
      %1351 = vrot.lane.b32.xlu0 %v604, 28
      %v1352 = vpop.permute.xlu0 %1351
      %1353 = vrot.lane.b32.xlu0 %v606, 28
      %v1354 = vpop.permute.xlu0 %1353
      %1355 = vrot.lane.b32.xlu0 %v609, 28
      %v1356 = vpop.permute.xlu0 %1355
      %1357 = vrot.lane.b32.xlu0 %v611, 28
      %v1358 = vpop.permute.xlu0 %1357
      %1359 = vrot.lane.b32.xlu0 %v614, 28
      %v1360 = vpop.permute.xlu0 %1359
      %1361 = vrot.lane.b32.xlu0 %v616, 28
      %v1362 = vpop.permute.xlu0 %1361
      %1363 = vrot.lane.b32.xlu0 %v619, 28
      %v1364 = vpop.permute.xlu0 %1363
      %1365 = vrot.lane.b32.xlu0 %v621, 28
      %v1366 = vpop.permute.xlu0 %1365
      %1367 = vrot.lane.b32.xlu0 %v624, 28
      %v1368 = vpop.permute.xlu0 %1367
      %1369 = vrot.lane.b32.xlu0 %v626, 28
      %v1370 = vpop.permute.xlu0 %1369
      %1371 = vrot.lane.b32.xlu0 %v629, 28
      %v1372 = vpop.permute.xlu0 %1371
      %1373 = vrot.lane.b32.xlu0 %v631, 28
      %v1374 = vpop.permute.xlu0 %1373
      %1375 = vrot.lane.b32.xlu0 %v634, 28
      %v1376 = vpop.permute.xlu0 %1375
      %1377 = vrot.lane.b32.xlu0 %v636, 28
      %v1378 = vpop.permute.xlu0 %1377
      %1379 = vrot.lane.b32.xlu0 %v639, 28
      %v1380 = vpop.permute.xlu0 %1379
      %1381 = vrot.lane.b32.xlu0 %v641, 28
      %v1382 = vpop.permute.xlu0 %1381
      %1383 = vrot.lane.b32.xlu0 %v644, 28
      %v1384 = vpop.permute.xlu0 %1383
      %1385 = vrot.lane.b32.xlu0 %v646, 28
      %v1386 = vpop.permute.xlu0 %1385
      %1387 = vrot.lane.b32.xlu0 %v649, 28
      %v1388 = vpop.permute.xlu0 %1387
      %1389 = vrot.lane.b32.xlu0 %v651, 28
      %v1390 = vpop.permute.xlu0 %1389
      %1391 = vrot.lane.b32.xlu0 %v738, 28
      %v1392 = vpop.permute.xlu0 %1391
      %1393 = vrot.lane.b32.xlu0 %v740, 28
      %v1394 = vpop.permute.xlu0 %1393
      %1395 = vrot.lane.b32.xlu0 %v751, 28
      %v1396 = vpop.permute.xlu0 %1395
      %1397 = vrot.lane.b32.xlu0 %v753, 28
      %v1398 = vpop.permute.xlu0 %1397
      %1431 = vrot.lane.b32.xlu0 %v665, 32
      %v1432 = vpop.permute.xlu0 %1431
      %1433 = vrot.lane.b32.xlu0 %v667, 32
      %v1434 = vpop.permute.xlu0 %1433
      %1435 = vrot.lane.b32.xlu0 %v670, 32
      %v1436 = vpop.permute.xlu0 %1435
      %1437 = vrot.lane.b32.xlu0 %v672, 32
      %v1438 = vpop.permute.xlu0 %1437
      %1439 = vrot.lane.b32.xlu0 %v675, 32
      %v1440 = vpop.permute.xlu0 %1439
      %1441 = vrot.lane.b32.xlu0 %v677, 32
      %v1442 = vpop.permute.xlu0 %1441
      %1443 = vrot.lane.b32.xlu0 %v680, 32
      %v1444 = vpop.permute.xlu0 %1443
      %1445 = vrot.lane.b32.xlu0 %v682, 32
      %v1446 = vpop.permute.xlu0 %1445
      %1447 = vrot.lane.b32.xlu0 %v685, 32
      %v1448 = vpop.permute.xlu0 %1447
      %1449 = vrot.lane.b32.xlu0 %v687, 32
      %v1450 = vpop.permute.xlu0 %1449
      %1451 = vrot.lane.b32.xlu0 %v690, 32
      %v1452 = vpop.permute.xlu0 %1451
      %1453 = vrot.lane.b32.xlu0 %v692, 32
      %v1454 = vpop.permute.xlu0 %1453
      %1455 = vrot.lane.b32.xlu0 %v695, 32
      %v1456 = vpop.permute.xlu0 %1455
      %1457 = vrot.lane.b32.xlu0 %v697, 32
      %v1458 = vpop.permute.xlu0 %1457
      %1459 = vrot.lane.b32.xlu0 %v700, 32
      %v1460 = vpop.permute.xlu0 %1459
      %1461 = vrot.lane.b32.xlu0 %v702, 32
      %v1462 = vpop.permute.xlu0 %1461
      %1463 = vrot.lane.b32.xlu0 %v705, 32
      %v1464 = vpop.permute.xlu0 %1463
      %1465 = vrot.lane.b32.xlu0 %v707, 32
      %v1466 = vpop.permute.xlu0 %1465
      %1467 = vrot.lane.b32.xlu0 %v710, 32
      %v1468 = vpop.permute.xlu0 %1467
      %1469 = vrot.lane.b32.xlu0 %v712, 32
      %v1470 = vpop.permute.xlu0 %1469
      %1471 = vrot.lane.b32.xlu0 %v715, 32
      %v1472 = vpop.permute.xlu0 %1471
      %1473 = vrot.lane.b32.xlu0 %v717, 32
      %v1474 = vpop.permute.xlu0 %1473
      %1475 = vrot.lane.b32.xlu0 %v720, 32
      %v1476 = vpop.permute.xlu0 %1475
      %1477 = vrot.lane.b32.xlu0 %v722, 32
      %v1478 = vpop.permute.xlu0 %1477
      %1479 = vrot.lane.b32.xlu0 %v725, 32
      %v1480 = vpop.permute.xlu0 %1479
      %1481 = vrot.lane.b32.xlu0 %v727, 32
      %v1482 = vpop.permute.xlu0 %1481
      %1483 = vrot.lane.b32.xlu0 %v730, 32
      %v1484 = vpop.permute.xlu0 %1483
      %1485 = vrot.lane.b32.xlu0 %v732, 32
      %v1486 = vpop.permute.xlu0 %1485
      %1487 = vrot.lane.b32.xlu0 %v743, 32
      %v1488 = vpop.permute.xlu0 %1487
      %1489 = vrot.lane.b32.xlu0 %v745, 32
      %v1490 = vpop.permute.xlu0 %1489
      %1491 = vrot.lane.b32.xlu0 %v756, 32
      %v1492 = vpop.permute.xlu0 %1491
      %1493 = vrot.lane.b32.xlu0 %v758, 32
      %v1494 = vpop.permute.xlu0 %1493
      %v1527 = vsel %vm312, %v469, %v760
      %v1528 = vsel %vm312, %v470, %v762
      %v1529 = vsel %vm312, %v472, %v764
      %v1530 = vsel %vm312, %v473, %v766
      %v1531 = vsel %vm312, %v475, %v768
      %v1532 = vsel %vm312, %v476, %v770
      %v1533 = vsel %vm312, %v478, %v772
      %v1534 = vsel %vm312, %v479, %v774
      %v1535 = vsel %vm312, %v481, %v776
      %v1536 = vsel %vm312, %v482, %v778
      %v1537 = vsel %vm312, %v484, %v780
      %v1538 = vsel %vm312, %v485, %v782
      %v1539 = vsel %vm312, %v487, %v784
      %v1540 = vsel %vm312, %v488, %v786
      %v1541 = vsel %vm312, %v490, %v788
      %v1542 = vsel %vm312, %v491, %v790
      %v1543 = vsel %vm312, %v493, %v792
      %v1544 = vsel %vm312, %v494, %v794
      %v1545 = vsel %vm312, %v496, %v796
      %v1546 = vsel %vm312, %v497, %v798
      %v1547 = vsel %vm312, %v499, %v800
      %v1548 = vsel %vm312, %v500, %v802
      %v1549 = vsel %vm312, %v502, %v804
      %v1550 = vsel %vm312, %v503, %v806
      %v1551 = vsel %vm312, %v505, %v808
      %v1552 = vsel %vm312, %v506, %v810
      %v1553 = vsel %vm312, %v508, %v812
      %v1554 = vsel %vm312, %v509, %v814
      %v1555 = vsel %vm312, %v511, %v816
      %v1556 = vsel %vm312, %v512, %v818
      %v1557 = vsel %vm312, %v514, %v820
      %v1558 = vsel %vm312, %v515, %v822
      %v1559 = vsel %vm358, %v1527, %v856
      %v1560 = vsel %vm358, %v1528, %v858
      %v1561 = vsel %vm358, %v1529, %v860
      %v1562 = vsel %vm358, %v1530, %v862
      %v1563 = vsel %vm358, %v1531, %v864
      %v1564 = vsel %vm358, %v1532, %v866
      %v1565 = vsel %vm358, %v1533, %v868
      %v1566 = vsel %vm358, %v1534, %v870
      %v1567 = vsel %vm358, %v1535, %v872
      %v1568 = vsel %vm358, %v1536, %v874
      %v1569 = vsel %vm358, %v1537, %v876
      %v1570 = vsel %vm358, %v1538, %v878
      %v1571 = vsel %vm358, %v1539, %v880
      %v1572 = vsel %vm358, %v1540, %v882
      %v1573 = vsel %vm358, %v1541, %v884
      %v1574 = vsel %vm358, %v1542, %v886
      %v1575 = vsel %vm358, %v1543, %v888
      %v1576 = vsel %vm358, %v1544, %v890
      %v1577 = vsel %vm358, %v1545, %v892
      %v1578 = vsel %vm358, %v1546, %v894
      %v1579 = vsel %vm358, %v1547, %v896
      %v1580 = vsel %vm358, %v1548, %v898
      %v1581 = vsel %vm358, %v1549, %v900
      %v1582 = vsel %vm358, %v1550, %v902
      %v1583 = vsel %vm358, %v1551, %v904
      %v1584 = vsel %vm358, %v1552, %v906
      %v1585 = vsel %vm358, %v1553, %v908
      %v1586 = vsel %vm358, %v1554, %v910
      %v1587 = vsel %vm358, %v1555, %v912
      %v1588 = vsel %vm358, %v1556, %v914
      %v1589 = vsel %vm358, %v1557, %v916
      %v1590 = vsel %vm358, %v1558, %v918
      %vm1591 = vcmask 97280
      %v1592 = vsel %vm1591, %v1559, %v952
      %v1593 = vsel %vm1591, %v1560, %v954
      %v1594 = vsel %vm1591, %v1561, %v956
      %v1595 = vsel %vm1591, %v1562, %v958
      %v1596 = vsel %vm1591, %v1563, %v960
      %v1597 = vsel %vm1591, %v1564, %v962
      %v1598 = vsel %vm1591, %v1565, %v964
      %v1599 = vsel %vm1591, %v1566, %v966
      %v1600 = vsel %vm1591, %v1567, %v968
      %v1601 = vsel %vm1591, %v1568, %v970
      %v1602 = vsel %vm1591, %v1569, %v972
      %v1603 = vsel %vm1591, %v1570, %v974
      %v1604 = vsel %vm1591, %v1571, %v976
      %v1605 = vsel %vm1591, %v1572, %v978
      %v1606 = vsel %vm1591, %v1573, %v980
      %v1607 = vsel %vm1591, %v1574, %v982
      %v1608 = vsel %vm1591, %v1575, %v984
      %v1609 = vsel %vm1591, %v1576, %v986
      %v1610 = vsel %vm1591, %v1577, %v988
      %v1611 = vsel %vm1591, %v1578, %v990
      %v1612 = vsel %vm1591, %v1579, %v992
      %v1613 = vsel %vm1591, %v1580, %v994
      %v1614 = vsel %vm1591, %v1581, %v996
      %v1615 = vsel %vm1591, %v1582, %v998
      %v1616 = vsel %vm1591, %v1583, %v1000
      %v1617 = vsel %vm1591, %v1584, %v1002
      %v1618 = vsel %vm1591, %v1585, %v1004
      %v1619 = vsel %vm1591, %v1586, %v1006
      %v1620 = vsel %vm1591, %v1587, %v1008
      %v1621 = vsel %vm1591, %v1588, %v1010
      %v1622 = vsel %vm1591, %v1589, %v1012
      %v1623 = vsel %vm1591, %v1590, %v1014
      %vm1624 = vcmask 130048
      %v1625 = vsel %vm1624, %v1592, %v1048
      %v1626 = vsel %vm1624, %v1593, %v1050
      %v1627 = vsel %vm1624, %v1594, %v1052
      %v1628 = vsel %vm1624, %v1595, %v1054
      %v1629 = vsel %vm1624, %v1596, %v1056
      %v1630 = vsel %vm1624, %v1597, %v1058
      %v1631 = vsel %vm1624, %v1598, %v1060
      %v1632 = vsel %vm1624, %v1599, %v1062
      %v1633 = vsel %vm1624, %v1600, %v1064
      %v1634 = vsel %vm1624, %v1601, %v1066
      %v1635 = vsel %vm1624, %v1602, %v1068
      %v1636 = vsel %vm1624, %v1603, %v1070
      %v1637 = vsel %vm1624, %v1604, %v1072
      %v1638 = vsel %vm1624, %v1605, %v1074
      %v1639 = vsel %vm1624, %v1606, %v1076
      %v1640 = vsel %vm1624, %v1607, %v1078
      %v1641 = vsel %vm1624, %v1608, %v1080
      %v1642 = vsel %vm1624, %v1609, %v1082
      %v1643 = vsel %vm1624, %v1610, %v1084
      %v1644 = vsel %vm1624, %v1611, %v1086
      %v1645 = vsel %vm1624, %v1612, %v1088
      %v1646 = vsel %vm1624, %v1613, %v1090
      %v1647 = vsel %vm1624, %v1614, %v1092
      %v1648 = vsel %vm1624, %v1615, %v1094
      %v1649 = vsel %vm1624, %v1616, %v1096
      %v1650 = vsel %vm1624, %v1617, %v1098
      %v1651 = vsel %vm1624, %v1618, %v1100
      %v1652 = vsel %vm1624, %v1619, %v1102
      %v1653 = vsel %vm1624, %v1620, %v1104
      %v1654 = vsel %vm1624, %v1621, %v1106
      %v1655 = vsel %vm1624, %v1622, %v1108
      %v1656 = vsel %vm1624, %v1623, %v1110
      %vm1657 = vcmask 162816
      %v1658 = vsel %vm1657, %v1625, %v1144
      %v1659 = vsel %vm1657, %v1626, %v1146
      %v1660 = vsel %vm1657, %v1627, %v1148
      %v1661 = vsel %vm1657, %v1628, %v1150
      %v1662 = vsel %vm1657, %v1629, %v1152
      %v1663 = vsel %vm1657, %v1630, %v1154
      %v1664 = vsel %vm1657, %v1631, %v1156
      %v1665 = vsel %vm1657, %v1632, %v1158
      %v1666 = vsel %vm1657, %v1633, %v1160
      %v1667 = vsel %vm1657, %v1634, %v1162
      %v1668 = vsel %vm1657, %v1635, %v1164
      %v1669 = vsel %vm1657, %v1636, %v1166
      %v1670 = vsel %vm1657, %v1637, %v1168
      %v1671 = vsel %vm1657, %v1638, %v1170
      %v1672 = vsel %vm1657, %v1639, %v1172
      %v1673 = vsel %vm1657, %v1640, %v1174
      %v1674 = vsel %vm1657, %v1641, %v1176
      %v1675 = vsel %vm1657, %v1642, %v1178
      %v1676 = vsel %vm1657, %v1643, %v1180
      %v1677 = vsel %vm1657, %v1644, %v1182
      %v1678 = vsel %vm1657, %v1645, %v1184
      %v1679 = vsel %vm1657, %v1646, %v1186
      %v1680 = vsel %vm1657, %v1647, %v1188
      %v1681 = vsel %vm1657, %v1648, %v1190
      %v1682 = vsel %vm1657, %v1649, %v1192
      %v1683 = vsel %vm1657, %v1650, %v1194
      %v1684 = vsel %vm1657, %v1651, %v1196
      %v1685 = vsel %vm1657, %v1652, %v1198
      %v1686 = vsel %vm1657, %v1653, %v1200
      %v1687 = vsel %vm1657, %v1654, %v1202
      %v1688 = vsel %vm1657, %v1655, %v1204
      %v1689 = vsel %vm1657, %v1656, %v1206
      %vm1690 = vcmask 195584
      %v1691 = vsel %vm1690, %v1658, %v1240
      %v1692 = vsel %vm1690, %v1659, %v1242
      %v1693 = vsel %vm1690, %v1660, %v1244
      %v1694 = vsel %vm1690, %v1661, %v1246
      %v1695 = vsel %vm1690, %v1662, %v1248
      %v1696 = vsel %vm1690, %v1663, %v1250
      %v1697 = vsel %vm1690, %v1664, %v1252
      %v1698 = vsel %vm1690, %v1665, %v1254
      %v1699 = vsel %vm1690, %v1666, %v1256
      %v1700 = vsel %vm1690, %v1667, %v1258
      %v1701 = vsel %vm1690, %v1668, %v1260
      %v1702 = vsel %vm1690, %v1669, %v1262
      %v1703 = vsel %vm1690, %v1670, %v1264
      %v1704 = vsel %vm1690, %v1671, %v1266
      %v1705 = vsel %vm1690, %v1672, %v1268
      %v1706 = vsel %vm1690, %v1673, %v1270
      %v1707 = vsel %vm1690, %v1674, %v1272
      %v1708 = vsel %vm1690, %v1675, %v1274
      %v1709 = vsel %vm1690, %v1676, %v1276
      %v1710 = vsel %vm1690, %v1677, %v1278
      %v1711 = vsel %vm1690, %v1678, %v1280
      %v1712 = vsel %vm1690, %v1679, %v1282
      %v1713 = vsel %vm1690, %v1680, %v1284
      %v1714 = vsel %vm1690, %v1681, %v1286
      %v1715 = vsel %vm1690, %v1682, %v1288
      %v1716 = vsel %vm1690, %v1683, %v1290
      %v1717 = vsel %vm1690, %v1684, %v1292
      %v1718 = vsel %vm1690, %v1685, %v1294
      %v1719 = vsel %vm1690, %v1686, %v1296
      %v1720 = vsel %vm1690, %v1687, %v1298
      %v1721 = vsel %vm1690, %v1688, %v1300
      %v1722 = vsel %vm1690, %v1689, %v1302
      %vm1723 = vcmask 228352
      %v1724 = vsel %vm1723, %v1691, %v1336
      %v1725 = vsel %vm1723, %v1692, %v1338
      %v1726 = vsel %vm1723, %v1693, %v1340
      %v1727 = vsel %vm1723, %v1694, %v1342
      %v1728 = vsel %vm1723, %v1695, %v1344
      %v1729 = vsel %vm1723, %v1696, %v1346
      %v1730 = vsel %vm1723, %v1697, %v1348
      %v1731 = vsel %vm1723, %v1698, %v1350
      %v1732 = vsel %vm1723, %v1699, %v1352
      %v1733 = vsel %vm1723, %v1700, %v1354
      %v1734 = vsel %vm1723, %v1701, %v1356
      %v1735 = vsel %vm1723, %v1702, %v1358
      %v1736 = vsel %vm1723, %v1703, %v1360
      %v1737 = vsel %vm1723, %v1704, %v1362
      %v1738 = vsel %vm1723, %v1705, %v1364
      %v1739 = vsel %vm1723, %v1706, %v1366
      %v1740 = vsel %vm1723, %v1707, %v1368
      %v1741 = vsel %vm1723, %v1708, %v1370
      %v1742 = vsel %vm1723, %v1709, %v1372
      %v1743 = vsel %vm1723, %v1710, %v1374
      %v1744 = vsel %vm1723, %v1711, %v1376
      %v1745 = vsel %vm1723, %v1712, %v1378
      %v1746 = vsel %vm1723, %v1713, %v1380
      %v1747 = vsel %vm1723, %v1714, %v1382
      %v1748 = vsel %vm1723, %v1715, %v1384
      %v1749 = vsel %vm1723, %v1716, %v1386
      %v1750 = vsel %vm1723, %v1717, %v1388
      %v1751 = vsel %vm1723, %v1718, %v1390
      %v1752 = vsel %vm1723, %v1719, %v1392
      %v1753 = vsel %vm1723, %v1720, %v1394
      %v1754 = vsel %vm1723, %v1721, %v1396
      %v1755 = vsel %vm1723, %v1722, %v1398
      %vm1756 = vcmask 261120
      %v1757 = vsel %vm1756, %v1724, %v1432
      %v1758 = vsel %vm1756, %v1725, %v1434
      %v1759 = vsel %vm1756, %v1726, %v1436
      %v1760 = vsel %vm1756, %v1727, %v1438
      %v1761 = vsel %vm1756, %v1728, %v1440
      %v1762 = vsel %vm1756, %v1729, %v1442
      %v1763 = vsel %vm1756, %v1730, %v1444
      %v1764 = vsel %vm1756, %v1731, %v1446
      %v1765 = vsel %vm1756, %v1732, %v1448
      %v1766 = vsel %vm1756, %v1733, %v1450
      %v1767 = vsel %vm1756, %v1734, %v1452
      %v1768 = vsel %vm1756, %v1735, %v1454
      %v1769 = vsel %vm1756, %v1736, %v1456
      %v1770 = vsel %vm1756, %v1737, %v1458
      %v1771 = vsel %vm1756, %v1738, %v1460
      %v1772 = vsel %vm1756, %v1739, %v1462
      %v1773 = vsel %vm1756, %v1740, %v1464
      %v1774 = vsel %vm1756, %v1741, %v1466
      %v1775 = vsel %vm1756, %v1742, %v1468
      %v1776 = vsel %vm1756, %v1743, %v1470
      %v1777 = vsel %vm1756, %v1744, %v1472
      %v1778 = vsel %vm1756, %v1745, %v1474
      %v1779 = vsel %vm1756, %v1746, %v1476
      %v1780 = vsel %vm1756, %v1747, %v1478
      %v1781 = vsel %vm1756, %v1748, %v1480
      %v1782 = vsel %vm1756, %v1749, %v1482
      %v1783 = vsel %vm1756, %v1750, %v1484
      %v1784 = vsel %vm1756, %v1751, %v1486
      %v1785 = vsel %vm1756, %v1752, %v1488
      %v1786 = vsel %vm1756, %v1753, %v1490
      %v1787 = vsel %vm1756, %v1754, %v1492
      %v1788 = vsel %vm1756, %v1755, %v1494
      %v1789 = vpack.c.bf16 %v1758, %v1757
      %v1790 = vpack.c.bf16 %v1760, %v1759
      %v1791 = vpack.c.bf16 %v1762, %v1761
      %v1792 = vpack.c.bf16 %v1764, %v1763
      %v1793 = vpack.c.bf16 %v1766, %v1765
      %v1794 = vpack.c.bf16 %v1768, %v1767
      %v1795 = vpack.c.bf16 %v1770, %v1769
      %v1796 = vpack.c.bf16 %v1772, %v1771
      %v1797 = vpack.c.bf16 %v1774, %v1773
      %v1798 = vpack.c.bf16 %v1776, %v1775
      %v1799 = vpack.c.bf16 %v1778, %v1777
      %v1800 = vpack.c.bf16 %v1780, %v1779
      %v1801 = vpack.c.bf16 %v1782, %v1781
      %v1802 = vpack.c.bf16 %v1784, %v1783
      %v1803 = vpack.c.bf16 %v1786, %v1785
      %v1804 = vpack.c.bf16 %v1788, %v1787
      %v1805 = vld [vmem:[%s1] sm:$0xf]
      %v1806 = vld [vmem:[%s1 + $0x4] sm:$0xf]
      %v1807 = vld [vmem:[%s1 + $0x8] sm:$0xf]
      %v1808 = vld [vmem:[%s1 + $0xc] sm:$0xf]
      %v1809 = vld [vmem:[%s1 + $0x10] sm:$0x3]
      %v1810 = vld [vmem:[%s2] sm:$0x1]
      %v1812 = vlaneseq
      %v1813 = vshrl.u32 %v1812, 7
      %v1814 = vsub.s32 0, %v1813
      %v1815 = vrot.slane %v1810, %v1814
      %v1822 = vunpack.c.l.b16 %v1805
      %v1823 = vunpack.c.l.b16 %v1806
      %v1824 = vunpack.c.l.b16 %v1807
      %v1825 = vunpack.c.l.b16 %v1808
      %v1826 = vunpack.c.l.b16 %v1809
      %v1827 = vpack.c.b16 %v1823, %v1822
      %v1828 = vpack.c.b16 %v1825, %v1824
      %v1829 = vpack.c.b16 %v1826, %v1826
      %vm1832 = vcmask 293888
      %v1834 = vsel %vm1832, %v1789, 0
      %v1837 = vsel %vm1832, %v1790, 0
      %v1840 = vsel %vm1832, %v1791, 0
      %v1843 = vsel %vm1832, %v1792, 0
      %v1846 = vsel %vm1832, %v1793, 0
      %v1849 = vsel %vm1832, %v1794, 0
      %v1852 = vsel %vm1832, %v1795, 0
      %v1855 = vsel %vm1832, %v1796, 0
      %v1858 = vsel %vm1832, %v1797, 0
      %v1861 = vsel %vm1832, %v1798, 0
      %v1864 = vsel %vm1832, %v1799, 0
      %v1867 = vsel %vm1832, %v1800, 0
      %v1870 = vsel %vm1832, %v1801, 0
      %v1873 = vsel %vm1832, %v1802, 0
      %v1876 = vsel %vm1832, %v1803, 0
      %v1879 = vsel %vm1832, %v1804, 0
      %vm1881 = vcmask 1041408
      %v1883 = vsel %vm1881, %v1829, 0
      %1885 = vmatprep.subr.bf16.mxu0 0
      %1886 = vmatpush1.bf16.msra.mxu0 %v1827
      %1887 = vmatprep.subr.bf16.mxu0 0
      %1888 = vmatpush1.bf16.msra.mxu0 %v1828
      %1889 = vmatprep.subr.bf16.mxu0 0
      %1890 = vmatpush1.bf16.msra.mxu0 %v1883
      %1891 = vmatprep.subr.bf16.mxu0 0
      %1892 = vmatpush1.bf16.msra.mxu0 0
      %1893 = vmatprep.subr.bf16.mxu0 0
      %1894 = vmatpush1.bf16.msra.mxu0 0
      %1895 = vmatprep.subr.bf16.mxu0 0
      %1896 = vmatpush1.bf16.msra.mxu0 0
      %1897 = vmatprep.subr.bf16.mxu0 0
      %1898 = vmatpush1.bf16.msra.mxu0 0
      %1899 = vmatprep.subr.bf16.mxu0 0
      %1900 = vmatpush1.bf16.msra.mxu0 0
      %1901 = vmatprep.subr.bf16.mxu0 0
      %1902 = vmatpush1.bf16.msra.mxu0 0
      %1903 = vmatprep.subr.bf16.mxu0 0
      %1904 = vmatpush1.bf16.msra.mxu0 0
      %1905 = vmatprep.subr.bf16.mxu0 0
      %1906 = vmatpush1.bf16.msra.mxu0 0
      %1907 = vmatprep.subr.bf16.mxu0 0
      %1908 = vmatpush1.bf16.msra.mxu0 0
      %1909 = vmatprep.subr.bf16.mxu0 0
      %1910 = vmatpush1.bf16.msra.mxu0 0
      %1911 = vmatprep.subr.bf16.mxu0 0
      %1912 = vmatpush1.bf16.msra.mxu0 0
      %1913 = vmatprep.subr.bf16.mxu0 0
      %1914 = vmatpush1.bf16.msra.mxu0 0
      %1915 = vmatprep.subr.bf16.mxu0 0
      %1916 = vmatpush1.bf16.msra.mxu0 0
      %1917 = vmatprep.mubr.bf16.mxu0 0
      %1918 = vmatmul.mubr.bf16.gmra.mrb[0].mxu0 %v1834
      %v1919 = vpop.f32.mrb[0].mxu0
      %v1920 = vadd.f32 %v1815, %v1919
      %v1921 = vpop.f32.mrb[0].mxu0
      %v1922 = vpop.f32.mrb[0].mxu0
      %v1923 = vadd.f32 %v1815, %v1922
      %v1924 = vpop.f32.mrb[0].mxu0
      %1925 = vmatprep.mubr.bf16.mxu0 0
      %1926 = vmatmul.mubr.bf16.gmra.mrb[0].mxu0 %v1837
      %v1927 = vpop.f32.mrb[0].mxu0
      %v1928 = vadd.f32 %v1815, %v1927
      %v1929 = vpop.f32.mrb[0].mxu0
      %v1930 = vpop.f32.mrb[0].mxu0
      %v1931 = vadd.f32 %v1815, %v1930
      %v1932 = vpop.f32.mrb[0].mxu0
      %1933 = vmatprep.mubr.bf16.mxu0 0
      %1934 = vmatmul.mubr.bf16.gmra.mrb[0].mxu0 %v1840
      %v1935 = vpop.f32.mrb[0].mxu0
      %v1936 = vadd.f32 %v1815, %v1935
      %v1937 = vpop.f32.mrb[0].mxu0
      %v1938 = vpop.f32.mrb[0].mxu0
      %v1939 = vadd.f32 %v1815, %v1938
      %v1940 = vpop.f32.mrb[0].mxu0
      %1941 = vmatprep.mubr.bf16.mxu0 0
      %1942 = vmatmul.mubr.bf16.gmra.mrb[0].mxu0 %v1843
      %v1943 = vpop.f32.mrb[0].mxu0
      %v1944 = vadd.f32 %v1815, %v1943
      %v1945 = vpop.f32.mrb[0].mxu0
      %v1946 = vpop.f32.mrb[0].mxu0
      %v1947 = vadd.f32 %v1815, %v1946
      %v1948 = vpop.f32.mrb[0].mxu0
      %1949 = vmatprep.mubr.bf16.mxu0 0
      %1950 = vmatmul.mubr.bf16.gmra.mrb[0].mxu0 %v1846
      %v1951 = vpop.f32.mrb[0].mxu0
      %v1952 = vadd.f32 %v1815, %v1951
      %v1953 = vpop.f32.mrb[0].mxu0
      %v1954 = vpop.f32.mrb[0].mxu0
      %v1955 = vadd.f32 %v1815, %v1954
      %v1956 = vpop.f32.mrb[0].mxu0
      %1957 = vmatprep.mubr.bf16.mxu0 0
      %1958 = vmatmul.mubr.bf16.gmra.mrb[0].mxu0 %v1849
      %v1959 = vpop.f32.mrb[0].mxu0
      %v1960 = vadd.f32 %v1815, %v1959
      %v1961 = vpop.f32.mrb[0].mxu0
      %v1962 = vpop.f32.mrb[0].mxu0
      %v1963 = vadd.f32 %v1815, %v1962
      %v1964 = vpop.f32.mrb[0].mxu0
      %1965 = vmatprep.mubr.bf16.mxu0 0
      %1966 = vmatmul.mubr.bf16.gmra.mrb[0].mxu0 %v1852
      %v1967 = vpop.f32.mrb[0].mxu0
      %v1968 = vadd.f32 %v1815, %v1967
      %v1969 = vpop.f32.mrb[0].mxu0
      %v1970 = vpop.f32.mrb[0].mxu0
      %v1971 = vadd.f32 %v1815, %v1970
      %v1972 = vpop.f32.mrb[0].mxu0
      %1973 = vmatprep.mubr.bf16.mxu0 0
      %1974 = vmatmul.mubr.bf16.gmra.mrb[0].mxu0 %v1855
      %v1975 = vpop.f32.mrb[0].mxu0
      %v1976 = vadd.f32 %v1815, %v1975
      %v1977 = vpop.f32.mrb[0].mxu0
      %v1978 = vpop.f32.mrb[0].mxu0
      %v1979 = vadd.f32 %v1815, %v1978
      %v1980 = vpop.f32.mrb[0].mxu0
      %1981 = vmatprep.mubr.bf16.mxu0 0
      %1982 = vmatmul.mubr.bf16.gmra.mrb[0].mxu0 %v1858
      %v1983 = vpop.f32.mrb[0].mxu0
      %v1984 = vadd.f32 %v1815, %v1983
      %v1985 = vpop.f32.mrb[0].mxu0
      %v1986 = vpop.f32.mrb[0].mxu0
      %v1987 = vadd.f32 %v1815, %v1986
      %v1988 = vpop.f32.mrb[0].mxu0
      %1989 = vmatprep.mubr.bf16.mxu0 0
      %1990 = vmatmul.mubr.bf16.gmra.mrb[0].mxu0 %v1861
      %v1991 = vpop.f32.mrb[0].mxu0
      %v1992 = vadd.f32 %v1815, %v1991
      %v1993 = vpop.f32.mrb[0].mxu0
      %v1994 = vpop.f32.mrb[0].mxu0
      %v1995 = vadd.f32 %v1815, %v1994
      %v1996 = vpop.f32.mrb[0].mxu0
      %1997 = vmatprep.mubr.bf16.mxu0 0
      %1998 = vmatmul.mubr.bf16.gmra.mrb[0].mxu0 %v1864
      %v1999 = vpop.f32.mrb[0].mxu0
      %v2000 = vadd.f32 %v1815, %v1999
      %v2001 = vpop.f32.mrb[0].mxu0
      %v2002 = vpop.f32.mrb[0].mxu0
      %v2003 = vadd.f32 %v1815, %v2002
      %v2004 = vpop.f32.mrb[0].mxu0
      %2005 = vmatprep.mubr.bf16.mxu0 0
      %2006 = vmatmul.mubr.bf16.gmra.mrb[0].mxu0 %v1867
      %v2007 = vpop.f32.mrb[0].mxu0
      %v2008 = vadd.f32 %v1815, %v2007
      %v2009 = vpop.f32.mrb[0].mxu0
      %v2010 = vpop.f32.mrb[0].mxu0
      %v2011 = vadd.f32 %v1815, %v2010
      %v2012 = vpop.f32.mrb[0].mxu0
      %2013 = vmatprep.mubr.bf16.mxu0 0
      %2014 = vmatmul.mubr.bf16.gmra.mrb[0].mxu0 %v1870
      %v2015 = vpop.f32.mrb[0].mxu0
      %v2016 = vadd.f32 %v1815, %v2015
      %v2017 = vpop.f32.mrb[0].mxu0
      %v2018 = vpop.f32.mrb[0].mxu0
      %v2019 = vadd.f32 %v1815, %v2018
      %v2020 = vpop.f32.mrb[0].mxu0
      %2021 = vmatprep.mubr.bf16.mxu0 0
      %2022 = vmatmul.mubr.bf16.gmra.mrb[0].mxu0 %v1873
      %v2023 = vpop.f32.mrb[0].mxu0
      %v2024 = vadd.f32 %v1815, %v2023
      %v2025 = vpop.f32.mrb[0].mxu0
      %v2026 = vpop.f32.mrb[0].mxu0
      %v2027 = vadd.f32 %v1815, %v2026
      %v2028 = vpop.f32.mrb[0].mxu0
      %2029 = vmatprep.mubr.bf16.mxu0 0
      %2030 = vmatmul.mubr.bf16.gmra.mrb[0].mxu0 %v1876
      %v2031 = vpop.f32.mrb[0].mxu0
      %v2032 = vadd.f32 %v1815, %v2031
      %v2033 = vpop.f32.mrb[0].mxu0
      %v2034 = vpop.f32.mrb[0].mxu0
      %v2035 = vadd.f32 %v1815, %v2034
      %v2036 = vpop.f32.mrb[0].mxu0
      %2037 = vmatprep.mubr.bf16.mxu0 0
      %2038 = vmatmul.mubr.bf16.gmra.mrb[0].mxu0 %v1879
      %v2039 = vpop.f32.mrb[0].mxu0
      %v2040 = vadd.f32 %v1815, %v2039
      %v2041 = vpop.f32.mrb[0].mxu0
      %v2042 = vpop.f32.mrb[0].mxu0
      %v2043 = vadd.f32 %v1815, %v2042
      %v2044 = vpop.f32.mrb[0].mxu0
      %2045 = vdwg.mxu0
      %v2046 = vmax.f32 %v1920, 0.0
      %v2047 = vmax.f32 %v1923, 0.0
      %v2048 = vmax.f32 %v1928, 0.0
      %v2049 = vmax.f32 %v1931, 0.0
      %v2050 = vmax.f32 %v1936, 0.0
      %v2051 = vmax.f32 %v1939, 0.0
      %v2052 = vmax.f32 %v1944, 0.0
      %v2053 = vmax.f32 %v1947, 0.0
      %v2054 = vmax.f32 %v1952, 0.0
      %v2055 = vmax.f32 %v1955, 0.0
      %v2056 = vmax.f32 %v1960, 0.0
      %v2057 = vmax.f32 %v1963, 0.0
      %v2058 = vmax.f32 %v1968, 0.0
      %v2059 = vmax.f32 %v1971, 0.0
      %v2060 = vmax.f32 %v1976, 0.0
      %v2061 = vmax.f32 %v1979, 0.0
      %v2062 = vmax.f32 %v1984, 0.0
      %v2063 = vmax.f32 %v1987, 0.0
      %v2064 = vmax.f32 %v1992, 0.0
      %v2065 = vmax.f32 %v1995, 0.0
      %v2066 = vmax.f32 %v2000, 0.0
      %v2067 = vmax.f32 %v2003, 0.0
      %v2068 = vmax.f32 %v2008, 0.0
      %v2069 = vmax.f32 %v2011, 0.0
      %v2070 = vmax.f32 %v2016, 0.0
      %v2071 = vmax.f32 %v2019, 0.0
      %v2072 = vmax.f32 %v2024, 0.0
      %v2073 = vmax.f32 %v2027, 0.0
      %v2074 = vmax.f32 %v2032, 0.0
      %v2075 = vmax.f32 %v2035, 0.0
      %v2076 = vmax.f32 %v2040, 0.0
      %v2077 = vmax.f32 %v2043, 0.0
      %s2078 = scalar_lea.vmem [#allocation3], 24
      %2079 = vst.msk [vmem:[%s2078 + $0x1] sm:$0xff] %vm358, %v2046
      %2080 = vst.msk [vmem:[%s2078 + $0x9] sm:$0xff] %vm358, %v2047
      %2081 = vst.msk [vmem:[%s2078 + $0x19] sm:$0xff] %vm358, %v2048
      %2082 = vst.msk [vmem:[%s2078 + $0x21] sm:$0xff] %vm358, %v2049
      %2083 = vst.msk [vmem:[%s2078 + $0x31] sm:$0xff] %vm358, %v2050
      %2084 = vst.msk [vmem:[%s2078 + $0x39] sm:$0xff] %vm358, %v2051
      %2085 = vst.msk [vmem:[%s2078 + $0x49] sm:$0xff] %vm358, %v2052
      %2086 = vst.msk [vmem:[%s2078 + $0x51] sm:$0xff] %vm358, %v2053
      %2087 = vst.msk [vmem:[%s2078 + $0x61] sm:$0xff] %vm358, %v2054
      %2088 = vst.msk [vmem:[%s2078 + $0x69] sm:$0xff] %vm358, %v2055
      %2089 = vst.msk [vmem:[%s2078 + $0x79] sm:$0xff] %vm358, %v2056
      %2090 = vst.msk [vmem:[%s2078 + $0x81] sm:$0xff] %vm358, %v2057
      %2091 = vst.msk [vmem:[%s2078 + $0x91] sm:$0xff] %vm358, %v2058
      %2092 = vst.msk [vmem:[%s2078 + $0x99] sm:$0xff] %vm358, %v2059
      %2093 = vst.msk [vmem:[%s2078 + $0xa9] sm:$0xff] %vm358, %v2060
      %2094 = vst.msk [vmem:[%s2078 + $0xb1] sm:$0xff] %vm358, %v2061
      %2095 = vst.msk [vmem:[%s2078 + $0xc1] sm:$0xff] %vm358, %v2062
      %2096 = vst.msk [vmem:[%s2078 + $0xc9] sm:$0xff] %vm358, %v2063
      %2097 = vst.msk [vmem:[%s2078 + $0xd9] sm:$0xff] %vm358, %v2064
      %2098 = vst.msk [vmem:[%s2078 + $0xe1] sm:$0xff] %vm358, %v2065
      %2099 = vst.msk [vmem:[%s2078 + $0xf1] sm:$0xff] %vm358, %v2066
      %2100 = vst.msk [vmem:[%s2078 + $0xf9] sm:$0xff] %vm358, %v2067
      %2101 = vst.msk [vmem:[%s2078 + $0x109] sm:$0xff] %vm358, %v2068
      %2102 = vst.msk [vmem:[%s2078 + $0x111] sm:$0xff] %vm358, %v2069
      %2103 = vst.msk [vmem:[%s2078 + $0x121] sm:$0xff] %vm358, %v2070
      %2104 = vst.msk [vmem:[%s2078 + $0x129] sm:$0xff] %vm358, %v2071
      %2105 = vst.msk [vmem:[%s2078 + $0x139] sm:$0xff] %vm358, %v2072
      %2106 = vst.msk [vmem:[%s2078 + $0x141] sm:$0xff] %vm358, %v2073
      %2107 = vst.msk [vmem:[%s2078 + $0x151] sm:$0xff] %vm358, %v2074
      %2108 = vst.msk [vmem:[%s2078 + $0x159] sm:$0xff] %vm358, %v2075
      %2109 = vst.msk [vmem:[%s2078 + $0x169] sm:$0xff] %vm358, %v2076
      %2110 = vst.msk [vmem:[%s2078 + $0x171] sm:$0xff] %vm358, %v2077
      %v2111 = vld [vmem:[#allocation3] sm:$0xff]
      %v2112 = vld [vmem:[#allocation3 + $0x8] sm:$0xff]
      %v2113 = vld [vmem:[#allocation3 + $0x10] sm:$0x3]
      %v2114 = vld [vmem:[#allocation3 + $0x18] sm:$0xff]
      %v2115 = vld [vmem:[#allocation3 + $0x20] sm:$0xff]
      %v2116 = vld [vmem:[#allocation3 + $0x28] sm:$0x3]
      %v2117 = vld [vmem:[#allocation3 + $0x30] sm:$0xff]
      %v2118 = vld [vmem:[#allocation3 + $0x38] sm:$0xff]
      %v2119 = vld [vmem:[#allocation3 + $0x40] sm:$0x3]
      %v2120 = vld [vmem:[#allocation3 + $0x48] sm:$0xff]
      %v2121 = vld [vmem:[#allocation3 + $0x50] sm:$0xff]
      %v2122 = vld [vmem:[#allocation3 + $0x58] sm:$0x3]
      %v2123 = vld [vmem:[#allocation3 + $0x60] sm:$0xff]
      %v2124 = vld [vmem:[#allocation3 + $0x68] sm:$0xff]
      %v2125 = vld [vmem:[#allocation3 + $0x70] sm:$0x3]
      %v2126 = vld [vmem:[#allocation3 + $0x78] sm:$0xff]
      %v2127 = vld [vmem:[#allocation3 + $0x80] sm:$0xff]
      %v2128 = vld [vmem:[#allocation3 + $0x88] sm:$0x3]
      %v2129 = vld [vmem:[#allocation3 + $0x90] sm:$0xff]
      %v2130 = vld [vmem:[#allocation3 + $0x98] sm:$0xff]
      %v2131 = vld [vmem:[#allocation3 + $0xa0] sm:$0x3]
      %v2132 = vld [vmem:[#allocation3 + $0xa8] sm:$0xff]
      %v2133 = vld [vmem:[#allocation3 + $0xb0] sm:$0xff]
      %v2134 = vld [vmem:[#allocation3 + $0xb8] sm:$0x3]
      %v2135 = vld [vmem:[#allocation3 + $0xc0] sm:$0xff]
      %v2136 = vld [vmem:[#allocation3 + $0xc8] sm:$0xff]
      %v2137 = vld [vmem:[#allocation3 + $0xd0] sm:$0x3]
      %v2138 = vld [vmem:[#allocation3 + $0xd8] sm:$0xff]
      %v2139 = vld [vmem:[#allocation3 + $0xe0] sm:$0xff]
      %v2140 = vld [vmem:[#allocation3 + $0xe8] sm:$0x3]
      %v2141 = vld [vmem:[#allocation3 + $0xf0] sm:$0xff]
      %v2142 = vld [vmem:[#allocation3 + $0xf8] sm:$0xff]
      %v2143 = vld [vmem:[#allocation3 + $0x100] sm:$0x3]
      %v2144 = vld [vmem:[#allocation3 + $0x108] sm:$0xff]
      %v2145 = vld [vmem:[#allocation3 + $0x110] sm:$0xff]
      %v2146 = vld [vmem:[#allocation3 + $0x118] sm:$0x3]
      %v2147 = vld [vmem:[#allocation3 + $0x120] sm:$0xff]
      %v2148 = vld [vmem:[#allocation3 + $0x128] sm:$0xff]
      %v2149 = vld [vmem:[#allocation3 + $0x130] sm:$0x3]
      %v2150 = vld [vmem:[#allocation3 + $0x138] sm:$0xff]
      %v2151 = vld [vmem:[#allocation3 + $0x140] sm:$0xff]
      %v2152 = vld [vmem:[#allocation3 + $0x148] sm:$0x3]
      %v2153 = vld [vmem:[#allocation3 + $0x150] sm:$0xff]
      %v2154 = vld [vmem:[#allocation3 + $0x158] sm:$0xff]
      %v2155 = vld [vmem:[#allocation3 + $0x160] sm:$0x3]
      %v2156 = vld [vmem:[#allocation3 + $0x168] sm:$0xff]
      %v2157 = vld [vmem:[#allocation3 + $0x170] sm:$0xff]
      %v2158 = vld [vmem:[#allocation3 + $0x178] sm:$0x3]
      %v2159 = vld [vmem:[#allocation3 + $0x180] sm:$0xff]
      %v2160 = vld [vmem:[#allocation3 + $0x188] sm:$0xff]
      %v2161 = vld [vmem:[#allocation3 + $0x190] sm:$0x3]
      %v2162 = vld [vmem:[#allocation3 + $0x198] sm:$0xff]
      %v2163 = vld [vmem:[#allocation3 + $0x1a0] sm:$0xff]
      %v2164 = vld [vmem:[#allocation3 + $0x1a8] sm:$0x3]
      %v2213 = vrot.slane %v2111, 1
      %v2214 = vrot.slane %v2112, 1
      %v2215 = vsel %vm571, %v2213, %v2214
      %v2216 = vrot.slane %v2113, 1
      %v2217 = vsel %vm571, %v2214, %v2216
      %v2218 = vrot.slane %v2114, 1
      %v2219 = vrot.slane %v2115, 1
      %v2220 = vsel %vm571, %v2218, %v2219
      %v2221 = vrot.slane %v2116, 1
      %v2222 = vsel %vm571, %v2219, %v2221
      %v2223 = vrot.slane %v2117, 1
      %v2224 = vrot.slane %v2118, 1
      %v2225 = vsel %vm571, %v2223, %v2224
      %v2226 = vrot.slane %v2119, 1
      %v2227 = vsel %vm571, %v2224, %v2226
      %v2228 = vrot.slane %v2120, 1
      %v2229 = vrot.slane %v2121, 1
      %v2230 = vsel %vm571, %v2228, %v2229
      %v2231 = vrot.slane %v2122, 1
      %v2232 = vsel %vm571, %v2229, %v2231
      %v2233 = vrot.slane %v2123, 1
      %v2234 = vrot.slane %v2124, 1
      %v2235 = vsel %vm571, %v2233, %v2234
      %v2236 = vrot.slane %v2125, 1
      %v2237 = vsel %vm571, %v2234, %v2236
      %v2238 = vrot.slane %v2126, 1
      %v2239 = vrot.slane %v2127, 1
      %v2240 = vsel %vm571, %v2238, %v2239
      %v2241 = vrot.slane %v2128, 1
      %v2242 = vsel %vm571, %v2239, %v2241
      %v2243 = vrot.slane %v2129, 1
      %v2244 = vrot.slane %v2130, 1
      %v2245 = vsel %vm571, %v2243, %v2244
      %v2246 = vrot.slane %v2131, 1
      %v2247 = vsel %vm571, %v2244, %v2246
      %v2248 = vrot.slane %v2132, 1
      %v2249 = vrot.slane %v2133, 1
      %v2250 = vsel %vm571, %v2248, %v2249
      %v2251 = vrot.slane %v2134, 1
      %v2252 = vsel %vm571, %v2249, %v2251
      %v2253 = vrot.slane %v2135, 1
      %v2254 = vrot.slane %v2136, 1
      %v2255 = vsel %vm571, %v2253, %v2254
      %v2256 = vrot.slane %v2137, 1
      %v2257 = vsel %vm571, %v2254, %v2256
      %v2258 = vrot.slane %v2138, 1
      %v2259 = vrot.slane %v2139, 1
      %v2260 = vsel %vm571, %v2258, %v2259
      %v2261 = vrot.slane %v2140, 1
      %v2262 = vsel %vm571, %v2259, %v2261
      %v2263 = vrot.slane %v2141, 1
      %v2264 = vrot.slane %v2142, 1
      %v2265 = vsel %vm571, %v2263, %v2264
      %v2266 = vrot.slane %v2143, 1
      %v2267 = vsel %vm571, %v2264, %v2266
      %v2268 = vrot.slane %v2144, 1
      %v2269 = vrot.slane %v2145, 1
      %v2270 = vsel %vm571, %v2268, %v2269
      %v2271 = vrot.slane %v2146, 1
      %v2272 = vsel %vm571, %v2269, %v2271
      %v2273 = vrot.slane %v2147, 1
      %v2274 = vrot.slane %v2148, 1
      %v2275 = vsel %vm571, %v2273, %v2274
      %v2276 = vrot.slane %v2149, 1
      %v2277 = vsel %vm571, %v2274, %v2276
      %v2278 = vrot.slane %v2150, 1
      %v2279 = vrot.slane %v2151, 1
      %v2280 = vsel %vm571, %v2278, %v2279
      %v2281 = vrot.slane %v2152, 1
      %v2282 = vsel %vm571, %v2279, %v2281
      %v2283 = vrot.slane %v2153, 1
      %v2284 = vrot.slane %v2154, 1
      %v2285 = vsel %vm571, %v2283, %v2284
      %v2286 = vrot.slane %v2155, 1
      %v2287 = vsel %vm571, %v2284, %v2286
      %v2288 = vrot.slane %v2156, 1
      %v2289 = vrot.slane %v2157, 1
      %v2290 = vsel %vm571, %v2288, %v2289
      %v2291 = vrot.slane %v2158, 1
      %v2292 = vsel %vm571, %v2289, %v2291
      %v2293 = vrot.slane %v2111, 2
      %v2294 = vrot.slane %v2112, 2
      %v2295 = vsel %vm652, %v2293, %v2294
      %v2296 = vrot.slane %v2113, 2
      %v2297 = vsel %vm652, %v2294, %v2296
      %v2298 = vrot.slane %v2114, 2
      %v2299 = vrot.slane %v2115, 2
      %v2300 = vsel %vm652, %v2298, %v2299
      %v2301 = vrot.slane %v2116, 2
      %v2302 = vsel %vm652, %v2299, %v2301
      %v2303 = vrot.slane %v2117, 2
      %v2304 = vrot.slane %v2118, 2
      %v2305 = vsel %vm652, %v2303, %v2304
      %v2306 = vrot.slane %v2119, 2
      %v2307 = vsel %vm652, %v2304, %v2306
      %v2308 = vrot.slane %v2120, 2
      %v2309 = vrot.slane %v2121, 2
      %v2310 = vsel %vm652, %v2308, %v2309
      %v2311 = vrot.slane %v2122, 2
      %v2312 = vsel %vm652, %v2309, %v2311
      %v2313 = vrot.slane %v2123, 2
      %v2314 = vrot.slane %v2124, 2
      %v2315 = vsel %vm652, %v2313, %v2314
      %v2316 = vrot.slane %v2125, 2
      %v2317 = vsel %vm652, %v2314, %v2316
      %v2318 = vrot.slane %v2126, 2
      %v2319 = vrot.slane %v2127, 2
      %v2320 = vsel %vm652, %v2318, %v2319
      %v2321 = vrot.slane %v2128, 2
      %v2322 = vsel %vm652, %v2319, %v2321
      %v2323 = vrot.slane %v2129, 2
      %v2324 = vrot.slane %v2130, 2
      %v2325 = vsel %vm652, %v2323, %v2324
      %v2326 = vrot.slane %v2131, 2
      %v2327 = vsel %vm652, %v2324, %v2326
      %v2328 = vrot.slane %v2132, 2
      %v2329 = vrot.slane %v2133, 2
      %v2330 = vsel %vm652, %v2328, %v2329
      %v2331 = vrot.slane %v2134, 2
      %v2332 = vsel %vm652, %v2329, %v2331
      %v2333 = vrot.slane %v2135, 2
      %v2334 = vrot.slane %v2136, 2
      %v2335 = vsel %vm652, %v2333, %v2334
      %v2336 = vrot.slane %v2137, 2
      %v2337 = vsel %vm652, %v2334, %v2336
      %v2338 = vrot.slane %v2138, 2
      %v2339 = vrot.slane %v2139, 2
      %v2340 = vsel %vm652, %v2338, %v2339
      %v2341 = vrot.slane %v2140, 2
      %v2342 = vsel %vm652, %v2339, %v2341
      %v2343 = vrot.slane %v2141, 2
      %v2344 = vrot.slane %v2142, 2
      %v2345 = vsel %vm652, %v2343, %v2344
      %v2346 = vrot.slane %v2143, 2
      %v2347 = vsel %vm652, %v2344, %v2346
      %v2348 = vrot.slane %v2144, 2
      %v2349 = vrot.slane %v2145, 2
      %v2350 = vsel %vm652, %v2348, %v2349
      %v2351 = vrot.slane %v2146, 2
      %v2352 = vsel %vm652, %v2349, %v2351
      %v2353 = vrot.slane %v2147, 2
      %v2354 = vrot.slane %v2148, 2
      %v2355 = vsel %vm652, %v2353, %v2354
      %v2356 = vrot.slane %v2149, 2
      %v2357 = vsel %vm652, %v2354, %v2356
      %v2358 = vrot.slane %v2150, 2
      %v2359 = vrot.slane %v2151, 2
      %v2360 = vsel %vm652, %v2358, %v2359
      %v2361 = vrot.slane %v2152, 2
      %v2362 = vsel %vm652, %v2359, %v2361
      %v2363 = vrot.slane %v2153, 2
      %v2364 = vrot.slane %v2154, 2
      %v2365 = vsel %vm652, %v2363, %v2364
      %v2366 = vrot.slane %v2155, 2
      %v2367 = vsel %vm652, %v2364, %v2366
      %v2368 = vrot.slane %v2156, 2
      %v2369 = vrot.slane %v2157, 2
      %v2370 = vsel %vm652, %v2368, %v2369
      %v2371 = vrot.slane %v2158, 2
      %v2372 = vsel %vm652, %v2369, %v2371
      %v2376 = vrot.slane %v2159, 1
      %v2377 = vrot.slane %v2160, 1
      %v2378 = vsel %vm571, %v2376, %v2377
      %v2379 = vrot.slane %v2161, 1
      %v2380 = vsel %vm571, %v2377, %v2379
      %v2381 = vrot.slane %v2159, 2
      %v2382 = vrot.slane %v2160, 2
      %v2383 = vsel %vm652, %v2381, %v2382
      %v2384 = vrot.slane %v2161, 2
      %v2385 = vsel %vm652, %v2382, %v2384
      %v2389 = vrot.slane %v2162, 1
      %v2390 = vrot.slane %v2163, 1
      %v2391 = vsel %vm571, %v2389, %v2390
      %v2392 = vrot.slane %v2164, 1
      %v2393 = vsel %vm571, %v2390, %v2392
      %v2394 = vrot.slane %v2162, 2
      %v2395 = vrot.slane %v2163, 2
      %v2396 = vsel %vm652, %v2394, %v2395
      %v2397 = vrot.slane %v2164, 2
      %v2398 = vsel %vm652, %v2395, %v2397
      %2399 = vrot.lane.b32.xlu0 %v2215, 8
      %v2400 = vpop.permute.xlu0 %2399
      %2401 = vrot.lane.b32.xlu0 %v2217, 8
      %v2402 = vpop.permute.xlu0 %2401
      %2403 = vrot.lane.b32.xlu0 %v2220, 8
      %v2404 = vpop.permute.xlu0 %2403
      %2405 = vrot.lane.b32.xlu0 %v2222, 8
      %v2406 = vpop.permute.xlu0 %2405
      %2407 = vrot.lane.b32.xlu0 %v2225, 8
      %v2408 = vpop.permute.xlu0 %2407
      %2409 = vrot.lane.b32.xlu0 %v2227, 8
      %v2410 = vpop.permute.xlu0 %2409
      %2411 = vrot.lane.b32.xlu0 %v2230, 8
      %v2412 = vpop.permute.xlu0 %2411
      %2413 = vrot.lane.b32.xlu0 %v2232, 8
      %v2414 = vpop.permute.xlu0 %2413
      %2415 = vrot.lane.b32.xlu0 %v2235, 8
      %v2416 = vpop.permute.xlu0 %2415
      %2417 = vrot.lane.b32.xlu0 %v2237, 8
      %v2418 = vpop.permute.xlu0 %2417
      %2419 = vrot.lane.b32.xlu0 %v2240, 8
      %v2420 = vpop.permute.xlu0 %2419
      %2421 = vrot.lane.b32.xlu0 %v2242, 8
      %v2422 = vpop.permute.xlu0 %2421
      %2423 = vrot.lane.b32.xlu0 %v2245, 8
      %v2424 = vpop.permute.xlu0 %2423
      %2425 = vrot.lane.b32.xlu0 %v2247, 8
      %v2426 = vpop.permute.xlu0 %2425
      %2427 = vrot.lane.b32.xlu0 %v2250, 8
      %v2428 = vpop.permute.xlu0 %2427
      %2429 = vrot.lane.b32.xlu0 %v2252, 8
      %v2430 = vpop.permute.xlu0 %2429
      %2431 = vrot.lane.b32.xlu0 %v2255, 8
      %v2432 = vpop.permute.xlu0 %2431
      %2433 = vrot.lane.b32.xlu0 %v2257, 8
      %v2434 = vpop.permute.xlu0 %2433
      %2435 = vrot.lane.b32.xlu0 %v2260, 8
      %v2436 = vpop.permute.xlu0 %2435
      %2437 = vrot.lane.b32.xlu0 %v2262, 8
      %v2438 = vpop.permute.xlu0 %2437
      %2439 = vrot.lane.b32.xlu0 %v2265, 8
      %v2440 = vpop.permute.xlu0 %2439
      %2441 = vrot.lane.b32.xlu0 %v2267, 8
      %v2442 = vpop.permute.xlu0 %2441
      %2443 = vrot.lane.b32.xlu0 %v2270, 8
      %v2444 = vpop.permute.xlu0 %2443
      %2445 = vrot.lane.b32.xlu0 %v2272, 8
      %v2446 = vpop.permute.xlu0 %2445
      %2447 = vrot.lane.b32.xlu0 %v2275, 8
      %v2448 = vpop.permute.xlu0 %2447
      %2449 = vrot.lane.b32.xlu0 %v2277, 8
      %v2450 = vpop.permute.xlu0 %2449
      %2451 = vrot.lane.b32.xlu0 %v2280, 8
      %v2452 = vpop.permute.xlu0 %2451
      %2453 = vrot.lane.b32.xlu0 %v2282, 8
      %v2454 = vpop.permute.xlu0 %2453
      %2455 = vrot.lane.b32.xlu0 %v2285, 8
      %v2456 = vpop.permute.xlu0 %2455
      %2457 = vrot.lane.b32.xlu0 %v2287, 8
      %v2458 = vpop.permute.xlu0 %2457
      %2459 = vrot.lane.b32.xlu0 %v2290, 8
      %v2460 = vpop.permute.xlu0 %2459
      %2461 = vrot.lane.b32.xlu0 %v2292, 8
      %v2462 = vpop.permute.xlu0 %2461
      %2495 = vrot.lane.b32.xlu0 %v2295, 16
      %v2496 = vpop.permute.xlu0 %2495
      %2497 = vrot.lane.b32.xlu0 %v2297, 16
      %v2498 = vpop.permute.xlu0 %2497
      %2499 = vrot.lane.b32.xlu0 %v2300, 16
      %v2500 = vpop.permute.xlu0 %2499
      %2501 = vrot.lane.b32.xlu0 %v2302, 16
      %v2502 = vpop.permute.xlu0 %2501
      %2503 = vrot.lane.b32.xlu0 %v2305, 16
      %v2504 = vpop.permute.xlu0 %2503
      %2505 = vrot.lane.b32.xlu0 %v2307, 16
      %v2506 = vpop.permute.xlu0 %2505
      %2507 = vrot.lane.b32.xlu0 %v2310, 16
      %v2508 = vpop.permute.xlu0 %2507
      %2509 = vrot.lane.b32.xlu0 %v2312, 16
      %v2510 = vpop.permute.xlu0 %2509
      %2511 = vrot.lane.b32.xlu0 %v2315, 16
      %v2512 = vpop.permute.xlu0 %2511
      %2513 = vrot.lane.b32.xlu0 %v2317, 16
      %v2514 = vpop.permute.xlu0 %2513
      %2515 = vrot.lane.b32.xlu0 %v2320, 16
      %v2516 = vpop.permute.xlu0 %2515
      %2517 = vrot.lane.b32.xlu0 %v2322, 16
      %v2518 = vpop.permute.xlu0 %2517
      %2519 = vrot.lane.b32.xlu0 %v2325, 16
      %v2520 = vpop.permute.xlu0 %2519
      %2521 = vrot.lane.b32.xlu0 %v2327, 16
      %v2522 = vpop.permute.xlu0 %2521
      %2523 = vrot.lane.b32.xlu0 %v2330, 16
      %v2524 = vpop.permute.xlu0 %2523
      %2525 = vrot.lane.b32.xlu0 %v2332, 16
      %v2526 = vpop.permute.xlu0 %2525
      %2527 = vrot.lane.b32.xlu0 %v2335, 16
      %v2528 = vpop.permute.xlu0 %2527
      %2529 = vrot.lane.b32.xlu0 %v2337, 16
      %v2530 = vpop.permute.xlu0 %2529
      %2531 = vrot.lane.b32.xlu0 %v2340, 16
      %v2532 = vpop.permute.xlu0 %2531
      %2533 = vrot.lane.b32.xlu0 %v2342, 16
      %v2534 = vpop.permute.xlu0 %2533
      %2535 = vrot.lane.b32.xlu0 %v2345, 16
      %v2536 = vpop.permute.xlu0 %2535
      %2537 = vrot.lane.b32.xlu0 %v2347, 16
      %v2538 = vpop.permute.xlu0 %2537
      %2539 = vrot.lane.b32.xlu0 %v2350, 16
      %v2540 = vpop.permute.xlu0 %2539
      %2541 = vrot.lane.b32.xlu0 %v2352, 16
      %v2542 = vpop.permute.xlu0 %2541
      %2543 = vrot.lane.b32.xlu0 %v2355, 16
      %v2544 = vpop.permute.xlu0 %2543
      %2545 = vrot.lane.b32.xlu0 %v2357, 16
      %v2546 = vpop.permute.xlu0 %2545
      %2547 = vrot.lane.b32.xlu0 %v2360, 16
      %v2548 = vpop.permute.xlu0 %2547
      %2549 = vrot.lane.b32.xlu0 %v2362, 16
      %v2550 = vpop.permute.xlu0 %2549
      %2551 = vrot.lane.b32.xlu0 %v2365, 16
      %v2552 = vpop.permute.xlu0 %2551
      %2553 = vrot.lane.b32.xlu0 %v2367, 16
      %v2554 = vpop.permute.xlu0 %2553
      %2555 = vrot.lane.b32.xlu0 %v2370, 16
      %v2556 = vpop.permute.xlu0 %2555
      %2557 = vrot.lane.b32.xlu0 %v2372, 16
      %v2558 = vpop.permute.xlu0 %2557
      %2591 = vrot.lane.b32.xlu0 %v2114, 24
      %v2592 = vpop.permute.xlu0 %2591
      %2593 = vrot.lane.b32.xlu0 %v2115, 24
      %v2594 = vpop.permute.xlu0 %2593
      %2595 = vrot.lane.b32.xlu0 %v2117, 24
      %v2596 = vpop.permute.xlu0 %2595
      %2597 = vrot.lane.b32.xlu0 %v2118, 24
      %v2598 = vpop.permute.xlu0 %2597
      %2599 = vrot.lane.b32.xlu0 %v2120, 24
      %v2600 = vpop.permute.xlu0 %2599
      %2601 = vrot.lane.b32.xlu0 %v2121, 24
      %v2602 = vpop.permute.xlu0 %2601
      %2603 = vrot.lane.b32.xlu0 %v2123, 24
      %v2604 = vpop.permute.xlu0 %2603
      %2605 = vrot.lane.b32.xlu0 %v2124, 24
      %v2606 = vpop.permute.xlu0 %2605
      %2607 = vrot.lane.b32.xlu0 %v2126, 24
      %v2608 = vpop.permute.xlu0 %2607
      %2609 = vrot.lane.b32.xlu0 %v2127, 24
      %v2610 = vpop.permute.xlu0 %2609
      %2611 = vrot.lane.b32.xlu0 %v2129, 24
      %v2612 = vpop.permute.xlu0 %2611
      %2613 = vrot.lane.b32.xlu0 %v2130, 24
      %v2614 = vpop.permute.xlu0 %2613
      %2615 = vrot.lane.b32.xlu0 %v2132, 24
      %v2616 = vpop.permute.xlu0 %2615
      %2617 = vrot.lane.b32.xlu0 %v2133, 24
      %v2618 = vpop.permute.xlu0 %2617
      %2619 = vrot.lane.b32.xlu0 %v2135, 24
      %v2620 = vpop.permute.xlu0 %2619
      %2621 = vrot.lane.b32.xlu0 %v2136, 24
      %v2622 = vpop.permute.xlu0 %2621
      %2623 = vrot.lane.b32.xlu0 %v2138, 24
      %v2624 = vpop.permute.xlu0 %2623
      %2625 = vrot.lane.b32.xlu0 %v2139, 24
      %v2626 = vpop.permute.xlu0 %2625
      %2627 = vrot.lane.b32.xlu0 %v2141, 24
      %v2628 = vpop.permute.xlu0 %2627
      %2629 = vrot.lane.b32.xlu0 %v2142, 24
      %v2630 = vpop.permute.xlu0 %2629
      %2631 = vrot.lane.b32.xlu0 %v2144, 24
      %v2632 = vpop.permute.xlu0 %2631
      %2633 = vrot.lane.b32.xlu0 %v2145, 24
      %v2634 = vpop.permute.xlu0 %2633
      %2635 = vrot.lane.b32.xlu0 %v2147, 24
      %v2636 = vpop.permute.xlu0 %2635
      %2637 = vrot.lane.b32.xlu0 %v2148, 24
      %v2638 = vpop.permute.xlu0 %2637
      %2639 = vrot.lane.b32.xlu0 %v2150, 24
      %v2640 = vpop.permute.xlu0 %2639
      %2641 = vrot.lane.b32.xlu0 %v2151, 24
      %v2642 = vpop.permute.xlu0 %2641
      %2643 = vrot.lane.b32.xlu0 %v2153, 24
      %v2644 = vpop.permute.xlu0 %2643
      %2645 = vrot.lane.b32.xlu0 %v2154, 24
      %v2646 = vpop.permute.xlu0 %2645
      %2647 = vrot.lane.b32.xlu0 %v2156, 24
      %v2648 = vpop.permute.xlu0 %2647
      %2649 = vrot.lane.b32.xlu0 %v2157, 24
      %v2650 = vpop.permute.xlu0 %2649
      %2651 = vrot.lane.b32.xlu0 %v2159, 24
      %v2652 = vpop.permute.xlu0 %2651
      %2653 = vrot.lane.b32.xlu0 %v2160, 24
      %v2654 = vpop.permute.xlu0 %2653
      %2687 = vrot.lane.b32.xlu0 %v2220, 32
      %v2688 = vpop.permute.xlu0 %2687
      %2689 = vrot.lane.b32.xlu0 %v2222, 32
      %v2690 = vpop.permute.xlu0 %2689
      %2691 = vrot.lane.b32.xlu0 %v2225, 32
      %v2692 = vpop.permute.xlu0 %2691
      %2693 = vrot.lane.b32.xlu0 %v2227, 32
      %v2694 = vpop.permute.xlu0 %2693
      %2695 = vrot.lane.b32.xlu0 %v2230, 32
      %v2696 = vpop.permute.xlu0 %2695
      %2697 = vrot.lane.b32.xlu0 %v2232, 32
      %v2698 = vpop.permute.xlu0 %2697
      %2699 = vrot.lane.b32.xlu0 %v2235, 32
      %v2700 = vpop.permute.xlu0 %2699
      %2701 = vrot.lane.b32.xlu0 %v2237, 32
      %v2702 = vpop.permute.xlu0 %2701
      %2703 = vrot.lane.b32.xlu0 %v2240, 32
      %v2704 = vpop.permute.xlu0 %2703
      %2705 = vrot.lane.b32.xlu0 %v2242, 32
      %v2706 = vpop.permute.xlu0 %2705
      %2707 = vrot.lane.b32.xlu0 %v2245, 32
      %v2708 = vpop.permute.xlu0 %2707
      %2709 = vrot.lane.b32.xlu0 %v2247, 32
      %v2710 = vpop.permute.xlu0 %2709
      %2711 = vrot.lane.b32.xlu0 %v2250, 32
      %v2712 = vpop.permute.xlu0 %2711
      %2713 = vrot.lane.b32.xlu0 %v2252, 32
      %v2714 = vpop.permute.xlu0 %2713
      %2715 = vrot.lane.b32.xlu0 %v2255, 32
      %v2716 = vpop.permute.xlu0 %2715
      %2717 = vrot.lane.b32.xlu0 %v2257, 32
      %v2718 = vpop.permute.xlu0 %2717
      %2719 = vrot.lane.b32.xlu0 %v2260, 32
      %v2720 = vpop.permute.xlu0 %2719
      %2721 = vrot.lane.b32.xlu0 %v2262, 32
      %v2722 = vpop.permute.xlu0 %2721
      %2723 = vrot.lane.b32.xlu0 %v2265, 32
      %v2724 = vpop.permute.xlu0 %2723
      %2725 = vrot.lane.b32.xlu0 %v2267, 32
      %v2726 = vpop.permute.xlu0 %2725
      %2727 = vrot.lane.b32.xlu0 %v2270, 32
      %v2728 = vpop.permute.xlu0 %2727
      %2729 = vrot.lane.b32.xlu0 %v2272, 32
      %v2730 = vpop.permute.xlu0 %2729
      %2731 = vrot.lane.b32.xlu0 %v2275, 32
      %v2732 = vpop.permute.xlu0 %2731
      %2733 = vrot.lane.b32.xlu0 %v2277, 32
      %v2734 = vpop.permute.xlu0 %2733
      %2735 = vrot.lane.b32.xlu0 %v2280, 32
      %v2736 = vpop.permute.xlu0 %2735
      %2737 = vrot.lane.b32.xlu0 %v2282, 32
      %v2738 = vpop.permute.xlu0 %2737
      %2739 = vrot.lane.b32.xlu0 %v2285, 32
      %v2740 = vpop.permute.xlu0 %2739
      %2741 = vrot.lane.b32.xlu0 %v2287, 32
      %v2742 = vpop.permute.xlu0 %2741
      %2743 = vrot.lane.b32.xlu0 %v2290, 32
      %v2744 = vpop.permute.xlu0 %2743
      %2745 = vrot.lane.b32.xlu0 %v2292, 32
      %v2746 = vpop.permute.xlu0 %2745
      %2747 = vrot.lane.b32.xlu0 %v2378, 32
      %v2748 = vpop.permute.xlu0 %2747
      %2749 = vrot.lane.b32.xlu0 %v2380, 32
      %v2750 = vpop.permute.xlu0 %2749
      %2783 = vrot.lane.b32.xlu0 %v2300, 40
      %v2784 = vpop.permute.xlu0 %2783
      %2785 = vrot.lane.b32.xlu0 %v2302, 40
      %v2786 = vpop.permute.xlu0 %2785
      %2787 = vrot.lane.b32.xlu0 %v2305, 40
      %v2788 = vpop.permute.xlu0 %2787
      %2789 = vrot.lane.b32.xlu0 %v2307, 40
      %v2790 = vpop.permute.xlu0 %2789
      %2791 = vrot.lane.b32.xlu0 %v2310, 40
      %v2792 = vpop.permute.xlu0 %2791
      %2793 = vrot.lane.b32.xlu0 %v2312, 40
      %v2794 = vpop.permute.xlu0 %2793
      %2795 = vrot.lane.b32.xlu0 %v2315, 40
      %v2796 = vpop.permute.xlu0 %2795
      %2797 = vrot.lane.b32.xlu0 %v2317, 40
      %v2798 = vpop.permute.xlu0 %2797
      %2799 = vrot.lane.b32.xlu0 %v2320, 40
      %v2800 = vpop.permute.xlu0 %2799
      %2801 = vrot.lane.b32.xlu0 %v2322, 40
      %v2802 = vpop.permute.xlu0 %2801
      %2803 = vrot.lane.b32.xlu0 %v2325, 40
      %v2804 = vpop.permute.xlu0 %2803
      %2805 = vrot.lane.b32.xlu0 %v2327, 40
      %v2806 = vpop.permute.xlu0 %2805
      %2807 = vrot.lane.b32.xlu0 %v2330, 40
      %v2808 = vpop.permute.xlu0 %2807
      %2809 = vrot.lane.b32.xlu0 %v2332, 40
      %v2810 = vpop.permute.xlu0 %2809
      %2811 = vrot.lane.b32.xlu0 %v2335, 40
      %v2812 = vpop.permute.xlu0 %2811
      %2813 = vrot.lane.b32.xlu0 %v2337, 40
      %v2814 = vpop.permute.xlu0 %2813
      %2815 = vrot.lane.b32.xlu0 %v2340, 40
      %v2816 = vpop.permute.xlu0 %2815
      %2817 = vrot.lane.b32.xlu0 %v2342, 40
      %v2818 = vpop.permute.xlu0 %2817
      %2819 = vrot.lane.b32.xlu0 %v2345, 40
      %v2820 = vpop.permute.xlu0 %2819
      %2821 = vrot.lane.b32.xlu0 %v2347, 40
      %v2822 = vpop.permute.xlu0 %2821
      %2823 = vrot.lane.b32.xlu0 %v2350, 40
      %v2824 = vpop.permute.xlu0 %2823
      %2825 = vrot.lane.b32.xlu0 %v2352, 40
      %v2826 = vpop.permute.xlu0 %2825
      %2827 = vrot.lane.b32.xlu0 %v2355, 40
      %v2828 = vpop.permute.xlu0 %2827
      %2829 = vrot.lane.b32.xlu0 %v2357, 40
      %v2830 = vpop.permute.xlu0 %2829
      %2831 = vrot.lane.b32.xlu0 %v2360, 40
      %v2832 = vpop.permute.xlu0 %2831
      %2833 = vrot.lane.b32.xlu0 %v2362, 40
      %v2834 = vpop.permute.xlu0 %2833
      %2835 = vrot.lane.b32.xlu0 %v2365, 40
      %v2836 = vpop.permute.xlu0 %2835
      %2837 = vrot.lane.b32.xlu0 %v2367, 40
      %v2838 = vpop.permute.xlu0 %2837
      %2839 = vrot.lane.b32.xlu0 %v2370, 40
      %v2840 = vpop.permute.xlu0 %2839
      %2841 = vrot.lane.b32.xlu0 %v2372, 40
      %v2842 = vpop.permute.xlu0 %2841
      %2843 = vrot.lane.b32.xlu0 %v2383, 40
      %v2844 = vpop.permute.xlu0 %2843
      %2845 = vrot.lane.b32.xlu0 %v2385, 40
      %v2846 = vpop.permute.xlu0 %2845
      %2879 = vrot.lane.b32.xlu0 %v2117, 48
      %v2880 = vpop.permute.xlu0 %2879
      %2881 = vrot.lane.b32.xlu0 %v2118, 48
      %v2882 = vpop.permute.xlu0 %2881
      %2883 = vrot.lane.b32.xlu0 %v2120, 48
      %v2884 = vpop.permute.xlu0 %2883
      %2885 = vrot.lane.b32.xlu0 %v2121, 48
      %v2886 = vpop.permute.xlu0 %2885
      %2887 = vrot.lane.b32.xlu0 %v2123, 48
      %v2888 = vpop.permute.xlu0 %2887
      %2889 = vrot.lane.b32.xlu0 %v2124, 48
      %v2890 = vpop.permute.xlu0 %2889
      %2891 = vrot.lane.b32.xlu0 %v2126, 48
      %v2892 = vpop.permute.xlu0 %2891
      %2893 = vrot.lane.b32.xlu0 %v2127, 48
      %v2894 = vpop.permute.xlu0 %2893
      %2895 = vrot.lane.b32.xlu0 %v2129, 48
      %v2896 = vpop.permute.xlu0 %2895
      %2897 = vrot.lane.b32.xlu0 %v2130, 48
      %v2898 = vpop.permute.xlu0 %2897
      %2899 = vrot.lane.b32.xlu0 %v2132, 48
      %v2900 = vpop.permute.xlu0 %2899
      %2901 = vrot.lane.b32.xlu0 %v2133, 48
      %v2902 = vpop.permute.xlu0 %2901
      %2903 = vrot.lane.b32.xlu0 %v2135, 48
      %v2904 = vpop.permute.xlu0 %2903
      %2905 = vrot.lane.b32.xlu0 %v2136, 48
      %v2906 = vpop.permute.xlu0 %2905
      %2907 = vrot.lane.b32.xlu0 %v2138, 48
      %v2908 = vpop.permute.xlu0 %2907
      %2909 = vrot.lane.b32.xlu0 %v2139, 48
      %v2910 = vpop.permute.xlu0 %2909
      %2911 = vrot.lane.b32.xlu0 %v2141, 48
      %v2912 = vpop.permute.xlu0 %2911
      %2913 = vrot.lane.b32.xlu0 %v2142, 48
      %v2914 = vpop.permute.xlu0 %2913
      %2915 = vrot.lane.b32.xlu0 %v2144, 48
      %v2916 = vpop.permute.xlu0 %2915
      %2917 = vrot.lane.b32.xlu0 %v2145, 48
      %v2918 = vpop.permute.xlu0 %2917
      %2919 = vrot.lane.b32.xlu0 %v2147, 48
      %v2920 = vpop.permute.xlu0 %2919
      %2921 = vrot.lane.b32.xlu0 %v2148, 48
      %v2922 = vpop.permute.xlu0 %2921
      %2923 = vrot.lane.b32.xlu0 %v2150, 48
      %v2924 = vpop.permute.xlu0 %2923
      %2925 = vrot.lane.b32.xlu0 %v2151, 48
      %v2926 = vpop.permute.xlu0 %2925
      %2927 = vrot.lane.b32.xlu0 %v2153, 48
      %v2928 = vpop.permute.xlu0 %2927
      %2929 = vrot.lane.b32.xlu0 %v2154, 48
      %v2930 = vpop.permute.xlu0 %2929
      %2931 = vrot.lane.b32.xlu0 %v2156, 48
      %v2932 = vpop.permute.xlu0 %2931
      %2933 = vrot.lane.b32.xlu0 %v2157, 48
      %v2934 = vpop.permute.xlu0 %2933
      %2935 = vrot.lane.b32.xlu0 %v2159, 48
      %v2936 = vpop.permute.xlu0 %2935
      %2937 = vrot.lane.b32.xlu0 %v2160, 48
      %v2938 = vpop.permute.xlu0 %2937
      %2939 = vrot.lane.b32.xlu0 %v2162, 48
      %v2940 = vpop.permute.xlu0 %2939
      %2941 = vrot.lane.b32.xlu0 %v2163, 48
      %v2942 = vpop.permute.xlu0 %2941
      %2975 = vrot.lane.b32.xlu0 %v2225, 56
      %v2976 = vpop.permute.xlu0 %2975
      %2977 = vrot.lane.b32.xlu0 %v2227, 56
      %v2978 = vpop.permute.xlu0 %2977
      %2979 = vrot.lane.b32.xlu0 %v2230, 56
      %v2980 = vpop.permute.xlu0 %2979
      %2981 = vrot.lane.b32.xlu0 %v2232, 56
      %v2982 = vpop.permute.xlu0 %2981
      %2983 = vrot.lane.b32.xlu0 %v2235, 56
      %v2984 = vpop.permute.xlu0 %2983
      %2985 = vrot.lane.b32.xlu0 %v2237, 56
      %v2986 = vpop.permute.xlu0 %2985
      %2987 = vrot.lane.b32.xlu0 %v2240, 56
      %v2988 = vpop.permute.xlu0 %2987
      %2989 = vrot.lane.b32.xlu0 %v2242, 56
      %v2990 = vpop.permute.xlu0 %2989
      %2991 = vrot.lane.b32.xlu0 %v2245, 56
      %v2992 = vpop.permute.xlu0 %2991
      %2993 = vrot.lane.b32.xlu0 %v2247, 56
      %v2994 = vpop.permute.xlu0 %2993
      %2995 = vrot.lane.b32.xlu0 %v2250, 56
      %v2996 = vpop.permute.xlu0 %2995
      %2997 = vrot.lane.b32.xlu0 %v2252, 56
      %v2998 = vpop.permute.xlu0 %2997
      %2999 = vrot.lane.b32.xlu0 %v2255, 56
      %v3000 = vpop.permute.xlu0 %2999
      %3001 = vrot.lane.b32.xlu0 %v2257, 56
      %v3002 = vpop.permute.xlu0 %3001
      %3003 = vrot.lane.b32.xlu0 %v2260, 56
      %v3004 = vpop.permute.xlu0 %3003
      %3005 = vrot.lane.b32.xlu0 %v2262, 56
      %v3006 = vpop.permute.xlu0 %3005
      %3007 = vrot.lane.b32.xlu0 %v2265, 56
      %v3008 = vpop.permute.xlu0 %3007
      %3009 = vrot.lane.b32.xlu0 %v2267, 56
      %v3010 = vpop.permute.xlu0 %3009
      %3011 = vrot.lane.b32.xlu0 %v2270, 56
      %v3012 = vpop.permute.xlu0 %3011
      %3013 = vrot.lane.b32.xlu0 %v2272, 56
      %v3014 = vpop.permute.xlu0 %3013
      %3015 = vrot.lane.b32.xlu0 %v2275, 56
      %v3016 = vpop.permute.xlu0 %3015
      %3017 = vrot.lane.b32.xlu0 %v2277, 56
      %v3018 = vpop.permute.xlu0 %3017
      %3019 = vrot.lane.b32.xlu0 %v2280, 56
      %v3020 = vpop.permute.xlu0 %3019
      %3021 = vrot.lane.b32.xlu0 %v2282, 56
      %v3022 = vpop.permute.xlu0 %3021
      %3023 = vrot.lane.b32.xlu0 %v2285, 56
      %v3024 = vpop.permute.xlu0 %3023
      %3025 = vrot.lane.b32.xlu0 %v2287, 56
      %v3026 = vpop.permute.xlu0 %3025
      %3027 = vrot.lane.b32.xlu0 %v2290, 56
      %v3028 = vpop.permute.xlu0 %3027
      %3029 = vrot.lane.b32.xlu0 %v2292, 56
      %v3030 = vpop.permute.xlu0 %3029
      %3031 = vrot.lane.b32.xlu0 %v2378, 56
      %v3032 = vpop.permute.xlu0 %3031
      %3033 = vrot.lane.b32.xlu0 %v2380, 56
      %v3034 = vpop.permute.xlu0 %3033
      %3035 = vrot.lane.b32.xlu0 %v2391, 56
      %v3036 = vpop.permute.xlu0 %3035
      %3037 = vrot.lane.b32.xlu0 %v2393, 56
      %v3038 = vpop.permute.xlu0 %3037
      %3071 = vrot.lane.b32.xlu0 %v2305, 64
      %v3072 = vpop.permute.xlu0 %3071
      %3073 = vrot.lane.b32.xlu0 %v2307, 64
      %v3074 = vpop.permute.xlu0 %3073
      %3075 = vrot.lane.b32.xlu0 %v2310, 64
      %v3076 = vpop.permute.xlu0 %3075
      %3077 = vrot.lane.b32.xlu0 %v2312, 64
      %v3078 = vpop.permute.xlu0 %3077
      %3079 = vrot.lane.b32.xlu0 %v2315, 64
      %v3080 = vpop.permute.xlu0 %3079
      %3081 = vrot.lane.b32.xlu0 %v2317, 64
      %v3082 = vpop.permute.xlu0 %3081
      %3083 = vrot.lane.b32.xlu0 %v2320, 64
      %v3084 = vpop.permute.xlu0 %3083
      %3085 = vrot.lane.b32.xlu0 %v2322, 64
      %v3086 = vpop.permute.xlu0 %3085
      %3087 = vrot.lane.b32.xlu0 %v2325, 64
      %v3088 = vpop.permute.xlu0 %3087
      %3089 = vrot.lane.b32.xlu0 %v2327, 64
      %v3090 = vpop.permute.xlu0 %3089
      %3091 = vrot.lane.b32.xlu0 %v2330, 64
      %v3092 = vpop.permute.xlu0 %3091
      %3093 = vrot.lane.b32.xlu0 %v2332, 64
      %v3094 = vpop.permute.xlu0 %3093
      %3095 = vrot.lane.b32.xlu0 %v2335, 64
      %v3096 = vpop.permute.xlu0 %3095
      %3097 = vrot.lane.b32.xlu0 %v2337, 64
      %v3098 = vpop.permute.xlu0 %3097
      %3099 = vrot.lane.b32.xlu0 %v2340, 64
      %v3100 = vpop.permute.xlu0 %3099
      %3101 = vrot.lane.b32.xlu0 %v2342, 64
      %v3102 = vpop.permute.xlu0 %3101
      %3103 = vrot.lane.b32.xlu0 %v2345, 64
      %v3104 = vpop.permute.xlu0 %3103
      %3105 = vrot.lane.b32.xlu0 %v2347, 64
      %v3106 = vpop.permute.xlu0 %3105
      %3107 = vrot.lane.b32.xlu0 %v2350, 64
      %v3108 = vpop.permute.xlu0 %3107
      %3109 = vrot.lane.b32.xlu0 %v2352, 64
      %v3110 = vpop.permute.xlu0 %3109
      %3111 = vrot.lane.b32.xlu0 %v2355, 64
      %v3112 = vpop.permute.xlu0 %3111
      %3113 = vrot.lane.b32.xlu0 %v2357, 64
      %v3114 = vpop.permute.xlu0 %3113
      %3115 = vrot.lane.b32.xlu0 %v2360, 64
      %v3116 = vpop.permute.xlu0 %3115
      %3117 = vrot.lane.b32.xlu0 %v2362, 64
      %v3118 = vpop.permute.xlu0 %3117
      %3119 = vrot.lane.b32.xlu0 %v2365, 64
      %v3120 = vpop.permute.xlu0 %3119
      %3121 = vrot.lane.b32.xlu0 %v2367, 64
      %v3122 = vpop.permute.xlu0 %3121
      %3123 = vrot.lane.b32.xlu0 %v2370, 64
      %v3124 = vpop.permute.xlu0 %3123
      %3125 = vrot.lane.b32.xlu0 %v2372, 64
      %v3126 = vpop.permute.xlu0 %3125
      %3127 = vrot.lane.b32.xlu0 %v2383, 64
      %v3128 = vpop.permute.xlu0 %3127
      %3129 = vrot.lane.b32.xlu0 %v2385, 64
      %v3130 = vpop.permute.xlu0 %3129
      %3131 = vrot.lane.b32.xlu0 %v2396, 64
      %v3132 = vpop.permute.xlu0 %3131
      %3133 = vrot.lane.b32.xlu0 %v2398, 64
      %v3134 = vpop.permute.xlu0 %3133
      %v3167 = vsel %vm358, %v2111, %v2400
      %v3168 = vsel %vm358, %v2112, %v2402
      %v3169 = vsel %vm358, %v2114, %v2404
      %v3170 = vsel %vm358, %v2115, %v2406
      %v3171 = vsel %vm358, %v2117, %v2408
      %v3172 = vsel %vm358, %v2118, %v2410
      %v3173 = vsel %vm358, %v2120, %v2412
      %v3174 = vsel %vm358, %v2121, %v2414
      %v3175 = vsel %vm358, %v2123, %v2416
      %v3176 = vsel %vm358, %v2124, %v2418
      %v3177 = vsel %vm358, %v2126, %v2420
      %v3178 = vsel %vm358, %v2127, %v2422
      %v3179 = vsel %vm358, %v2129, %v2424
      %v3180 = vsel %vm358, %v2130, %v2426
      %v3181 = vsel %vm358, %v2132, %v2428
      %v3182 = vsel %vm358, %v2133, %v2430
      %v3183 = vsel %vm358, %v2135, %v2432
      %v3184 = vsel %vm358, %v2136, %v2434
      %v3185 = vsel %vm358, %v2138, %v2436
      %v3186 = vsel %vm358, %v2139, %v2438
      %v3187 = vsel %vm358, %v2141, %v2440
      %v3188 = vsel %vm358, %v2142, %v2442
      %v3189 = vsel %vm358, %v2144, %v2444
      %v3190 = vsel %vm358, %v2145, %v2446
      %v3191 = vsel %vm358, %v2147, %v2448
      %v3192 = vsel %vm358, %v2148, %v2450
      %v3193 = vsel %vm358, %v2150, %v2452
      %v3194 = vsel %vm358, %v2151, %v2454
      %v3195 = vsel %vm358, %v2153, %v2456
      %v3196 = vsel %vm358, %v2154, %v2458
      %v3197 = vsel %vm358, %v2156, %v2460
      %v3198 = vsel %vm358, %v2157, %v2462
      %v3199 = vsel %vm1624, %v3167, %v2496
      %v3200 = vsel %vm1624, %v3168, %v2498
      %v3201 = vsel %vm1624, %v3169, %v2500
      %v3202 = vsel %vm1624, %v3170, %v2502
      %v3203 = vsel %vm1624, %v3171, %v2504
      %v3204 = vsel %vm1624, %v3172, %v2506
      %v3205 = vsel %vm1624, %v3173, %v2508
      %v3206 = vsel %vm1624, %v3174, %v2510
      %v3207 = vsel %vm1624, %v3175, %v2512
      %v3208 = vsel %vm1624, %v3176, %v2514
      %v3209 = vsel %vm1624, %v3177, %v2516
      %v3210 = vsel %vm1624, %v3178, %v2518
      %v3211 = vsel %vm1624, %v3179, %v2520
      %v3212 = vsel %vm1624, %v3180, %v2522
      %v3213 = vsel %vm1624, %v3181, %v2524
      %v3214 = vsel %vm1624, %v3182, %v2526
      %v3215 = vsel %vm1624, %v3183, %v2528
      %v3216 = vsel %vm1624, %v3184, %v2530
      %v3217 = vsel %vm1624, %v3185, %v2532
      %v3218 = vsel %vm1624, %v3186, %v2534
      %v3219 = vsel %vm1624, %v3187, %v2536
      %v3220 = vsel %vm1624, %v3188, %v2538
      %v3221 = vsel %vm1624, %v3189, %v2540
      %v3222 = vsel %vm1624, %v3190, %v2542
      %v3223 = vsel %vm1624, %v3191, %v2544
      %v3224 = vsel %vm1624, %v3192, %v2546
      %v3225 = vsel %vm1624, %v3193, %v2548
      %v3226 = vsel %vm1624, %v3194, %v2550
      %v3227 = vsel %vm1624, %v3195, %v2552
      %v3228 = vsel %vm1624, %v3196, %v2554
      %v3229 = vsel %vm1624, %v3197, %v2556
      %v3230 = vsel %vm1624, %v3198, %v2558
      %v3231 = vsel %vm1690, %v3199, %v2592
      %v3232 = vsel %vm1690, %v3200, %v2594
      %v3233 = vsel %vm1690, %v3201, %v2596
      %v3234 = vsel %vm1690, %v3202, %v2598
      %v3235 = vsel %vm1690, %v3203, %v2600
      %v3236 = vsel %vm1690, %v3204, %v2602
      %v3237 = vsel %vm1690, %v3205, %v2604
      %v3238 = vsel %vm1690, %v3206, %v2606
      %v3239 = vsel %vm1690, %v3207, %v2608
      %v3240 = vsel %vm1690, %v3208, %v2610
      %v3241 = vsel %vm1690, %v3209, %v2612
      %v3242 = vsel %vm1690, %v3210, %v2614
      %v3243 = vsel %vm1690, %v3211, %v2616
      %v3244 = vsel %vm1690, %v3212, %v2618
      %v3245 = vsel %vm1690, %v3213, %v2620
      %v3246 = vsel %vm1690, %v3214, %v2622
      %v3247 = vsel %vm1690, %v3215, %v2624
      %v3248 = vsel %vm1690, %v3216, %v2626
      %v3249 = vsel %vm1690, %v3217, %v2628
      %v3250 = vsel %vm1690, %v3218, %v2630
      %v3251 = vsel %vm1690, %v3219, %v2632
      %v3252 = vsel %vm1690, %v3220, %v2634
      %v3253 = vsel %vm1690, %v3221, %v2636
      %v3254 = vsel %vm1690, %v3222, %v2638
      %v3255 = vsel %vm1690, %v3223, %v2640
      %v3256 = vsel %vm1690, %v3224, %v2642
      %v3257 = vsel %vm1690, %v3225, %v2644
      %v3258 = vsel %vm1690, %v3226, %v2646
      %v3259 = vsel %vm1690, %v3227, %v2648
      %v3260 = vsel %vm1690, %v3228, %v2650
      %v3261 = vsel %vm1690, %v3229, %v2652
      %v3262 = vsel %vm1690, %v3230, %v2654
      %v3263 = vsel %vm1756, %v3231, %v2688
      %v3264 = vsel %vm1756, %v3232, %v2690
      %v3265 = vsel %vm1756, %v3233, %v2692
      %v3266 = vsel %vm1756, %v3234, %v2694
      %v3267 = vsel %vm1756, %v3235, %v2696
      %v3268 = vsel %vm1756, %v3236, %v2698
      %v3269 = vsel %vm1756, %v3237, %v2700
      %v3270 = vsel %vm1756, %v3238, %v2702
      %v3271 = vsel %vm1756, %v3239, %v2704
      %v3272 = vsel %vm1756, %v3240, %v2706
      %v3273 = vsel %vm1756, %v3241, %v2708
      %v3274 = vsel %vm1756, %v3242, %v2710
      %v3275 = vsel %vm1756, %v3243, %v2712
      %v3276 = vsel %vm1756, %v3244, %v2714
      %v3277 = vsel %vm1756, %v3245, %v2716
      %v3278 = vsel %vm1756, %v3246, %v2718
      %v3279 = vsel %vm1756, %v3247, %v2720
      %v3280 = vsel %vm1756, %v3248, %v2722
      %v3281 = vsel %vm1756, %v3249, %v2724
      %v3282 = vsel %vm1756, %v3250, %v2726
      %v3283 = vsel %vm1756, %v3251, %v2728
      %v3284 = vsel %vm1756, %v3252, %v2730
      %v3285 = vsel %vm1756, %v3253, %v2732
      %v3286 = vsel %vm1756, %v3254, %v2734
      %v3287 = vsel %vm1756, %v3255, %v2736
      %v3288 = vsel %vm1756, %v3256, %v2738
      %v3289 = vsel %vm1756, %v3257, %v2740
      %v3290 = vsel %vm1756, %v3258, %v2742
      %v3291 = vsel %vm1756, %v3259, %v2744
      %v3292 = vsel %vm1756, %v3260, %v2746
      %v3293 = vsel %vm1756, %v3261, %v2748
      %v3294 = vsel %vm1756, %v3262, %v2750
      %vm3295 = vcmask 326656
      %v3296 = vsel %vm3295, %v3263, %v2784
      %v3297 = vsel %vm3295, %v3264, %v2786
      %v3298 = vsel %vm3295, %v3265, %v2788
      %v3299 = vsel %vm3295, %v3266, %v2790
      %v3300 = vsel %vm3295, %v3267, %v2792
      %v3301 = vsel %vm3295, %v3268, %v2794
      %v3302 = vsel %vm3295, %v3269, %v2796
      %v3303 = vsel %vm3295, %v3270, %v2798
      %v3304 = vsel %vm3295, %v3271, %v2800
      %v3305 = vsel %vm3295, %v3272, %v2802
      %v3306 = vsel %vm3295, %v3273, %v2804
      %v3307 = vsel %vm3295, %v3274, %v2806
      %v3308 = vsel %vm3295, %v3275, %v2808
      %v3309 = vsel %vm3295, %v3276, %v2810
      %v3310 = vsel %vm3295, %v3277, %v2812
      %v3311 = vsel %vm3295, %v3278, %v2814
      %v3312 = vsel %vm3295, %v3279, %v2816
      %v3313 = vsel %vm3295, %v3280, %v2818
      %v3314 = vsel %vm3295, %v3281, %v2820
      %v3315 = vsel %vm3295, %v3282, %v2822
      %v3316 = vsel %vm3295, %v3283, %v2824
      %v3317 = vsel %vm3295, %v3284, %v2826
      %v3318 = vsel %vm3295, %v3285, %v2828
      %v3319 = vsel %vm3295, %v3286, %v2830
      %v3320 = vsel %vm3295, %v3287, %v2832
      %v3321 = vsel %vm3295, %v3288, %v2834
      %v3322 = vsel %vm3295, %v3289, %v2836
      %v3323 = vsel %vm3295, %v3290, %v2838
      %v3324 = vsel %vm3295, %v3291, %v2840
      %v3325 = vsel %vm3295, %v3292, %v2842
      %v3326 = vsel %vm3295, %v3293, %v2844
      %v3327 = vsel %vm3295, %v3294, %v2846
      %vm3328 = vcmask 392192
      %v3329 = vsel %vm3328, %v3296, %v2880
      %v3330 = vsel %vm3328, %v3297, %v2882
      %v3331 = vsel %vm3328, %v3298, %v2884
      %v3332 = vsel %vm3328, %v3299, %v2886
      %v3333 = vsel %vm3328, %v3300, %v2888
      %v3334 = vsel %vm3328, %v3301, %v2890
      %v3335 = vsel %vm3328, %v3302, %v2892
      %v3336 = vsel %vm3328, %v3303, %v2894
      %v3337 = vsel %vm3328, %v3304, %v2896
      %v3338 = vsel %vm3328, %v3305, %v2898
      %v3339 = vsel %vm3328, %v3306, %v2900
      %v3340 = vsel %vm3328, %v3307, %v2902
      %v3341 = vsel %vm3328, %v3308, %v2904
      %v3342 = vsel %vm3328, %v3309, %v2906
      %v3343 = vsel %vm3328, %v3310, %v2908
      %v3344 = vsel %vm3328, %v3311, %v2910
      %v3345 = vsel %vm3328, %v3312, %v2912
      %v3346 = vsel %vm3328, %v3313, %v2914
      %v3347 = vsel %vm3328, %v3314, %v2916
      %v3348 = vsel %vm3328, %v3315, %v2918
      %v3349 = vsel %vm3328, %v3316, %v2920
      %v3350 = vsel %vm3328, %v3317, %v2922
      %v3351 = vsel %vm3328, %v3318, %v2924
      %v3352 = vsel %vm3328, %v3319, %v2926
      %v3353 = vsel %vm3328, %v3320, %v2928
      %v3354 = vsel %vm3328, %v3321, %v2930
      %v3355 = vsel %vm3328, %v3322, %v2932
      %v3356 = vsel %vm3328, %v3323, %v2934
      %v3357 = vsel %vm3328, %v3324, %v2936
      %v3358 = vsel %vm3328, %v3325, %v2938
      %v3359 = vsel %vm3328, %v3326, %v2940
      %v3360 = vsel %vm3328, %v3327, %v2942
      %vm3361 = vcmask 457728
      %v3362 = vsel %vm3361, %v3329, %v2976
      %v3363 = vsel %vm3361, %v3330, %v2978
      %v3364 = vsel %vm3361, %v3331, %v2980
      %v3365 = vsel %vm3361, %v3332, %v2982
      %v3366 = vsel %vm3361, %v3333, %v2984
      %v3367 = vsel %vm3361, %v3334, %v2986
      %v3368 = vsel %vm3361, %v3335, %v2988
      %v3369 = vsel %vm3361, %v3336, %v2990
      %v3370 = vsel %vm3361, %v3337, %v2992
      %v3371 = vsel %vm3361, %v3338, %v2994
      %v3372 = vsel %vm3361, %v3339, %v2996
      %v3373 = vsel %vm3361, %v3340, %v2998
      %v3374 = vsel %vm3361, %v3341, %v3000
      %v3375 = vsel %vm3361, %v3342, %v3002
      %v3376 = vsel %vm3361, %v3343, %v3004
      %v3377 = vsel %vm3361, %v3344, %v3006
      %v3378 = vsel %vm3361, %v3345, %v3008
      %v3379 = vsel %vm3361, %v3346, %v3010
      %v3380 = vsel %vm3361, %v3347, %v3012
      %v3381 = vsel %vm3361, %v3348, %v3014
      %v3382 = vsel %vm3361, %v3349, %v3016
      %v3383 = vsel %vm3361, %v3350, %v3018
      %v3384 = vsel %vm3361, %v3351, %v3020
      %v3385 = vsel %vm3361, %v3352, %v3022
      %v3386 = vsel %vm3361, %v3353, %v3024
      %v3387 = vsel %vm3361, %v3354, %v3026
      %v3388 = vsel %vm3361, %v3355, %v3028
      %v3389 = vsel %vm3361, %v3356, %v3030
      %v3390 = vsel %vm3361, %v3357, %v3032
      %v3391 = vsel %vm3361, %v3358, %v3034
      %v3392 = vsel %vm3361, %v3359, %v3036
      %v3393 = vsel %vm3361, %v3360, %v3038
      %vm3394 = vcmask 523264
      %v3395 = vsel %vm3394, %v3362, %v3072
      %v3396 = vsel %vm3394, %v3363, %v3074
      %v3397 = vsel %vm3394, %v3364, %v3076
      %v3398 = vsel %vm3394, %v3365, %v3078
      %v3399 = vsel %vm3394, %v3366, %v3080
      %v3400 = vsel %vm3394, %v3367, %v3082
      %v3401 = vsel %vm3394, %v3368, %v3084
      %v3402 = vsel %vm3394, %v3369, %v3086
      %v3403 = vsel %vm3394, %v3370, %v3088
      %v3404 = vsel %vm3394, %v3371, %v3090
      %v3405 = vsel %vm3394, %v3372, %v3092
      %v3406 = vsel %vm3394, %v3373, %v3094
      %v3407 = vsel %vm3394, %v3374, %v3096
      %v3408 = vsel %vm3394, %v3375, %v3098
      %v3409 = vsel %vm3394, %v3376, %v3100
      %v3410 = vsel %vm3394, %v3377, %v3102
      %v3411 = vsel %vm3394, %v3378, %v3104
      %v3412 = vsel %vm3394, %v3379, %v3106
      %v3413 = vsel %vm3394, %v3380, %v3108
      %v3414 = vsel %vm3394, %v3381, %v3110
      %v3415 = vsel %vm3394, %v3382, %v3112
      %v3416 = vsel %vm3394, %v3383, %v3114
      %v3417 = vsel %vm3394, %v3384, %v3116
      %v3418 = vsel %vm3394, %v3385, %v3118
      %v3419 = vsel %vm3394, %v3386, %v3120
      %v3420 = vsel %vm3394, %v3387, %v3122
      %v3421 = vsel %vm3394, %v3388, %v3124
      %v3422 = vsel %vm3394, %v3389, %v3126
      %v3423 = vsel %vm3394, %v3390, %v3128
      %v3424 = vsel %vm3394, %v3391, %v3130
      %v3425 = vsel %vm3394, %v3392, %v3132
      %v3426 = vsel %vm3394, %v3393, %v3134
      %v3427 = vpack.c.bf16 %v3396, %v3395
      %v3428 = vpack.c.bf16 %v3398, %v3397
      %v3429 = vpack.c.bf16 %v3400, %v3399
      %v3430 = vpack.c.bf16 %v3402, %v3401
      %v3431 = vpack.c.bf16 %v3404, %v3403
      %v3432 = vpack.c.bf16 %v3406, %v3405
      %v3433 = vpack.c.bf16 %v3408, %v3407
      %v3434 = vpack.c.bf16 %v3410, %v3409
      %v3435 = vpack.c.bf16 %v3412, %v3411
      %v3436 = vpack.c.bf16 %v3414, %v3413
      %v3437 = vpack.c.bf16 %v3416, %v3415
      %v3438 = vpack.c.bf16 %v3418, %v3417
      %v3439 = vpack.c.bf16 %v3420, %v3419
      %v3440 = vpack.c.bf16 %v3422, %v3421
      %v3441 = vpack.c.bf16 %v3424, %v3423
      %v3442 = vpack.c.bf16 %v3426, %v3425
      %v3443 = vld [vmem:[%s3] sm:$0xf]
      %v3444 = vld [vmem:[%s3 + $0x4] sm:$0xf]
      %v3445 = vld [vmem:[%s3 + $0x8] sm:$0xf]
      %v3446 = vld [vmem:[%s3 + $0xc] sm:$0xf]
      %v3447 = vld [vmem:[%s3 + $0x10] sm:$0xf]
      %v3448 = vld [vmem:[%s3 + $0x14] sm:$0xf]
      %v3449 = vld [vmem:[%s3 + $0x18] sm:$0xf]
      %v3450 = vld [vmem:[%s3 + $0x1c] sm:$0xf]
      %v3451 = vld [vmem:[%s3 + $0x20] sm:$0xf]
      %v3452 = vld [vmem:[%s4] sm:$0x1]
      %v3454 = vlaneseq
      %v3455 = vshrl.u32 %v3454, 7
      %v3456 = vsub.s32 0, %v3455
      %v3457 = vrot.slane %v3452, %v3456
      %v3468 = vunpack.c.l.b16 %v3443
      %v3469 = vunpack.c.l.b16 %v3444
      %v3470 = vunpack.c.l.b16 %v3445
      %v3471 = vunpack.c.l.b16 %v3446
      %v3472 = vunpack.c.l.b16 %v3447
      %v3473 = vunpack.c.l.b16 %v3448
      %v3474 = vunpack.c.l.b16 %v3449
      %v3475 = vunpack.c.l.b16 %v3450
      %v3476 = vunpack.c.l.b16 %v3451
      %v3477 = vpack.c.b16 %v3469, %v3468
      %v3478 = vpack.c.b16 %v3471, %v3470
      %v3479 = vpack.c.b16 %v3473, %v3472
      %v3480 = vpack.c.b16 %v3475, %v3474
      %v3481 = vpack.c.b16 %v3476, %v3476
      %vm3486 = vcmask 588800
      %v3488 = vsel %vm3486, %v3427, 0
      %v3491 = vsel %vm3486, %v3428, 0
      %v3494 = vsel %vm3486, %v3429, 0
      %v3497 = vsel %vm3486, %v3430, 0
      %v3500 = vsel %vm3486, %v3431, 0
      %v3503 = vsel %vm3486, %v3432, 0
      %v3506 = vsel %vm3486, %v3433, 0
      %v3509 = vsel %vm3486, %v3434, 0
      %v3512 = vsel %vm3486, %v3435, 0
      %v3515 = vsel %vm3486, %v3436, 0
      %v3518 = vsel %vm3486, %v3437, 0
      %v3521 = vsel %vm3486, %v3438, 0
      %v3524 = vsel %vm3486, %v3439, 0
      %v3527 = vsel %vm3486, %v3440, 0
      %v3530 = vsel %vm3486, %v3441, 0
      %v3533 = vsel %vm3486, %v3442, 0
      %vm3535 = vcmask 1043456
      %v3537 = vsel %vm3535, %v3481, 0
      %3539 = vmatprep.subr.bf16.mxu0 0
      %3540 = vmatpush1.bf16.msra.mxu0 %v3477
      %3541 = vmatprep.subr.bf16.mxu0 0
      %3542 = vmatpush1.bf16.msra.mxu0 %v3478
      %3543 = vmatprep.subr.bf16.mxu0 0
      %3544 = vmatpush1.bf16.msra.mxu0 %v3479
      %3545 = vmatprep.subr.bf16.mxu0 0
      %3546 = vmatpush1.bf16.msra.mxu0 %v3480
      %3547 = vmatprep.subr.bf16.mxu0 0
      %3548 = vmatpush1.bf16.msra.mxu0 %v3537
      %3549 = vmatprep.subr.bf16.mxu0 0
      %3550 = vmatpush1.bf16.msra.mxu0 0
      %3551 = vmatprep.subr.bf16.mxu0 0
      %3552 = vmatpush1.bf16.msra.mxu0 0
      %3553 = vmatprep.subr.bf16.mxu0 0
      %3554 = vmatpush1.bf16.msra.mxu0 0
      %3555 = vmatprep.subr.bf16.mxu0 0
      %3556 = vmatpush1.bf16.msra.mxu0 0
      %3557 = vmatprep.subr.bf16.mxu0 0
      %3558 = vmatpush1.bf16.msra.mxu0 0
      %3559 = vmatprep.subr.bf16.mxu0 0
      %3560 = vmatpush1.bf16.msra.mxu0 0
      %3561 = vmatprep.subr.bf16.mxu0 0
      %3562 = vmatpush1.bf16.msra.mxu0 0
      %3563 = vmatprep.subr.bf16.mxu0 0
      %3564 = vmatpush1.bf16.msra.mxu0 0
      %3565 = vmatprep.subr.bf16.mxu0 0
      %3566 = vmatpush1.bf16.msra.mxu0 0
      %3567 = vmatprep.subr.bf16.mxu0 0
      %3568 = vmatpush1.bf16.msra.mxu0 0
      %3569 = vmatprep.subr.bf16.mxu0 0
      %3570 = vmatpush1.bf16.msra.mxu0 0
      %3571 = vmatprep.mubr.bf16.mxu0 0
      %3572 = vmatmul.mubr.bf16.gmra.mrb[0].mxu0 %v3488
      %v3573 = vpop.f32.mrb[0].mxu0
      %v3574 = vadd.f32 %v3457, %v3573
      %v3575 = vpop.f32.mrb[0].mxu0
      %v3576 = vpop.f32.mrb[0].mxu0
      %v3577 = vadd.f32 %v3457, %v3576
      %v3578 = vpop.f32.mrb[0].mxu0
      %3579 = vmatprep.mubr.bf16.mxu0 0
      %3580 = vmatmul.mubr.bf16.gmra.mrb[0].mxu0 %v3491
      %v3581 = vpop.f32.mrb[0].mxu0
      %v3582 = vadd.f32 %v3457, %v3581
      %v3583 = vpop.f32.mrb[0].mxu0
      %v3584 = vpop.f32.mrb[0].mxu0
      %v3585 = vadd.f32 %v3457, %v3584
      %v3586 = vpop.f32.mrb[0].mxu0
      %3587 = vmatprep.mubr.bf16.mxu0 0
      %3588 = vmatmul.mubr.bf16.gmra.mrb[0].mxu0 %v3494
      %v3589 = vpop.f32.mrb[0].mxu0
      %v3590 = vadd.f32 %v3457, %v3589
      %v3591 = vpop.f32.mrb[0].mxu0
      %v3592 = vpop.f32.mrb[0].mxu0
      %v3593 = vadd.f32 %v3457, %v3592
      %v3594 = vpop.f32.mrb[0].mxu0
      %3595 = vmatprep.mubr.bf16.mxu0 0
      %3596 = vmatmul.mubr.bf16.gmra.mrb[0].mxu0 %v3497
      %v3597 = vpop.f32.mrb[0].mxu0
      %v3598 = vadd.f32 %v3457, %v3597
      %v3599 = vpop.f32.mrb[0].mxu0
      %v3600 = vpop.f32.mrb[0].mxu0
      %v3601 = vadd.f32 %v3457, %v3600
      %v3602 = vpop.f32.mrb[0].mxu0
      %3603 = vmatprep.mubr.bf16.mxu0 0
      %3604 = vmatmul.mubr.bf16.gmra.mrb[0].mxu0 %v3500
      %v3605 = vpop.f32.mrb[0].mxu0
      %v3606 = vadd.f32 %v3457, %v3605
      %v3607 = vpop.f32.mrb[0].mxu0
      %v3608 = vpop.f32.mrb[0].mxu0
      %v3609 = vadd.f32 %v3457, %v3608
      %v3610 = vpop.f32.mrb[0].mxu0
      %3611 = vmatprep.mubr.bf16.mxu0 0
      %3612 = vmatmul.mubr.bf16.gmra.mrb[0].mxu0 %v3503
      %v3613 = vpop.f32.mrb[0].mxu0
      %v3614 = vadd.f32 %v3457, %v3613
      %v3615 = vpop.f32.mrb[0].mxu0
      %v3616 = vpop.f32.mrb[0].mxu0
      %v3617 = vadd.f32 %v3457, %v3616
      %v3618 = vpop.f32.mrb[0].mxu0
      %3619 = vmatprep.mubr.bf16.mxu0 0
      %3620 = vmatmul.mubr.bf16.gmra.mrb[0].mxu0 %v3506
      %v3621 = vpop.f32.mrb[0].mxu0
      %v3622 = vadd.f32 %v3457, %v3621
      %v3623 = vpop.f32.mrb[0].mxu0
      %v3624 = vpop.f32.mrb[0].mxu0
      %v3625 = vadd.f32 %v3457, %v3624
      %v3626 = vpop.f32.mrb[0].mxu0
      %3627 = vmatprep.mubr.bf16.mxu0 0
      %3628 = vmatmul.mubr.bf16.gmra.mrb[0].mxu0 %v3509
      %v3629 = vpop.f32.mrb[0].mxu0
      %v3630 = vadd.f32 %v3457, %v3629
      %v3631 = vpop.f32.mrb[0].mxu0
      %v3632 = vpop.f32.mrb[0].mxu0
      %v3633 = vadd.f32 %v3457, %v3632
      %v3634 = vpop.f32.mrb[0].mxu0
      %3635 = vmatprep.mubr.bf16.mxu0 0
      %3636 = vmatmul.mubr.bf16.gmra.mrb[0].mxu0 %v3512
      %v3637 = vpop.f32.mrb[0].mxu0
      %v3638 = vadd.f32 %v3457, %v3637
      %v3639 = vpop.f32.mrb[0].mxu0
      %v3640 = vpop.f32.mrb[0].mxu0
      %v3641 = vadd.f32 %v3457, %v3640
      %v3642 = vpop.f32.mrb[0].mxu0
      %3643 = vmatprep.mubr.bf16.mxu0 0
      %3644 = vmatmul.mubr.bf16.gmra.mrb[0].mxu0 %v3515
      %v3645 = vpop.f32.mrb[0].mxu0
      %v3646 = vadd.f32 %v3457, %v3645
      %v3647 = vpop.f32.mrb[0].mxu0
      %v3648 = vpop.f32.mrb[0].mxu0
      %v3649 = vadd.f32 %v3457, %v3648
      %v3650 = vpop.f32.mrb[0].mxu0
      %3651 = vmatprep.mubr.bf16.mxu0 0
      %3652 = vmatmul.mubr.bf16.gmra.mrb[0].mxu0 %v3518
      %v3653 = vpop.f32.mrb[0].mxu0
      %v3654 = vadd.f32 %v3457, %v3653
      %v3655 = vpop.f32.mrb[0].mxu0
      %v3656 = vpop.f32.mrb[0].mxu0
      %v3657 = vadd.f32 %v3457, %v3656
      %v3658 = vpop.f32.mrb[0].mxu0
      %3659 = vmatprep.mubr.bf16.mxu0 0
      %3660 = vmatmul.mubr.bf16.gmra.mrb[0].mxu0 %v3521
      %v3661 = vpop.f32.mrb[0].mxu0
      %v3662 = vadd.f32 %v3457, %v3661
      %v3663 = vpop.f32.mrb[0].mxu0
      %v3664 = vpop.f32.mrb[0].mxu0
      %v3665 = vadd.f32 %v3457, %v3664
      %v3666 = vpop.f32.mrb[0].mxu0
      %3667 = vmatprep.mubr.bf16.mxu0 0
      %3668 = vmatmul.mubr.bf16.gmra.mrb[0].mxu0 %v3524
      %v3669 = vpop.f32.mrb[0].mxu0
      %v3670 = vadd.f32 %v3457, %v3669
      %v3671 = vpop.f32.mrb[0].mxu0
      %v3672 = vpop.f32.mrb[0].mxu0
      %v3673 = vadd.f32 %v3457, %v3672
      %v3674 = vpop.f32.mrb[0].mxu0
      %3675 = vmatprep.mubr.bf16.mxu0 0
      %3676 = vmatmul.mubr.bf16.gmra.mrb[0].mxu0 %v3527
      %v3677 = vpop.f32.mrb[0].mxu0
      %v3678 = vadd.f32 %v3457, %v3677
      %v3679 = vpop.f32.mrb[0].mxu0
      %v3680 = vpop.f32.mrb[0].mxu0
      %v3681 = vadd.f32 %v3457, %v3680
      %v3682 = vpop.f32.mrb[0].mxu0
      %3683 = vmatprep.mubr.bf16.mxu0 0
      %3684 = vmatmul.mubr.bf16.gmra.mrb[0].mxu0 %v3530
      %v3685 = vpop.f32.mrb[0].mxu0
      %v3686 = vadd.f32 %v3457, %v3685
      %v3687 = vpop.f32.mrb[0].mxu0
      %v3688 = vpop.f32.mrb[0].mxu0
      %v3689 = vadd.f32 %v3457, %v3688
      %v3690 = vpop.f32.mrb[0].mxu0
      %3691 = vmatprep.mubr.bf16.mxu0 0
      %3692 = vmatmul.mubr.bf16.gmra.mrb[0].mxu0 %v3533
      %v3693 = vpop.f32.mrb[0].mxu0
      %v3694 = vadd.f32 %v3457, %v3693
      %v3695 = vpop.f32.mrb[0].mxu0
      %v3696 = vpop.f32.mrb[0].mxu0
      %v3697 = vadd.f32 %v3457, %v3696
      %v3698 = vpop.f32.mrb[0].mxu0
      %3699 = vdwg.mxu0
      %v3732 = vcombine.high %v3574, %v3574
      %v3734 = vunpack.c.l.s4 1983009808
      %v3735 = vunpack.c.0.s8 %v3734
      %v3736 = vlaneseq
      %v3737 = vshrl.u32 %v3736, 7
      %v3738 = vsub.s32 %v3735, %v3737
      %v3739 = vrot.slane %v3574, %v3738
      %v3741 = vunpack.c.l.s4 1983009808
      %v3742 = vunpack.c.0.s8 %v3741
      %v3743 = vlaneseq
      %v3744 = vshrl.u32 %v3743, 7
      %v3745 = vsub.s32 %v3742, %v3744
      %v3746 = vrot.slane %v3732, %v3745
      %v3747 = vcombine.high %v3739, %v3739
      %v3748 = vcombine.high %v3746, %v3746
      %v3749 = vcombine.high %v3577, %v3577
      %v3751 = vunpack.c.l.s4 1983009808
      %v3752 = vunpack.c.0.s8 %v3751
      %v3753 = vlaneseq
      %v3754 = vshrl.u32 %v3753, 7
      %v3755 = vsub.s32 %v3752, %v3754
      %v3756 = vrot.slane %v3577, %v3755
      %v3758 = vunpack.c.l.s4 1983009808
      %v3759 = vunpack.c.0.s8 %v3758
      %v3760 = vlaneseq
      %v3761 = vshrl.u32 %v3760, 7
      %v3762 = vsub.s32 %v3759, %v3761
      %v3763 = vrot.slane %v3749, %v3762
      %v3764 = vcombine.high %v3756, %v3756
      %v3765 = vcombine.high %v3763, %v3763
      %v3766 = vcombine.high %v3582, %v3582
      %v3768 = vunpack.c.l.s4 1983009808
      %v3769 = vunpack.c.0.s8 %v3768
      %v3770 = vlaneseq
      %v3771 = vshrl.u32 %v3770, 7
      %v3772 = vsub.s32 %v3769, %v3771
      %v3773 = vrot.slane %v3582, %v3772
      %v3775 = vunpack.c.l.s4 1983009808
      %v3776 = vunpack.c.0.s8 %v3775
      %v3777 = vlaneseq
      %v3778 = vshrl.u32 %v3777, 7
      %v3779 = vsub.s32 %v3776, %v3778
      %v3780 = vrot.slane %v3766, %v3779
      %v3781 = vcombine.high %v3773, %v3773
      %v3782 = vcombine.high %v3780, %v3780
      %v3783 = vcombine.high %v3585, %v3585
      %v3785 = vunpack.c.l.s4 1983009808
      %v3786 = vunpack.c.0.s8 %v3785
      %v3787 = vlaneseq
      %v3788 = vshrl.u32 %v3787, 7
      %v3789 = vsub.s32 %v3786, %v3788
      %v3790 = vrot.slane %v3585, %v3789
      %v3792 = vunpack.c.l.s4 1983009808
      %v3793 = vunpack.c.0.s8 %v3792
      %v3794 = vlaneseq
      %v3795 = vshrl.u32 %v3794, 7
      %v3796 = vsub.s32 %v3793, %v3795
      %v3797 = vrot.slane %v3783, %v3796
      %v3798 = vcombine.high %v3790, %v3790
      %v3799 = vcombine.high %v3797, %v3797
      %v3800 = vcombine.high %v3590, %v3590
      %v3802 = vunpack.c.l.s4 1983009808
      %v3803 = vunpack.c.0.s8 %v3802
      %v3804 = vlaneseq
      %v3805 = vshrl.u32 %v3804, 7
      %v3806 = vsub.s32 %v3803, %v3805
      %v3807 = vrot.slane %v3590, %v3806
      %v3809 = vunpack.c.l.s4 1983009808
      %v3810 = vunpack.c.0.s8 %v3809
      %v3811 = vlaneseq
      %v3812 = vshrl.u32 %v3811, 7
      %v3813 = vsub.s32 %v3810, %v3812
      %v3814 = vrot.slane %v3800, %v3813
      %v3815 = vcombine.high %v3807, %v3807
      %v3816 = vcombine.high %v3814, %v3814
      %v3817 = vcombine.high %v3593, %v3593
      %v3819 = vunpack.c.l.s4 1983009808
      %v3820 = vunpack.c.0.s8 %v3819
      %v3821 = vlaneseq
      %v3822 = vshrl.u32 %v3821, 7
      %v3823 = vsub.s32 %v3820, %v3822
      %v3824 = vrot.slane %v3593, %v3823
      %v3826 = vunpack.c.l.s4 1983009808
      %v3827 = vunpack.c.0.s8 %v3826
      %v3828 = vlaneseq
      %v3829 = vshrl.u32 %v3828, 7
      %v3830 = vsub.s32 %v3827, %v3829
      %v3831 = vrot.slane %v3817, %v3830
      %v3832 = vcombine.high %v3824, %v3824
      %v3833 = vcombine.high %v3831, %v3831
      %v3834 = vcombine.high %v3598, %v3598
      %v3836 = vunpack.c.l.s4 1983009808
      %v3837 = vunpack.c.0.s8 %v3836
      %v3838 = vlaneseq
      %v3839 = vshrl.u32 %v3838, 7
      %v3840 = vsub.s32 %v3837, %v3839
      %v3841 = vrot.slane %v3598, %v3840
      %v3843 = vunpack.c.l.s4 1983009808
      %v3844 = vunpack.c.0.s8 %v3843
      %v3845 = vlaneseq
      %v3846 = vshrl.u32 %v3845, 7
      %v3847 = vsub.s32 %v3844, %v3846
      %v3848 = vrot.slane %v3834, %v3847
      %v3849 = vcombine.high %v3841, %v3841
      %v3850 = vcombine.high %v3848, %v3848
      %v3851 = vcombine.high %v3601, %v3601
      %v3853 = vunpack.c.l.s4 1983009808
      %v3854 = vunpack.c.0.s8 %v3853
      %v3855 = vlaneseq
      %v3856 = vshrl.u32 %v3855, 7
      %v3857 = vsub.s32 %v3854, %v3856
      %v3858 = vrot.slane %v3601, %v3857
      %v3860 = vunpack.c.l.s4 1983009808
      %v3861 = vunpack.c.0.s8 %v3860
      %v3862 = vlaneseq
      %v3863 = vshrl.u32 %v3862, 7
      %v3864 = vsub.s32 %v3861, %v3863
      %v3865 = vrot.slane %v3851, %v3864
      %v3866 = vcombine.high %v3858, %v3858
      %v3867 = vcombine.high %v3865, %v3865
      %v3868 = vcombine.high %v3606, %v3606
      %v3870 = vunpack.c.l.s4 1983009808
      %v3871 = vunpack.c.0.s8 %v3870
      %v3872 = vlaneseq
      %v3873 = vshrl.u32 %v3872, 7
      %v3874 = vsub.s32 %v3871, %v3873
      %v3875 = vrot.slane %v3606, %v3874
      %v3877 = vunpack.c.l.s4 1983009808
      %v3878 = vunpack.c.0.s8 %v3877
      %v3879 = vlaneseq
      %v3880 = vshrl.u32 %v3879, 7
      %v3881 = vsub.s32 %v3878, %v3880
      %v3882 = vrot.slane %v3868, %v3881
      %v3883 = vcombine.high %v3875, %v3875
      %v3884 = vcombine.high %v3882, %v3882
      %v3885 = vcombine.high %v3609, %v3609
      %v3887 = vunpack.c.l.s4 1983009808
      %v3888 = vunpack.c.0.s8 %v3887
      %v3889 = vlaneseq
      %v3890 = vshrl.u32 %v3889, 7
      %v3891 = vsub.s32 %v3888, %v3890
      %v3892 = vrot.slane %v3609, %v3891
      %v3894 = vunpack.c.l.s4 1983009808
      %v3895 = vunpack.c.0.s8 %v3894
      %v3896 = vlaneseq
      %v3897 = vshrl.u32 %v3896, 7
      %v3898 = vsub.s32 %v3895, %v3897
      %v3899 = vrot.slane %v3885, %v3898
      %v3900 = vcombine.high %v3892, %v3892
      %v3901 = vcombine.high %v3899, %v3899
      %v3902 = vcombine.high %v3614, %v3614
      %v3904 = vunpack.c.l.s4 1983009808
      %v3905 = vunpack.c.0.s8 %v3904
      %v3906 = vlaneseq
      %v3907 = vshrl.u32 %v3906, 7
      %v3908 = vsub.s32 %v3905, %v3907
      %v3909 = vrot.slane %v3614, %v3908
      %v3911 = vunpack.c.l.s4 1983009808
      %v3912 = vunpack.c.0.s8 %v3911
      %v3913 = vlaneseq
      %v3914 = vshrl.u32 %v3913, 7
      %v3915 = vsub.s32 %v3912, %v3914
      %v3916 = vrot.slane %v3902, %v3915
      %v3917 = vcombine.high %v3909, %v3909
      %v3918 = vcombine.high %v3916, %v3916
      %v3919 = vcombine.high %v3617, %v3617
      %v3921 = vunpack.c.l.s4 1983009808
      %v3922 = vunpack.c.0.s8 %v3921
      %v3923 = vlaneseq
      %v3924 = vshrl.u32 %v3923, 7
      %v3925 = vsub.s32 %v3922, %v3924
      %v3926 = vrot.slane %v3617, %v3925
      %v3928 = vunpack.c.l.s4 1983009808
      %v3929 = vunpack.c.0.s8 %v3928
      %v3930 = vlaneseq
      %v3931 = vshrl.u32 %v3930, 7
      %v3932 = vsub.s32 %v3929, %v3931
      %v3933 = vrot.slane %v3919, %v3932
      %v3934 = vcombine.high %v3926, %v3926
      %v3935 = vcombine.high %v3933, %v3933
      %v3936 = vcombine.high %v3622, %v3622
      %v3938 = vunpack.c.l.s4 1983009808
      %v3939 = vunpack.c.0.s8 %v3938
      %v3940 = vlaneseq
      %v3941 = vshrl.u32 %v3940, 7
      %v3942 = vsub.s32 %v3939, %v3941
      %v3943 = vrot.slane %v3622, %v3942
      %v3945 = vunpack.c.l.s4 1983009808
      %v3946 = vunpack.c.0.s8 %v3945
      %v3947 = vlaneseq
      %v3948 = vshrl.u32 %v3947, 7
      %v3949 = vsub.s32 %v3946, %v3948
      %v3950 = vrot.slane %v3936, %v3949
      %v3951 = vcombine.high %v3943, %v3943
      %v3952 = vcombine.high %v3950, %v3950
      %v3953 = vcombine.high %v3625, %v3625
      %v3955 = vunpack.c.l.s4 1983009808
      %v3956 = vunpack.c.0.s8 %v3955
      %v3957 = vlaneseq
      %v3958 = vshrl.u32 %v3957, 7
      %v3959 = vsub.s32 %v3956, %v3958
      %v3960 = vrot.slane %v3625, %v3959
      %v3962 = vunpack.c.l.s4 1983009808
      %v3963 = vunpack.c.0.s8 %v3962
      %v3964 = vlaneseq
      %v3965 = vshrl.u32 %v3964, 7
      %v3966 = vsub.s32 %v3963, %v3965
      %v3967 = vrot.slane %v3953, %v3966
      %v3968 = vcombine.high %v3960, %v3960
      %v3969 = vcombine.high %v3967, %v3967
      %v3970 = vcombine.high %v3630, %v3630
      %v3972 = vunpack.c.l.s4 1983009808
      %v3973 = vunpack.c.0.s8 %v3972
      %v3974 = vlaneseq
      %v3975 = vshrl.u32 %v3974, 7
      %v3976 = vsub.s32 %v3973, %v3975
      %v3977 = vrot.slane %v3630, %v3976
      %v3979 = vunpack.c.l.s4 1983009808
      %v3980 = vunpack.c.0.s8 %v3979
      %v3981 = vlaneseq
      %v3982 = vshrl.u32 %v3981, 7
      %v3983 = vsub.s32 %v3980, %v3982
      %v3984 = vrot.slane %v3970, %v3983
      %v3985 = vcombine.high %v3977, %v3977
      %v3986 = vcombine.high %v3984, %v3984
      %v3987 = vcombine.high %v3633, %v3633
      %v3989 = vunpack.c.l.s4 1983009808
      %v3990 = vunpack.c.0.s8 %v3989
      %v3991 = vlaneseq
      %v3992 = vshrl.u32 %v3991, 7
      %v3993 = vsub.s32 %v3990, %v3992
      %v3994 = vrot.slane %v3633, %v3993
      %v3996 = vunpack.c.l.s4 1983009808
      %v3997 = vunpack.c.0.s8 %v3996
      %v3998 = vlaneseq
      %v3999 = vshrl.u32 %v3998, 7
      %v4000 = vsub.s32 %v3997, %v3999
      %v4001 = vrot.slane %v3987, %v4000
      %v4002 = vcombine.high %v3994, %v3994
      %v4003 = vcombine.high %v4001, %v4001
      %v4004 = vcombine.high %v3638, %v3638
      %v4006 = vunpack.c.l.s4 1983009808
      %v4007 = vunpack.c.0.s8 %v4006
      %v4008 = vlaneseq
      %v4009 = vshrl.u32 %v4008, 7
      %v4010 = vsub.s32 %v4007, %v4009
      %v4011 = vrot.slane %v3638, %v4010
      %v4013 = vunpack.c.l.s4 1983009808
      %v4014 = vunpack.c.0.s8 %v4013
      %v4015 = vlaneseq
      %v4016 = vshrl.u32 %v4015, 7
      %v4017 = vsub.s32 %v4014, %v4016
      %v4018 = vrot.slane %v4004, %v4017
      %v4019 = vcombine.high %v4011, %v4011
      %v4020 = vcombine.high %v4018, %v4018
      %v4021 = vcombine.high %v3641, %v3641
      %v4023 = vunpack.c.l.s4 1983009808
      %v4024 = vunpack.c.0.s8 %v4023
      %v4025 = vlaneseq
      %v4026 = vshrl.u32 %v4025, 7
      %v4027 = vsub.s32 %v4024, %v4026
      %v4028 = vrot.slane %v3641, %v4027
      %v4030 = vunpack.c.l.s4 1983009808
      %v4031 = vunpack.c.0.s8 %v4030
      %v4032 = vlaneseq
      %v4033 = vshrl.u32 %v4032, 7
      %v4034 = vsub.s32 %v4031, %v4033
      %v4035 = vrot.slane %v4021, %v4034
      %v4036 = vcombine.high %v4028, %v4028
      %v4037 = vcombine.high %v4035, %v4035
      %v4038 = vcombine.high %v3646, %v3646
      %v4040 = vunpack.c.l.s4 1983009808
      %v4041 = vunpack.c.0.s8 %v4040
      %v4042 = vlaneseq
      %v4043 = vshrl.u32 %v4042, 7
      %v4044 = vsub.s32 %v4041, %v4043
      %v4045 = vrot.slane %v3646, %v4044
      %v4047 = vunpack.c.l.s4 1983009808
      %v4048 = vunpack.c.0.s8 %v4047
      %v4049 = vlaneseq
      %v4050 = vshrl.u32 %v4049, 7
      %v4051 = vsub.s32 %v4048, %v4050
      %v4052 = vrot.slane %v4038, %v4051
      %v4053 = vcombine.high %v4045, %v4045
      %v4054 = vcombine.high %v4052, %v4052
      %v4055 = vcombine.high %v3649, %v3649
      %v4057 = vunpack.c.l.s4 1983009808
      %v4058 = vunpack.c.0.s8 %v4057
      %v4059 = vlaneseq
      %v4060 = vshrl.u32 %v4059, 7
      %v4061 = vsub.s32 %v4058, %v4060
      %v4062 = vrot.slane %v3649, %v4061
      %v4064 = vunpack.c.l.s4 1983009808
      %v4065 = vunpack.c.0.s8 %v4064
      %v4066 = vlaneseq
      %v4067 = vshrl.u32 %v4066, 7
      %v4068 = vsub.s32 %v4065, %v4067
      %v4069 = vrot.slane %v4055, %v4068
      %v4070 = vcombine.high %v4062, %v4062
      %v4071 = vcombine.high %v4069, %v4069
      %v4072 = vcombine.high %v3654, %v3654
      %v4074 = vunpack.c.l.s4 1983009808
      %v4075 = vunpack.c.0.s8 %v4074
      %v4076 = vlaneseq
      %v4077 = vshrl.u32 %v4076, 7
      %v4078 = vsub.s32 %v4075, %v4077
      %v4079 = vrot.slane %v3654, %v4078
      %v4081 = vunpack.c.l.s4 1983009808
      %v4082 = vunpack.c.0.s8 %v4081
      %v4083 = vlaneseq
      %v4084 = vshrl.u32 %v4083, 7
      %v4085 = vsub.s32 %v4082, %v4084
      %v4086 = vrot.slane %v4072, %v4085
      %v4087 = vcombine.high %v4079, %v4079
      %v4088 = vcombine.high %v4086, %v4086
      %v4089 = vcombine.high %v3657, %v3657
      %v4091 = vunpack.c.l.s4 1983009808
      %v4092 = vunpack.c.0.s8 %v4091
      %v4093 = vlaneseq
      %v4094 = vshrl.u32 %v4093, 7
      %v4095 = vsub.s32 %v4092, %v4094
      %v4096 = vrot.slane %v3657, %v4095
      %v4098 = vunpack.c.l.s4 1983009808
      %v4099 = vunpack.c.0.s8 %v4098
      %v4100 = vlaneseq
      %v4101 = vshrl.u32 %v4100, 7
      %v4102 = vsub.s32 %v4099, %v4101
      %v4103 = vrot.slane %v4089, %v4102
      %v4104 = vcombine.high %v4096, %v4096
      %v4105 = vcombine.high %v4103, %v4103
      %v4106 = vcombine.high %v3662, %v3662
      %v4108 = vunpack.c.l.s4 1983009808
      %v4109 = vunpack.c.0.s8 %v4108
      %v4110 = vlaneseq
      %v4111 = vshrl.u32 %v4110, 7
      %v4112 = vsub.s32 %v4109, %v4111
      %v4113 = vrot.slane %v3662, %v4112
      %v4115 = vunpack.c.l.s4 1983009808
      %v4116 = vunpack.c.0.s8 %v4115
      %v4117 = vlaneseq
      %v4118 = vshrl.u32 %v4117, 7
      %v4119 = vsub.s32 %v4116, %v4118
      %v4120 = vrot.slane %v4106, %v4119
      %v4121 = vcombine.high %v4113, %v4113
      %v4122 = vcombine.high %v4120, %v4120
      %v4123 = vcombine.high %v3665, %v3665
      %v4125 = vunpack.c.l.s4 1983009808
      %v4126 = vunpack.c.0.s8 %v4125
      %v4127 = vlaneseq
      %v4128 = vshrl.u32 %v4127, 7
      %v4129 = vsub.s32 %v4126, %v4128
      %v4130 = vrot.slane %v3665, %v4129
      %v4132 = vunpack.c.l.s4 1983009808
      %v4133 = vunpack.c.0.s8 %v4132
      %v4134 = vlaneseq
      %v4135 = vshrl.u32 %v4134, 7
      %v4136 = vsub.s32 %v4133, %v4135
      %v4137 = vrot.slane %v4123, %v4136
      %v4138 = vcombine.high %v4130, %v4130
      %v4139 = vcombine.high %v4137, %v4137
      %v4140 = vcombine.high %v3670, %v3670
      %v4142 = vunpack.c.l.s4 1983009808
      %v4143 = vunpack.c.0.s8 %v4142
      %v4144 = vlaneseq
      %v4145 = vshrl.u32 %v4144, 7
      %v4146 = vsub.s32 %v4143, %v4145
      %v4147 = vrot.slane %v3670, %v4146
      %v4149 = vunpack.c.l.s4 1983009808
      %v4150 = vunpack.c.0.s8 %v4149
      %v4151 = vlaneseq
      %v4152 = vshrl.u32 %v4151, 7
      %v4153 = vsub.s32 %v4150, %v4152
      %v4154 = vrot.slane %v4140, %v4153
      %v4155 = vcombine.high %v4147, %v4147
      %v4156 = vcombine.high %v4154, %v4154
      %v4157 = vcombine.high %v3673, %v3673
      %v4159 = vunpack.c.l.s4 1983009808
      %v4160 = vunpack.c.0.s8 %v4159
      %v4161 = vlaneseq
      %v4162 = vshrl.u32 %v4161, 7
      %v4163 = vsub.s32 %v4160, %v4162
      %v4164 = vrot.slane %v3673, %v4163
      %v4166 = vunpack.c.l.s4 1983009808
      %v4167 = vunpack.c.0.s8 %v4166
      %v4168 = vlaneseq
      %v4169 = vshrl.u32 %v4168, 7
      %v4170 = vsub.s32 %v4167, %v4169
      %v4171 = vrot.slane %v4157, %v4170
      %v4172 = vcombine.high %v4164, %v4164
      %v4173 = vcombine.high %v4171, %v4171
      %v4174 = vcombine.high %v3678, %v3678
      %v4176 = vunpack.c.l.s4 1983009808
      %v4177 = vunpack.c.0.s8 %v4176
      %v4178 = vlaneseq
      %v4179 = vshrl.u32 %v4178, 7
      %v4180 = vsub.s32 %v4177, %v4179
      %v4181 = vrot.slane %v3678, %v4180
      %v4183 = vunpack.c.l.s4 1983009808
      %v4184 = vunpack.c.0.s8 %v4183
      %v4185 = vlaneseq
      %v4186 = vshrl.u32 %v4185, 7
      %v4187 = vsub.s32 %v4184, %v4186
      %v4188 = vrot.slane %v4174, %v4187
      %v4189 = vcombine.high %v4181, %v4181
      %v4190 = vcombine.high %v4188, %v4188
      %v4191 = vcombine.high %v3681, %v3681
      %v4193 = vunpack.c.l.s4 1983009808
      %v4194 = vunpack.c.0.s8 %v4193
      %v4195 = vlaneseq
      %v4196 = vshrl.u32 %v4195, 7
      %v4197 = vsub.s32 %v4194, %v4196
      %v4198 = vrot.slane %v3681, %v4197
      %v4200 = vunpack.c.l.s4 1983009808
      %v4201 = vunpack.c.0.s8 %v4200
      %v4202 = vlaneseq
      %v4203 = vshrl.u32 %v4202, 7
      %v4204 = vsub.s32 %v4201, %v4203
      %v4205 = vrot.slane %v4191, %v4204
      %v4206 = vcombine.high %v4198, %v4198
      %v4207 = vcombine.high %v4205, %v4205
      %v4208 = vcombine.high %v3686, %v3686
      %v4210 = vunpack.c.l.s4 1983009808
      %v4211 = vunpack.c.0.s8 %v4210
      %v4212 = vlaneseq
      %v4213 = vshrl.u32 %v4212, 7
      %v4214 = vsub.s32 %v4211, %v4213
      %v4215 = vrot.slane %v3686, %v4214
      %v4217 = vunpack.c.l.s4 1983009808
      %v4218 = vunpack.c.0.s8 %v4217
      %v4219 = vlaneseq
      %v4220 = vshrl.u32 %v4219, 7
      %v4221 = vsub.s32 %v4218, %v4220
      %v4222 = vrot.slane %v4208, %v4221
      %v4223 = vcombine.high %v4215, %v4215
      %v4224 = vcombine.high %v4222, %v4222
      %v4225 = vcombine.high %v3689, %v3689
      %v4227 = vunpack.c.l.s4 1983009808
      %v4228 = vunpack.c.0.s8 %v4227
      %v4229 = vlaneseq
      %v4230 = vshrl.u32 %v4229, 7
      %v4231 = vsub.s32 %v4228, %v4230
      %v4232 = vrot.slane %v3689, %v4231
      %v4234 = vunpack.c.l.s4 1983009808
      %v4235 = vunpack.c.0.s8 %v4234
      %v4236 = vlaneseq
      %v4237 = vshrl.u32 %v4236, 7
      %v4238 = vsub.s32 %v4235, %v4237
      %v4239 = vrot.slane %v4225, %v4238
      %v4240 = vcombine.high %v4232, %v4232
      %v4241 = vcombine.high %v4239, %v4239
      %v4242 = vcombine.high %v3694, %v3694
      %v4244 = vunpack.c.l.s4 1983009808
      %v4245 = vunpack.c.0.s8 %v4244
      %v4246 = vlaneseq
      %v4247 = vshrl.u32 %v4246, 7
      %v4248 = vsub.s32 %v4245, %v4247
      %v4249 = vrot.slane %v3694, %v4248
      %v4251 = vunpack.c.l.s4 1983009808
      %v4252 = vunpack.c.0.s8 %v4251
      %v4253 = vlaneseq
      %v4254 = vshrl.u32 %v4253, 7
      %v4255 = vsub.s32 %v4252, %v4254
      %v4256 = vrot.slane %v4242, %v4255
      %v4257 = vcombine.high %v4249, %v4249
      %v4258 = vcombine.high %v4256, %v4256
      %v4259 = vcombine.high %v3697, %v3697
      %v4261 = vunpack.c.l.s4 1983009808
      %v4262 = vunpack.c.0.s8 %v4261
      %v4263 = vlaneseq
      %v4264 = vshrl.u32 %v4263, 7
      %v4265 = vsub.s32 %v4262, %v4264
      %v4266 = vrot.slane %v3697, %v4265
      %v4268 = vunpack.c.l.s4 1983009808
      %v4269 = vunpack.c.0.s8 %v4268
      %v4270 = vlaneseq
      %v4271 = vshrl.u32 %v4270, 7
      %v4272 = vsub.s32 %v4269, %v4271
      %v4273 = vrot.slane %v4259, %v4272
      %v4274 = vcombine.high %v4266, %v4266
      %v4275 = vcombine.high %v4273, %v4273
      %v4404 = vrot.slane %v3739, 7
      %v4405 = vrot.slane %v4404, 2
      %v4406 = vrot.slane %v3747, 7
      %v4407 = vrot.slane %v4406, 2
      %v4408 = vrot.slane %v3746, 7
      %v4409 = vrot.slane %v4408, 2
      %v4410 = vrot.slane %v3748, 7
      %v4411 = vrot.slane %v4410, 2
      %v4412 = vrot.slane %v3756, 7
      %v4413 = vrot.slane %v4412, 2
      %v4414 = vrot.slane %v3764, 7
      %v4415 = vrot.slane %v4414, 2
      %v4416 = vrot.slane %v3763, 7
      %v4417 = vrot.slane %v4416, 2
      %v4418 = vrot.slane %v3765, 7
      %v4419 = vrot.slane %v4418, 2
      %v4420 = vrot.slane %v3807, 7
      %v4421 = vrot.slane %v4420, 2
      %v4422 = vrot.slane %v3815, 7
      %v4423 = vrot.slane %v4422, 2
      %v4424 = vrot.slane %v3814, 7
      %v4425 = vrot.slane %v4424, 2
      %v4426 = vrot.slane %v3816, 7
      %v4427 = vrot.slane %v4426, 2
      %v4428 = vrot.slane %v3824, 7
      %v4429 = vrot.slane %v4428, 2
      %v4430 = vrot.slane %v3832, 7
      %v4431 = vrot.slane %v4430, 2
      %v4432 = vrot.slane %v3831, 7
      %v4433 = vrot.slane %v4432, 2
      %v4434 = vrot.slane %v3833, 7
      %v4435 = vrot.slane %v4434, 2
      %v4436 = vrot.slane %v3875, 7
      %v4437 = vrot.slane %v4436, 2
      %v4438 = vrot.slane %v3883, 7
      %v4439 = vrot.slane %v4438, 2
      %v4440 = vrot.slane %v3882, 7
      %v4441 = vrot.slane %v4440, 2
      %v4442 = vrot.slane %v3884, 7
      %v4443 = vrot.slane %v4442, 2
      %v4444 = vrot.slane %v3892, 7
      %v4445 = vrot.slane %v4444, 2
      %v4446 = vrot.slane %v3900, 7
      %v4447 = vrot.slane %v4446, 2
      %v4448 = vrot.slane %v3899, 7
      %v4449 = vrot.slane %v4448, 2
      %v4450 = vrot.slane %v3901, 7
      %v4451 = vrot.slane %v4450, 2
      %v4452 = vrot.slane %v3943, 7
      %v4453 = vrot.slane %v4452, 2
      %v4454 = vrot.slane %v3951, 7
      %v4455 = vrot.slane %v4454, 2
      %v4456 = vrot.slane %v3950, 7
      %v4457 = vrot.slane %v4456, 2
      %v4458 = vrot.slane %v3952, 7
      %v4459 = vrot.slane %v4458, 2
      %v4460 = vrot.slane %v3960, 7
      %v4461 = vrot.slane %v4460, 2
      %v4462 = vrot.slane %v3968, 7
      %v4463 = vrot.slane %v4462, 2
      %v4464 = vrot.slane %v3967, 7
      %v4465 = vrot.slane %v4464, 2
      %v4466 = vrot.slane %v3969, 7
      %v4467 = vrot.slane %v4466, 2
      %v4468 = vrot.slane %v4011, 7
      %v4469 = vrot.slane %v4468, 2
      %v4470 = vrot.slane %v4019, 7
      %v4471 = vrot.slane %v4470, 2
      %v4472 = vrot.slane %v4018, 7
      %v4473 = vrot.slane %v4472, 2
      %v4474 = vrot.slane %v4020, 7
      %v4475 = vrot.slane %v4474, 2
      %v4476 = vrot.slane %v4028, 7
      %v4477 = vrot.slane %v4476, 2
      %v4478 = vrot.slane %v4036, 7
      %v4479 = vrot.slane %v4478, 2
      %v4480 = vrot.slane %v4035, 7
      %v4481 = vrot.slane %v4480, 2
      %v4482 = vrot.slane %v4037, 7
      %v4483 = vrot.slane %v4482, 2
      %v4484 = vrot.slane %v4079, 7
      %v4485 = vrot.slane %v4484, 2
      %v4486 = vrot.slane %v4087, 7
      %v4487 = vrot.slane %v4486, 2
      %v4488 = vrot.slane %v4086, 7
      %v4489 = vrot.slane %v4488, 2
      %v4490 = vrot.slane %v4088, 7
      %v4491 = vrot.slane %v4490, 2
      %v4492 = vrot.slane %v4096, 7
      %v4493 = vrot.slane %v4492, 2
      %v4494 = vrot.slane %v4104, 7
      %v4495 = vrot.slane %v4494, 2
      %v4496 = vrot.slane %v4103, 7
      %v4497 = vrot.slane %v4496, 2
      %v4498 = vrot.slane %v4105, 7
      %v4499 = vrot.slane %v4498, 2
      %v4500 = vrot.slane %v4147, 7
      %v4501 = vrot.slane %v4500, 2
      %v4502 = vrot.slane %v4155, 7
      %v4503 = vrot.slane %v4502, 2
      %v4504 = vrot.slane %v4154, 7
      %v4505 = vrot.slane %v4504, 2
      %v4506 = vrot.slane %v4156, 7
      %v4507 = vrot.slane %v4506, 2
      %v4508 = vrot.slane %v4164, 7
      %v4509 = vrot.slane %v4508, 2
      %v4510 = vrot.slane %v4172, 7
      %v4511 = vrot.slane %v4510, 2
      %v4512 = vrot.slane %v4171, 7
      %v4513 = vrot.slane %v4512, 2
      %v4514 = vrot.slane %v4173, 7
      %v4515 = vrot.slane %v4514, 2
      %v4516 = vrot.slane %v4215, 7
      %v4517 = vrot.slane %v4516, 2
      %v4518 = vrot.slane %v4223, 7
      %v4519 = vrot.slane %v4518, 2
      %v4520 = vrot.slane %v4222, 7
      %v4521 = vrot.slane %v4520, 2
      %v4522 = vrot.slane %v4224, 7
      %v4523 = vrot.slane %v4522, 2
      %v4524 = vrot.slane %v4232, 7
      %v4525 = vrot.slane %v4524, 2
      %v4526 = vrot.slane %v4240, 7
      %v4527 = vrot.slane %v4526, 2
      %v4528 = vrot.slane %v4239, 7
      %v4529 = vrot.slane %v4528, 2
      %v4530 = vrot.slane %v4241, 7
      %v4531 = vrot.slane %v4530, 2
      %v4596 = vadd.f32 %v3739, %v4405
      %v4597 = vadd.f32 %v3747, %v4407
      %v4598 = vadd.f32 %v3746, %v4409
      %v4599 = vadd.f32 %v3748, %v4411
      %v4600 = vadd.f32 %v3756, %v4413
      %v4601 = vadd.f32 %v3764, %v4415
      %v4602 = vadd.f32 %v3763, %v4417
      %v4603 = vadd.f32 %v3765, %v4419
      %v4604 = vadd.f32 %v3807, %v4421
      %v4605 = vadd.f32 %v3815, %v4423
      %v4606 = vadd.f32 %v3814, %v4425
      %v4607 = vadd.f32 %v3816, %v4427
      %v4608 = vadd.f32 %v3824, %v4429
      %v4609 = vadd.f32 %v3832, %v4431
      %v4610 = vadd.f32 %v3831, %v4433
      %v4611 = vadd.f32 %v3833, %v4435
      %v4612 = vadd.f32 %v3875, %v4437
      %v4613 = vadd.f32 %v3883, %v4439
      %v4614 = vadd.f32 %v3882, %v4441
      %v4615 = vadd.f32 %v3884, %v4443
      %v4616 = vadd.f32 %v3892, %v4445
      %v4617 = vadd.f32 %v3900, %v4447
      %v4618 = vadd.f32 %v3899, %v4449
      %v4619 = vadd.f32 %v3901, %v4451
      %v4620 = vadd.f32 %v3943, %v4453
      %v4621 = vadd.f32 %v3951, %v4455
      %v4622 = vadd.f32 %v3950, %v4457
      %v4623 = vadd.f32 %v3952, %v4459
      %v4624 = vadd.f32 %v3960, %v4461
      %v4625 = vadd.f32 %v3968, %v4463
      %v4626 = vadd.f32 %v3967, %v4465
      %v4627 = vadd.f32 %v3969, %v4467
      %v4628 = vadd.f32 %v4011, %v4469
      %v4629 = vadd.f32 %v4019, %v4471
      %v4630 = vadd.f32 %v4018, %v4473
      %v4631 = vadd.f32 %v4020, %v4475
      %v4632 = vadd.f32 %v4028, %v4477
      %v4633 = vadd.f32 %v4036, %v4479
      %v4634 = vadd.f32 %v4035, %v4481
      %v4635 = vadd.f32 %v4037, %v4483
      %v4636 = vadd.f32 %v4079, %v4485
      %v4637 = vadd.f32 %v4087, %v4487
      %v4638 = vadd.f32 %v4086, %v4489
      %v4639 = vadd.f32 %v4088, %v4491
      %v4640 = vadd.f32 %v4096, %v4493
      %v4641 = vadd.f32 %v4104, %v4495
      %v4642 = vadd.f32 %v4103, %v4497
      %v4643 = vadd.f32 %v4105, %v4499
      %v4644 = vadd.f32 %v4147, %v4501
      %v4645 = vadd.f32 %v4155, %v4503
      %v4646 = vadd.f32 %v4154, %v4505
      %v4647 = vadd.f32 %v4156, %v4507
      %v4648 = vadd.f32 %v4164, %v4509
      %v4649 = vadd.f32 %v4172, %v4511
      %v4650 = vadd.f32 %v4171, %v4513
      %v4651 = vadd.f32 %v4173, %v4515
      %v4652 = vadd.f32 %v4215, %v4517
      %v4653 = vadd.f32 %v4223, %v4519
      %v4654 = vadd.f32 %v4222, %v4521
      %v4655 = vadd.f32 %v4224, %v4523
      %v4656 = vadd.f32 %v4232, %v4525
      %v4657 = vadd.f32 %v4240, %v4527
      %v4658 = vadd.f32 %v4239, %v4529
      %v4659 = vadd.f32 %v4241, %v4531
      %v4660 = vadd.f32 %v4596, %v3773
      %v4661 = vadd.f32 %v4597, %v3781
      %v4662 = vadd.f32 %v4598, %v3780
      %v4663 = vadd.f32 %v4599, %v3782
      %v4664 = vadd.f32 %v4600, %v3790
      %v4665 = vadd.f32 %v4601, %v3798
      %v4666 = vadd.f32 %v4602, %v3797
      %v4667 = vadd.f32 %v4603, %v3799
      %v4668 = vadd.f32 %v4604, %v3841
      %v4669 = vadd.f32 %v4605, %v3849
      %v4670 = vadd.f32 %v4606, %v3848
      %v4671 = vadd.f32 %v4607, %v3850
      %v4672 = vadd.f32 %v4608, %v3858
      %v4673 = vadd.f32 %v4609, %v3866
      %v4674 = vadd.f32 %v4610, %v3865
      %v4675 = vadd.f32 %v4611, %v3867
      %v4676 = vadd.f32 %v4612, %v3909
      %v4677 = vadd.f32 %v4613, %v3917
      %v4678 = vadd.f32 %v4614, %v3916
      %v4679 = vadd.f32 %v4615, %v3918
      %v4680 = vadd.f32 %v4616, %v3926
      %v4681 = vadd.f32 %v4617, %v3934
      %v4682 = vadd.f32 %v4618, %v3933
      %v4683 = vadd.f32 %v4619, %v3935
      %v4684 = vadd.f32 %v4620, %v3977
      %v4685 = vadd.f32 %v4621, %v3985
      %v4686 = vadd.f32 %v4622, %v3984
      %v4687 = vadd.f32 %v4623, %v3986
      %v4688 = vadd.f32 %v4624, %v3994
      %v4689 = vadd.f32 %v4625, %v4002
      %v4690 = vadd.f32 %v4626, %v4001
      %v4691 = vadd.f32 %v4627, %v4003
      %v4692 = vadd.f32 %v4628, %v4045
      %v4693 = vadd.f32 %v4629, %v4053
      %v4694 = vadd.f32 %v4630, %v4052
      %v4695 = vadd.f32 %v4631, %v4054
      %v4696 = vadd.f32 %v4632, %v4062
      %v4697 = vadd.f32 %v4633, %v4070
      %v4698 = vadd.f32 %v4634, %v4069
      %v4699 = vadd.f32 %v4635, %v4071
      %v4700 = vadd.f32 %v4636, %v4113
      %v4701 = vadd.f32 %v4637, %v4121
      %v4702 = vadd.f32 %v4638, %v4120
      %v4703 = vadd.f32 %v4639, %v4122
      %v4704 = vadd.f32 %v4640, %v4130
      %v4705 = vadd.f32 %v4641, %v4138
      %v4706 = vadd.f32 %v4642, %v4137
      %v4707 = vadd.f32 %v4643, %v4139
      %v4708 = vadd.f32 %v4644, %v4181
      %v4709 = vadd.f32 %v4645, %v4189
      %v4710 = vadd.f32 %v4646, %v4188
      %v4711 = vadd.f32 %v4647, %v4190
      %v4712 = vadd.f32 %v4648, %v4198
      %v4713 = vadd.f32 %v4649, %v4206
      %v4714 = vadd.f32 %v4650, %v4205
      %v4715 = vadd.f32 %v4651, %v4207
      %v4716 = vadd.f32 %v4652, %v4249
      %v4717 = vadd.f32 %v4653, %v4257
      %v4718 = vadd.f32 %v4654, %v4256
      %v4719 = vadd.f32 %v4655, %v4258
      %v4720 = vadd.f32 %v4656, %v4266
      %v4721 = vadd.f32 %v4657, %v4274
      %v4722 = vadd.f32 %v4658, %v4273
      %v4723 = vadd.f32 %v4659, %v4275
      %v4724 = vrot.slane %v3773, 7
      %v4725 = vrot.slane %v4724, 2
      %v4726 = vrot.slane %v3781, 7
      %v4727 = vrot.slane %v4726, 2
      %v4728 = vrot.slane %v3780, 7
      %v4729 = vrot.slane %v4728, 2
      %v4730 = vrot.slane %v3782, 7
      %v4731 = vrot.slane %v4730, 2
      %v4732 = vrot.slane %v3790, 7
      %v4733 = vrot.slane %v4732, 2
      %v4734 = vrot.slane %v3798, 7
      %v4735 = vrot.slane %v4734, 2
      %v4736 = vrot.slane %v3797, 7
      %v4737 = vrot.slane %v4736, 2
      %v4738 = vrot.slane %v3799, 7
      %v4739 = vrot.slane %v4738, 2
      %v4740 = vrot.slane %v3841, 7
      %v4741 = vrot.slane %v4740, 2
      %v4742 = vrot.slane %v3849, 7
      %v4743 = vrot.slane %v4742, 2
      %v4744 = vrot.slane %v3848, 7
      %v4745 = vrot.slane %v4744, 2
      %v4746 = vrot.slane %v3850, 7
      %v4747 = vrot.slane %v4746, 2
      %v4748 = vrot.slane %v3858, 7
      %v4749 = vrot.slane %v4748, 2
      %v4750 = vrot.slane %v3866, 7
      %v4751 = vrot.slane %v4750, 2
      %v4752 = vrot.slane %v3865, 7
      %v4753 = vrot.slane %v4752, 2
      %v4754 = vrot.slane %v3867, 7
      %v4755 = vrot.slane %v4754, 2
      %v4756 = vrot.slane %v3909, 7
      %v4757 = vrot.slane %v4756, 2
      %v4758 = vrot.slane %v3917, 7
      %v4759 = vrot.slane %v4758, 2
      %v4760 = vrot.slane %v3916, 7
      %v4761 = vrot.slane %v4760, 2
      %v4762 = vrot.slane %v3918, 7
      %v4763 = vrot.slane %v4762, 2
      %v4764 = vrot.slane %v3926, 7
      %v4765 = vrot.slane %v4764, 2
      %v4766 = vrot.slane %v3934, 7
      %v4767 = vrot.slane %v4766, 2
      %v4768 = vrot.slane %v3933, 7
      %v4769 = vrot.slane %v4768, 2
      %v4770 = vrot.slane %v3935, 7
      %v4771 = vrot.slane %v4770, 2
      %v4772 = vrot.slane %v3977, 7
      %v4773 = vrot.slane %v4772, 2
      %v4774 = vrot.slane %v3985, 7
      %v4775 = vrot.slane %v4774, 2
      %v4776 = vrot.slane %v3984, 7
      %v4777 = vrot.slane %v4776, 2
      %v4778 = vrot.slane %v3986, 7
      %v4779 = vrot.slane %v4778, 2
      %v4780 = vrot.slane %v3994, 7
      %v4781 = vrot.slane %v4780, 2
      %v4782 = vrot.slane %v4002, 7
      %v4783 = vrot.slane %v4782, 2
      %v4784 = vrot.slane %v4001, 7
      %v4785 = vrot.slane %v4784, 2
      %v4786 = vrot.slane %v4003, 7
      %v4787 = vrot.slane %v4786, 2
      %v4788 = vrot.slane %v4045, 7
      %v4789 = vrot.slane %v4788, 2
      %v4790 = vrot.slane %v4053, 7
      %v4791 = vrot.slane %v4790, 2
      %v4792 = vrot.slane %v4052, 7
      %v4793 = vrot.slane %v4792, 2
      %v4794 = vrot.slane %v4054, 7
      %v4795 = vrot.slane %v4794, 2
      %v4796 = vrot.slane %v4062, 7
      %v4797 = vrot.slane %v4796, 2
      %v4798 = vrot.slane %v4070, 7
      %v4799 = vrot.slane %v4798, 2
      %v4800 = vrot.slane %v4069, 7
      %v4801 = vrot.slane %v4800, 2
      %v4802 = vrot.slane %v4071, 7
      %v4803 = vrot.slane %v4802, 2
      %v4804 = vrot.slane %v4113, 7
      %v4805 = vrot.slane %v4804, 2
      %v4806 = vrot.slane %v4121, 7
      %v4807 = vrot.slane %v4806, 2
      %v4808 = vrot.slane %v4120, 7
      %v4809 = vrot.slane %v4808, 2
      %v4810 = vrot.slane %v4122, 7
      %v4811 = vrot.slane %v4810, 2
      %v4812 = vrot.slane %v4130, 7
      %v4813 = vrot.slane %v4812, 2
      %v4814 = vrot.slane %v4138, 7
      %v4815 = vrot.slane %v4814, 2
      %v4816 = vrot.slane %v4137, 7
      %v4817 = vrot.slane %v4816, 2
      %v4818 = vrot.slane %v4139, 7
      %v4819 = vrot.slane %v4818, 2
      %v4820 = vrot.slane %v4181, 7
      %v4821 = vrot.slane %v4820, 2
      %v4822 = vrot.slane %v4189, 7
      %v4823 = vrot.slane %v4822, 2
      %v4824 = vrot.slane %v4188, 7
      %v4825 = vrot.slane %v4824, 2
      %v4826 = vrot.slane %v4190, 7
      %v4827 = vrot.slane %v4826, 2
      %v4828 = vrot.slane %v4198, 7
      %v4829 = vrot.slane %v4828, 2
      %v4830 = vrot.slane %v4206, 7
      %v4831 = vrot.slane %v4830, 2
      %v4832 = vrot.slane %v4205, 7
      %v4833 = vrot.slane %v4832, 2
      %v4834 = vrot.slane %v4207, 7
      %v4835 = vrot.slane %v4834, 2
      %v4836 = vrot.slane %v4249, 7
      %v4837 = vrot.slane %v4836, 2
      %v4838 = vrot.slane %v4257, 7
      %v4839 = vrot.slane %v4838, 2
      %v4840 = vrot.slane %v4256, 7
      %v4841 = vrot.slane %v4840, 2
      %v4842 = vrot.slane %v4258, 7
      %v4843 = vrot.slane %v4842, 2
      %v4844 = vrot.slane %v4266, 7
      %v4845 = vrot.slane %v4844, 2
      %v4846 = vrot.slane %v4274, 7
      %v4847 = vrot.slane %v4846, 2
      %v4848 = vrot.slane %v4273, 7
      %v4849 = vrot.slane %v4848, 2
      %v4850 = vrot.slane %v4275, 7
      %v4851 = vrot.slane %v4850, 2
      %v4916 = vadd.f32 %v4660, %v4725
      %v4917 = vadd.f32 %v4661, %v4727
      %v4918 = vadd.f32 %v4662, %v4729
      %v4919 = vadd.f32 %v4663, %v4731
      %v4920 = vadd.f32 %v4664, %v4733
      %v4921 = vadd.f32 %v4665, %v4735
      %v4922 = vadd.f32 %v4666, %v4737
      %v4923 = vadd.f32 %v4667, %v4739
      %v4924 = vadd.f32 %v4668, %v4741
      %v4925 = vadd.f32 %v4669, %v4743
      %v4926 = vadd.f32 %v4670, %v4745
      %v4927 = vadd.f32 %v4671, %v4747
      %v4928 = vadd.f32 %v4672, %v4749
      %v4929 = vadd.f32 %v4673, %v4751
      %v4930 = vadd.f32 %v4674, %v4753
      %v4931 = vadd.f32 %v4675, %v4755
      %v4932 = vadd.f32 %v4676, %v4757
      %v4933 = vadd.f32 %v4677, %v4759
      %v4934 = vadd.f32 %v4678, %v4761
      %v4935 = vadd.f32 %v4679, %v4763
      %v4936 = vadd.f32 %v4680, %v4765
      %v4937 = vadd.f32 %v4681, %v4767
      %v4938 = vadd.f32 %v4682, %v4769
      %v4939 = vadd.f32 %v4683, %v4771
      %v4940 = vadd.f32 %v4684, %v4773
      %v4941 = vadd.f32 %v4685, %v4775
      %v4942 = vadd.f32 %v4686, %v4777
      %v4943 = vadd.f32 %v4687, %v4779
      %v4944 = vadd.f32 %v4688, %v4781
      %v4945 = vadd.f32 %v4689, %v4783
      %v4946 = vadd.f32 %v4690, %v4785
      %v4947 = vadd.f32 %v4691, %v4787
      %v4948 = vadd.f32 %v4692, %v4789
      %v4949 = vadd.f32 %v4693, %v4791
      %v4950 = vadd.f32 %v4694, %v4793
      %v4951 = vadd.f32 %v4695, %v4795
      %v4952 = vadd.f32 %v4696, %v4797
      %v4953 = vadd.f32 %v4697, %v4799
      %v4954 = vadd.f32 %v4698, %v4801
      %v4955 = vadd.f32 %v4699, %v4803
      %v4956 = vadd.f32 %v4700, %v4805
      %v4957 = vadd.f32 %v4701, %v4807
      %v4958 = vadd.f32 %v4702, %v4809
      %v4959 = vadd.f32 %v4703, %v4811
      %v4960 = vadd.f32 %v4704, %v4813
      %v4961 = vadd.f32 %v4705, %v4815
      %v4962 = vadd.f32 %v4706, %v4817
      %v4963 = vadd.f32 %v4707, %v4819
      %v4964 = vadd.f32 %v4708, %v4821
      %v4965 = vadd.f32 %v4709, %v4823
      %v4966 = vadd.f32 %v4710, %v4825
      %v4967 = vadd.f32 %v4711, %v4827
      %v4968 = vadd.f32 %v4712, %v4829
      %v4969 = vadd.f32 %v4713, %v4831
      %v4970 = vadd.f32 %v4714, %v4833
      %v4971 = vadd.f32 %v4715, %v4835
      %v4972 = vadd.f32 %v4716, %v4837
      %v4973 = vadd.f32 %v4717, %v4839
      %v4974 = vadd.f32 %v4718, %v4841
      %v4975 = vadd.f32 %v4719, %v4843
      %v4976 = vadd.f32 %v4720, %v4845
      %v4977 = vadd.f32 %v4721, %v4847
      %v4978 = vadd.f32 %v4722, %v4849
      %v4979 = vadd.f32 %v4723, %v4851
      %v4980 = vmul.f32 %v4916, 0.25
      %v4981 = vmul.f32 %v4917, 0.25
      %v4982 = vmul.f32 %v4918, 0.25
      %v4983 = vmul.f32 %v4919, 0.25
      %v4984 = vmul.f32 %v4920, 0.25
      %v4985 = vmul.f32 %v4921, 0.25
      %v4986 = vmul.f32 %v4922, 0.25
      %v4987 = vmul.f32 %v4923, 0.25
      %v4988 = vmul.f32 %v4924, 0.25
      %v4989 = vmul.f32 %v4925, 0.25
      %v4990 = vmul.f32 %v4926, 0.25
      %v4991 = vmul.f32 %v4927, 0.25
      %v4992 = vmul.f32 %v4928, 0.25
      %v4993 = vmul.f32 %v4929, 0.25
      %v4994 = vmul.f32 %v4930, 0.25
      %v4995 = vmul.f32 %v4931, 0.25
      %v4996 = vmul.f32 %v4932, 0.25
      %v4997 = vmul.f32 %v4933, 0.25
      %v4998 = vmul.f32 %v4934, 0.25
      %v4999 = vmul.f32 %v4935, 0.25
      %v5000 = vmul.f32 %v4936, 0.25
      %v5001 = vmul.f32 %v4937, 0.25
      %v5002 = vmul.f32 %v4938, 0.25
      %v5003 = vmul.f32 %v4939, 0.25
      %v5004 = vmul.f32 %v4940, 0.25
      %v5005 = vmul.f32 %v4941, 0.25
      %v5006 = vmul.f32 %v4942, 0.25
      %v5007 = vmul.f32 %v4943, 0.25
      %v5008 = vmul.f32 %v4944, 0.25
      %v5009 = vmul.f32 %v4945, 0.25
      %v5010 = vmul.f32 %v4946, 0.25
      %v5011 = vmul.f32 %v4947, 0.25
      %v5012 = vmul.f32 %v4948, 0.25
      %v5013 = vmul.f32 %v4949, 0.25
      %v5014 = vmul.f32 %v4950, 0.25
      %v5015 = vmul.f32 %v4951, 0.25
      %v5016 = vmul.f32 %v4952, 0.25
      %v5017 = vmul.f32 %v4953, 0.25
      %v5018 = vmul.f32 %v4954, 0.25
      %v5019 = vmul.f32 %v4955, 0.25
      %v5020 = vmul.f32 %v4956, 0.25
      %v5021 = vmul.f32 %v4957, 0.25
      %v5022 = vmul.f32 %v4958, 0.25
      %v5023 = vmul.f32 %v4959, 0.25
      %v5024 = vmul.f32 %v4960, 0.25
      %v5025 = vmul.f32 %v4961, 0.25
      %v5026 = vmul.f32 %v4962, 0.25
      %v5027 = vmul.f32 %v4963, 0.25
      %v5028 = vmul.f32 %v4964, 0.25
      %v5029 = vmul.f32 %v4965, 0.25
      %v5030 = vmul.f32 %v4966, 0.25
      %v5031 = vmul.f32 %v4967, 0.25
      %v5032 = vmul.f32 %v4968, 0.25
      %v5033 = vmul.f32 %v4969, 0.25
      %v5034 = vmul.f32 %v4970, 0.25
      %v5035 = vmul.f32 %v4971, 0.25
      %v5036 = vmul.f32 %v4972, 0.25
      %v5037 = vmul.f32 %v4973, 0.25
      %v5038 = vmul.f32 %v4974, 0.25
      %v5039 = vmul.f32 %v4975, 0.25
      %v5040 = vmul.f32 %v4976, 0.25
      %v5041 = vmul.f32 %v4977, 0.25
      %v5042 = vmul.f32 %v4978, 0.25
      %v5043 = vmul.f32 %v4979, 0.25
      %v5076 = vcombine.high %v280, %v280
      %v5078 = vunpack.c.l.s4 1983009808
      %v5079 = vunpack.c.0.s8 %v5078
      %v5080 = vlaneseq
      %v5081 = vshrl.u32 %v5080, 7
      %v5082 = vsub.s32 %v5079, %v5081
      %v5083 = vrot.slane %v280, %v5082
      %v5085 = vunpack.c.l.s4 1983009808
      %v5086 = vunpack.c.0.s8 %v5085
      %v5087 = vlaneseq
      %v5088 = vshrl.u32 %v5087, 7
      %v5089 = vsub.s32 %v5086, %v5088
      %v5090 = vrot.slane %v5076, %v5089
      %v5091 = vcombine.high %v5083, %v5083
      %v5092 = vcombine.high %v5090, %v5090
      %v5093 = vcombine.high %v281, %v281
      %v5095 = vunpack.c.l.s4 1983009808
      %v5096 = vunpack.c.0.s8 %v5095
      %v5097 = vlaneseq
      %v5098 = vshrl.u32 %v5097, 7
      %v5099 = vsub.s32 %v5096, %v5098
      %v5100 = vrot.slane %v281, %v5099
      %v5102 = vunpack.c.l.s4 1983009808
      %v5103 = vunpack.c.0.s8 %v5102
      %v5104 = vlaneseq
      %v5105 = vshrl.u32 %v5104, 7
      %v5106 = vsub.s32 %v5103, %v5105
      %v5107 = vrot.slane %v5093, %v5106
      %v5108 = vcombine.high %v5100, %v5100
      %v5109 = vcombine.high %v5107, %v5107
      %v5110 = vcombine.high %v282, %v282
      %v5112 = vunpack.c.l.s4 1983009808
      %v5113 = vunpack.c.0.s8 %v5112
      %v5114 = vlaneseq
      %v5115 = vshrl.u32 %v5114, 7
      %v5116 = vsub.s32 %v5113, %v5115
      %v5117 = vrot.slane %v282, %v5116
      %v5119 = vunpack.c.l.s4 1983009808
      %v5120 = vunpack.c.0.s8 %v5119
      %v5121 = vlaneseq
      %v5122 = vshrl.u32 %v5121, 7
      %v5123 = vsub.s32 %v5120, %v5122
      %v5124 = vrot.slane %v5110, %v5123
      %v5125 = vcombine.high %v5117, %v5117
      %v5126 = vcombine.high %v5124, %v5124
      %v5127 = vcombine.high %v283, %v283
      %v5129 = vunpack.c.l.s4 1983009808
      %v5130 = vunpack.c.0.s8 %v5129
      %v5131 = vlaneseq
      %v5132 = vshrl.u32 %v5131, 7
      %v5133 = vsub.s32 %v5130, %v5132
      %v5134 = vrot.slane %v283, %v5133
      %v5136 = vunpack.c.l.s4 1983009808
      %v5137 = vunpack.c.0.s8 %v5136
      %v5138 = vlaneseq
      %v5139 = vshrl.u32 %v5138, 7
      %v5140 = vsub.s32 %v5137, %v5139
      %v5141 = vrot.slane %v5127, %v5140
      %v5142 = vcombine.high %v5134, %v5134
      %v5143 = vcombine.high %v5141, %v5141
      %v5144 = vcombine.high %v284, %v284
      %v5146 = vunpack.c.l.s4 1983009808
      %v5147 = vunpack.c.0.s8 %v5146
      %v5148 = vlaneseq
      %v5149 = vshrl.u32 %v5148, 7
      %v5150 = vsub.s32 %v5147, %v5149
      %v5151 = vrot.slane %v284, %v5150
      %v5153 = vunpack.c.l.s4 1983009808
      %v5154 = vunpack.c.0.s8 %v5153
      %v5155 = vlaneseq
      %v5156 = vshrl.u32 %v5155, 7
      %v5157 = vsub.s32 %v5154, %v5156
      %v5158 = vrot.slane %v5144, %v5157
      %v5159 = vcombine.high %v5151, %v5151
      %v5160 = vcombine.high %v5158, %v5158
      %v5161 = vcombine.high %v285, %v285
      %v5163 = vunpack.c.l.s4 1983009808
      %v5164 = vunpack.c.0.s8 %v5163
      %v5165 = vlaneseq
      %v5166 = vshrl.u32 %v5165, 7
      %v5167 = vsub.s32 %v5164, %v5166
      %v5168 = vrot.slane %v285, %v5167
      %v5170 = vunpack.c.l.s4 1983009808
      %v5171 = vunpack.c.0.s8 %v5170
      %v5172 = vlaneseq
      %v5173 = vshrl.u32 %v5172, 7
      %v5174 = vsub.s32 %v5171, %v5173
      %v5175 = vrot.slane %v5161, %v5174
      %v5176 = vcombine.high %v5168, %v5168
      %v5177 = vcombine.high %v5175, %v5175
      %v5178 = vcombine.high %v286, %v286
      %v5180 = vunpack.c.l.s4 1983009808
      %v5181 = vunpack.c.0.s8 %v5180
      %v5182 = vlaneseq
      %v5183 = vshrl.u32 %v5182, 7
      %v5184 = vsub.s32 %v5181, %v5183
      %v5185 = vrot.slane %v286, %v5184
      %v5187 = vunpack.c.l.s4 1983009808
      %v5188 = vunpack.c.0.s8 %v5187
      %v5189 = vlaneseq
      %v5190 = vshrl.u32 %v5189, 7
      %v5191 = vsub.s32 %v5188, %v5190
      %v5192 = vrot.slane %v5178, %v5191
      %v5193 = vcombine.high %v5185, %v5185
      %v5194 = vcombine.high %v5192, %v5192
      %v5195 = vcombine.high %v287, %v287
      %v5197 = vunpack.c.l.s4 1983009808
      %v5198 = vunpack.c.0.s8 %v5197
      %v5199 = vlaneseq
      %v5200 = vshrl.u32 %v5199, 7
      %v5201 = vsub.s32 %v5198, %v5200
      %v5202 = vrot.slane %v287, %v5201
      %v5204 = vunpack.c.l.s4 1983009808
      %v5205 = vunpack.c.0.s8 %v5204
      %v5206 = vlaneseq
      %v5207 = vshrl.u32 %v5206, 7
      %v5208 = vsub.s32 %v5205, %v5207
      %v5209 = vrot.slane %v5195, %v5208
      %v5210 = vcombine.high %v5202, %v5202
      %v5211 = vcombine.high %v5209, %v5209
      %v5212 = vcombine.high %v288, %v288
      %v5214 = vunpack.c.l.s4 1983009808
      %v5215 = vunpack.c.0.s8 %v5214
      %v5216 = vlaneseq
      %v5217 = vshrl.u32 %v5216, 7
      %v5218 = vsub.s32 %v5215, %v5217
      %v5219 = vrot.slane %v288, %v5218
      %v5221 = vunpack.c.l.s4 1983009808
      %v5222 = vunpack.c.0.s8 %v5221
      %v5223 = vlaneseq
      %v5224 = vshrl.u32 %v5223, 7
      %v5225 = vsub.s32 %v5222, %v5224
      %v5226 = vrot.slane %v5212, %v5225
      %v5227 = vcombine.high %v5219, %v5219
      %v5228 = vcombine.high %v5226, %v5226
      %v5229 = vcombine.high %v289, %v289
      %v5231 = vunpack.c.l.s4 1983009808
      %v5232 = vunpack.c.0.s8 %v5231
      %v5233 = vlaneseq
      %v5234 = vshrl.u32 %v5233, 7
      %v5235 = vsub.s32 %v5232, %v5234
      %v5236 = vrot.slane %v289, %v5235
      %v5238 = vunpack.c.l.s4 1983009808
      %v5239 = vunpack.c.0.s8 %v5238
      %v5240 = vlaneseq
      %v5241 = vshrl.u32 %v5240, 7
      %v5242 = vsub.s32 %v5239, %v5241
      %v5243 = vrot.slane %v5229, %v5242
      %v5244 = vcombine.high %v5236, %v5236
      %v5245 = vcombine.high %v5243, %v5243
      %v5246 = vcombine.high %v290, %v290
      %v5248 = vunpack.c.l.s4 1983009808
      %v5249 = vunpack.c.0.s8 %v5248
      %v5250 = vlaneseq
      %v5251 = vshrl.u32 %v5250, 7
      %v5252 = vsub.s32 %v5249, %v5251
      %v5253 = vrot.slane %v290, %v5252
      %v5255 = vunpack.c.l.s4 1983009808
      %v5256 = vunpack.c.0.s8 %v5255
      %v5257 = vlaneseq
      %v5258 = vshrl.u32 %v5257, 7
      %v5259 = vsub.s32 %v5256, %v5258
      %v5260 = vrot.slane %v5246, %v5259
      %v5261 = vcombine.high %v5253, %v5253
      %v5262 = vcombine.high %v5260, %v5260
      %v5263 = vcombine.high %v291, %v291
      %v5265 = vunpack.c.l.s4 1983009808
      %v5266 = vunpack.c.0.s8 %v5265
      %v5267 = vlaneseq
      %v5268 = vshrl.u32 %v5267, 7
      %v5269 = vsub.s32 %v5266, %v5268
      %v5270 = vrot.slane %v291, %v5269
      %v5272 = vunpack.c.l.s4 1983009808
      %v5273 = vunpack.c.0.s8 %v5272
      %v5274 = vlaneseq
      %v5275 = vshrl.u32 %v5274, 7
      %v5276 = vsub.s32 %v5273, %v5275
      %v5277 = vrot.slane %v5263, %v5276
      %v5278 = vcombine.high %v5270, %v5270
      %v5279 = vcombine.high %v5277, %v5277
      %v5280 = vcombine.high %v292, %v292
      %v5282 = vunpack.c.l.s4 1983009808
      %v5283 = vunpack.c.0.s8 %v5282
      %v5284 = vlaneseq
      %v5285 = vshrl.u32 %v5284, 7
      %v5286 = vsub.s32 %v5283, %v5285
      %v5287 = vrot.slane %v292, %v5286
      %v5289 = vunpack.c.l.s4 1983009808
      %v5290 = vunpack.c.0.s8 %v5289
      %v5291 = vlaneseq
      %v5292 = vshrl.u32 %v5291, 7
      %v5293 = vsub.s32 %v5290, %v5292
      %v5294 = vrot.slane %v5280, %v5293
      %v5295 = vcombine.high %v5287, %v5287
      %v5296 = vcombine.high %v5294, %v5294
      %v5297 = vcombine.high %v293, %v293
      %v5299 = vunpack.c.l.s4 1983009808
      %v5300 = vunpack.c.0.s8 %v5299
      %v5301 = vlaneseq
      %v5302 = vshrl.u32 %v5301, 7
      %v5303 = vsub.s32 %v5300, %v5302
      %v5304 = vrot.slane %v293, %v5303
      %v5306 = vunpack.c.l.s4 1983009808
      %v5307 = vunpack.c.0.s8 %v5306
      %v5308 = vlaneseq
      %v5309 = vshrl.u32 %v5308, 7
      %v5310 = vsub.s32 %v5307, %v5309
      %v5311 = vrot.slane %v5297, %v5310
      %v5312 = vcombine.high %v5304, %v5304
      %v5313 = vcombine.high %v5311, %v5311
      %v5314 = vcombine.high %v294, %v294
      %v5316 = vunpack.c.l.s4 1983009808
      %v5317 = vunpack.c.0.s8 %v5316
      %v5318 = vlaneseq
      %v5319 = vshrl.u32 %v5318, 7
      %v5320 = vsub.s32 %v5317, %v5319
      %v5321 = vrot.slane %v294, %v5320
      %v5323 = vunpack.c.l.s4 1983009808
      %v5324 = vunpack.c.0.s8 %v5323
      %v5325 = vlaneseq
      %v5326 = vshrl.u32 %v5325, 7
      %v5327 = vsub.s32 %v5324, %v5326
      %v5328 = vrot.slane %v5314, %v5327
      %v5329 = vcombine.high %v5321, %v5321
      %v5330 = vcombine.high %v5328, %v5328
      %v5331 = vcombine.high %v295, %v295
      %v5333 = vunpack.c.l.s4 1983009808
      %v5334 = vunpack.c.0.s8 %v5333
      %v5335 = vlaneseq
      %v5336 = vshrl.u32 %v5335, 7
      %v5337 = vsub.s32 %v5334, %v5336
      %v5338 = vrot.slane %v295, %v5337
      %v5340 = vunpack.c.l.s4 1983009808
      %v5341 = vunpack.c.0.s8 %v5340
      %v5342 = vlaneseq
      %v5343 = vshrl.u32 %v5342, 7
      %v5344 = vsub.s32 %v5341, %v5343
      %v5345 = vrot.slane %v5331, %v5344
      %v5346 = vcombine.high %v5338, %v5338
      %v5347 = vcombine.high %v5345, %v5345
      %v5348 = vcombine.high %v296, %v296
      %v5350 = vunpack.c.l.s4 1983009808
      %v5351 = vunpack.c.0.s8 %v5350
      %v5352 = vlaneseq
      %v5353 = vshrl.u32 %v5352, 7
      %v5354 = vsub.s32 %v5351, %v5353
      %v5355 = vrot.slane %v296, %v5354
      %v5357 = vunpack.c.l.s4 1983009808
      %v5358 = vunpack.c.0.s8 %v5357
      %v5359 = vlaneseq
      %v5360 = vshrl.u32 %v5359, 7
      %v5361 = vsub.s32 %v5358, %v5360
      %v5362 = vrot.slane %v5348, %v5361
      %v5363 = vcombine.high %v5355, %v5355
      %v5364 = vcombine.high %v5362, %v5362
      %v5365 = vcombine.high %v297, %v297
      %v5367 = vunpack.c.l.s4 1983009808
      %v5368 = vunpack.c.0.s8 %v5367
      %v5369 = vlaneseq
      %v5370 = vshrl.u32 %v5369, 7
      %v5371 = vsub.s32 %v5368, %v5370
      %v5372 = vrot.slane %v297, %v5371
      %v5374 = vunpack.c.l.s4 1983009808
      %v5375 = vunpack.c.0.s8 %v5374
      %v5376 = vlaneseq
      %v5377 = vshrl.u32 %v5376, 7
      %v5378 = vsub.s32 %v5375, %v5377
      %v5379 = vrot.slane %v5365, %v5378
      %v5380 = vcombine.high %v5372, %v5372
      %v5381 = vcombine.high %v5379, %v5379
      %v5382 = vcombine.high %v298, %v298
      %v5384 = vunpack.c.l.s4 1983009808
      %v5385 = vunpack.c.0.s8 %v5384
      %v5386 = vlaneseq
      %v5387 = vshrl.u32 %v5386, 7
      %v5388 = vsub.s32 %v5385, %v5387
      %v5389 = vrot.slane %v298, %v5388
      %v5391 = vunpack.c.l.s4 1983009808
      %v5392 = vunpack.c.0.s8 %v5391
      %v5393 = vlaneseq
      %v5394 = vshrl.u32 %v5393, 7
      %v5395 = vsub.s32 %v5392, %v5394
      %v5396 = vrot.slane %v5382, %v5395
      %v5397 = vcombine.high %v5389, %v5389
      %v5398 = vcombine.high %v5396, %v5396
      %v5399 = vcombine.high %v299, %v299
      %v5401 = vunpack.c.l.s4 1983009808
      %v5402 = vunpack.c.0.s8 %v5401
      %v5403 = vlaneseq
      %v5404 = vshrl.u32 %v5403, 7
      %v5405 = vsub.s32 %v5402, %v5404
      %v5406 = vrot.slane %v299, %v5405
      %v5408 = vunpack.c.l.s4 1983009808
      %v5409 = vunpack.c.0.s8 %v5408
      %v5410 = vlaneseq
      %v5411 = vshrl.u32 %v5410, 7
      %v5412 = vsub.s32 %v5409, %v5411
      %v5413 = vrot.slane %v5399, %v5412
      %v5414 = vcombine.high %v5406, %v5406
      %v5415 = vcombine.high %v5413, %v5413
      %v5416 = vcombine.high %v300, %v300
      %v5418 = vunpack.c.l.s4 1983009808
      %v5419 = vunpack.c.0.s8 %v5418
      %v5420 = vlaneseq
      %v5421 = vshrl.u32 %v5420, 7
      %v5422 = vsub.s32 %v5419, %v5421
      %v5423 = vrot.slane %v300, %v5422
      %v5425 = vunpack.c.l.s4 1983009808
      %v5426 = vunpack.c.0.s8 %v5425
      %v5427 = vlaneseq
      %v5428 = vshrl.u32 %v5427, 7
      %v5429 = vsub.s32 %v5426, %v5428
      %v5430 = vrot.slane %v5416, %v5429
      %v5431 = vcombine.high %v5423, %v5423
      %v5432 = vcombine.high %v5430, %v5430
      %v5433 = vcombine.high %v301, %v301
      %v5435 = vunpack.c.l.s4 1983009808
      %v5436 = vunpack.c.0.s8 %v5435
      %v5437 = vlaneseq
      %v5438 = vshrl.u32 %v5437, 7
      %v5439 = vsub.s32 %v5436, %v5438
      %v5440 = vrot.slane %v301, %v5439
      %v5442 = vunpack.c.l.s4 1983009808
      %v5443 = vunpack.c.0.s8 %v5442
      %v5444 = vlaneseq
      %v5445 = vshrl.u32 %v5444, 7
      %v5446 = vsub.s32 %v5443, %v5445
      %v5447 = vrot.slane %v5433, %v5446
      %v5448 = vcombine.high %v5440, %v5440
      %v5449 = vcombine.high %v5447, %v5447
      %v5450 = vcombine.high %v302, %v302
      %v5452 = vunpack.c.l.s4 1983009808
      %v5453 = vunpack.c.0.s8 %v5452
      %v5454 = vlaneseq
      %v5455 = vshrl.u32 %v5454, 7
      %v5456 = vsub.s32 %v5453, %v5455
      %v5457 = vrot.slane %v302, %v5456
      %v5459 = vunpack.c.l.s4 1983009808
      %v5460 = vunpack.c.0.s8 %v5459
      %v5461 = vlaneseq
      %v5462 = vshrl.u32 %v5461, 7
      %v5463 = vsub.s32 %v5460, %v5462
      %v5464 = vrot.slane %v5450, %v5463
      %v5465 = vcombine.high %v5457, %v5457
      %v5466 = vcombine.high %v5464, %v5464
      %v5467 = vcombine.high %v303, %v303
      %v5469 = vunpack.c.l.s4 1983009808
      %v5470 = vunpack.c.0.s8 %v5469
      %v5471 = vlaneseq
      %v5472 = vshrl.u32 %v5471, 7
      %v5473 = vsub.s32 %v5470, %v5472
      %v5474 = vrot.slane %v303, %v5473
      %v5476 = vunpack.c.l.s4 1983009808
      %v5477 = vunpack.c.0.s8 %v5476
      %v5478 = vlaneseq
      %v5479 = vshrl.u32 %v5478, 7
      %v5480 = vsub.s32 %v5477, %v5479
      %v5481 = vrot.slane %v5467, %v5480
      %v5482 = vcombine.high %v5474, %v5474
      %v5483 = vcombine.high %v5481, %v5481
      %v5484 = vcombine.high %v304, %v304
      %v5486 = vunpack.c.l.s4 1983009808
      %v5487 = vunpack.c.0.s8 %v5486
      %v5488 = vlaneseq
      %v5489 = vshrl.u32 %v5488, 7
      %v5490 = vsub.s32 %v5487, %v5489
      %v5491 = vrot.slane %v304, %v5490
      %v5493 = vunpack.c.l.s4 1983009808
      %v5494 = vunpack.c.0.s8 %v5493
      %v5495 = vlaneseq
      %v5496 = vshrl.u32 %v5495, 7
      %v5497 = vsub.s32 %v5494, %v5496
      %v5498 = vrot.slane %v5484, %v5497
      %v5499 = vcombine.high %v5491, %v5491
      %v5500 = vcombine.high %v5498, %v5498
      %v5501 = vcombine.high %v305, %v305
      %v5503 = vunpack.c.l.s4 1983009808
      %v5504 = vunpack.c.0.s8 %v5503
      %v5505 = vlaneseq
      %v5506 = vshrl.u32 %v5505, 7
      %v5507 = vsub.s32 %v5504, %v5506
      %v5508 = vrot.slane %v305, %v5507
      %v5510 = vunpack.c.l.s4 1983009808
      %v5511 = vunpack.c.0.s8 %v5510
      %v5512 = vlaneseq
      %v5513 = vshrl.u32 %v5512, 7
      %v5514 = vsub.s32 %v5511, %v5513
      %v5515 = vrot.slane %v5501, %v5514
      %v5516 = vcombine.high %v5508, %v5508
      %v5517 = vcombine.high %v5515, %v5515
      %v5518 = vcombine.high %v306, %v306
      %v5520 = vunpack.c.l.s4 1983009808
      %v5521 = vunpack.c.0.s8 %v5520
      %v5522 = vlaneseq
      %v5523 = vshrl.u32 %v5522, 7
      %v5524 = vsub.s32 %v5521, %v5523
      %v5525 = vrot.slane %v306, %v5524
      %v5527 = vunpack.c.l.s4 1983009808
      %v5528 = vunpack.c.0.s8 %v5527
      %v5529 = vlaneseq
      %v5530 = vshrl.u32 %v5529, 7
      %v5531 = vsub.s32 %v5528, %v5530
      %v5532 = vrot.slane %v5518, %v5531
      %v5533 = vcombine.high %v5525, %v5525
      %v5534 = vcombine.high %v5532, %v5532
      %v5535 = vcombine.high %v307, %v307
      %v5537 = vunpack.c.l.s4 1983009808
      %v5538 = vunpack.c.0.s8 %v5537
      %v5539 = vlaneseq
      %v5540 = vshrl.u32 %v5539, 7
      %v5541 = vsub.s32 %v5538, %v5540
      %v5542 = vrot.slane %v307, %v5541
      %v5544 = vunpack.c.l.s4 1983009808
      %v5545 = vunpack.c.0.s8 %v5544
      %v5546 = vlaneseq
      %v5547 = vshrl.u32 %v5546, 7
      %v5548 = vsub.s32 %v5545, %v5547
      %v5549 = vrot.slane %v5535, %v5548
      %v5550 = vcombine.high %v5542, %v5542
      %v5551 = vcombine.high %v5549, %v5549
      %v5552 = vcombine.high %v308, %v308
      %v5554 = vunpack.c.l.s4 1983009808
      %v5555 = vunpack.c.0.s8 %v5554
      %v5556 = vlaneseq
      %v5557 = vshrl.u32 %v5556, 7
      %v5558 = vsub.s32 %v5555, %v5557
      %v5559 = vrot.slane %v308, %v5558
      %v5561 = vunpack.c.l.s4 1983009808
      %v5562 = vunpack.c.0.s8 %v5561
      %v5563 = vlaneseq
      %v5564 = vshrl.u32 %v5563, 7
      %v5565 = vsub.s32 %v5562, %v5564
      %v5566 = vrot.slane %v5552, %v5565
      %v5567 = vcombine.high %v5559, %v5559
      %v5568 = vcombine.high %v5566, %v5566
      %v5569 = vcombine.high %v309, %v309
      %v5571 = vunpack.c.l.s4 1983009808
      %v5572 = vunpack.c.0.s8 %v5571
      %v5573 = vlaneseq
      %v5574 = vshrl.u32 %v5573, 7
      %v5575 = vsub.s32 %v5572, %v5574
      %v5576 = vrot.slane %v309, %v5575
      %v5578 = vunpack.c.l.s4 1983009808
      %v5579 = vunpack.c.0.s8 %v5578
      %v5580 = vlaneseq
      %v5581 = vshrl.u32 %v5580, 7
      %v5582 = vsub.s32 %v5579, %v5581
      %v5583 = vrot.slane %v5569, %v5582
      %v5584 = vcombine.high %v5576, %v5576
      %v5585 = vcombine.high %v5583, %v5583
      %v5586 = vcombine.high %v310, %v310
      %v5588 = vunpack.c.l.s4 1983009808
      %v5589 = vunpack.c.0.s8 %v5588
      %v5590 = vlaneseq
      %v5591 = vshrl.u32 %v5590, 7
      %v5592 = vsub.s32 %v5589, %v5591
      %v5593 = vrot.slane %v310, %v5592
      %v5595 = vunpack.c.l.s4 1983009808
      %v5596 = vunpack.c.0.s8 %v5595
      %v5597 = vlaneseq
      %v5598 = vshrl.u32 %v5597, 7
      %v5599 = vsub.s32 %v5596, %v5598
      %v5600 = vrot.slane %v5586, %v5599
      %v5601 = vcombine.high %v5593, %v5593
      %v5602 = vcombine.high %v5600, %v5600
      %v5603 = vcombine.high %v311, %v311
      %v5605 = vunpack.c.l.s4 1983009808
      %v5606 = vunpack.c.0.s8 %v5605
      %v5607 = vlaneseq
      %v5608 = vshrl.u32 %v5607, 7
      %v5609 = vsub.s32 %v5606, %v5608
      %v5610 = vrot.slane %v311, %v5609
      %v5612 = vunpack.c.l.s4 1983009808
      %v5613 = vunpack.c.0.s8 %v5612
      %v5614 = vlaneseq
      %v5615 = vshrl.u32 %v5614, 7
      %v5616 = vsub.s32 %v5613, %v5615
      %v5617 = vrot.slane %v5603, %v5616
      %v5618 = vcombine.high %v5610, %v5610
      %v5619 = vcombine.high %v5617, %v5617
      %v5748 = vrot.slane %v5083, 7
      %v5749 = vrot.slane %v5748, 2
      %v5750 = vrot.slane %v5091, 7
      %v5751 = vrot.slane %v5750, 2
      %v5752 = vrot.slane %v5090, 7
      %v5753 = vrot.slane %v5752, 2
      %v5754 = vrot.slane %v5092, 7
      %v5755 = vrot.slane %v5754, 2
      %v5756 = vrot.slane %v5100, 7
      %v5757 = vrot.slane %v5756, 2
      %v5758 = vrot.slane %v5108, 7
      %v5759 = vrot.slane %v5758, 2
      %v5760 = vrot.slane %v5107, 7
      %v5761 = vrot.slane %v5760, 2
      %v5762 = vrot.slane %v5109, 7
      %v5763 = vrot.slane %v5762, 2
      %v5764 = vrot.slane %v5151, 7
      %v5765 = vrot.slane %v5764, 2
      %v5766 = vrot.slane %v5159, 7
      %v5767 = vrot.slane %v5766, 2
      %v5768 = vrot.slane %v5158, 7
      %v5769 = vrot.slane %v5768, 2
      %v5770 = vrot.slane %v5160, 7
      %v5771 = vrot.slane %v5770, 2
      %v5772 = vrot.slane %v5168, 7
      %v5773 = vrot.slane %v5772, 2
      %v5774 = vrot.slane %v5176, 7
      %v5775 = vrot.slane %v5774, 2
      %v5776 = vrot.slane %v5175, 7
      %v5777 = vrot.slane %v5776, 2
      %v5778 = vrot.slane %v5177, 7
      %v5779 = vrot.slane %v5778, 2
      %v5780 = vrot.slane %v5219, 7
      %v5781 = vrot.slane %v5780, 2
      %v5782 = vrot.slane %v5227, 7
      %v5783 = vrot.slane %v5782, 2
      %v5784 = vrot.slane %v5226, 7
      %v5785 = vrot.slane %v5784, 2
      %v5786 = vrot.slane %v5228, 7
      %v5787 = vrot.slane %v5786, 2
      %v5788 = vrot.slane %v5236, 7
      %v5789 = vrot.slane %v5788, 2
      %v5790 = vrot.slane %v5244, 7
      %v5791 = vrot.slane %v5790, 2
      %v5792 = vrot.slane %v5243, 7
      %v5793 = vrot.slane %v5792, 2
      %v5794 = vrot.slane %v5245, 7
      %v5795 = vrot.slane %v5794, 2
      %v5796 = vrot.slane %v5287, 7
      %v5797 = vrot.slane %v5796, 2
      %v5798 = vrot.slane %v5295, 7
      %v5799 = vrot.slane %v5798, 2
      %v5800 = vrot.slane %v5294, 7
      %v5801 = vrot.slane %v5800, 2
      %v5802 = vrot.slane %v5296, 7
      %v5803 = vrot.slane %v5802, 2
      %v5804 = vrot.slane %v5304, 7
      %v5805 = vrot.slane %v5804, 2
      %v5806 = vrot.slane %v5312, 7
      %v5807 = vrot.slane %v5806, 2
      %v5808 = vrot.slane %v5311, 7
      %v5809 = vrot.slane %v5808, 2
      %v5810 = vrot.slane %v5313, 7
      %v5811 = vrot.slane %v5810, 2
      %v5812 = vrot.slane %v5355, 7
      %v5813 = vrot.slane %v5812, 2
      %v5814 = vrot.slane %v5363, 7
      %v5815 = vrot.slane %v5814, 2
      %v5816 = vrot.slane %v5362, 7
      %v5817 = vrot.slane %v5816, 2
      %v5818 = vrot.slane %v5364, 7
      %v5819 = vrot.slane %v5818, 2
      %v5820 = vrot.slane %v5372, 7
      %v5821 = vrot.slane %v5820, 2
      %v5822 = vrot.slane %v5380, 7
      %v5823 = vrot.slane %v5822, 2
      %v5824 = vrot.slane %v5379, 7
      %v5825 = vrot.slane %v5824, 2
      %v5826 = vrot.slane %v5381, 7
      %v5827 = vrot.slane %v5826, 2
      %v5828 = vrot.slane %v5423, 7
      %v5829 = vrot.slane %v5828, 2
      %v5830 = vrot.slane %v5431, 7
      %v5831 = vrot.slane %v5830, 2
      %v5832 = vrot.slane %v5430, 7
      %v5833 = vrot.slane %v5832, 2
      %v5834 = vrot.slane %v5432, 7
      %v5835 = vrot.slane %v5834, 2
      %v5836 = vrot.slane %v5440, 7
      %v5837 = vrot.slane %v5836, 2
      %v5838 = vrot.slane %v5448, 7
      %v5839 = vrot.slane %v5838, 2
      %v5840 = vrot.slane %v5447, 7
      %v5841 = vrot.slane %v5840, 2
      %v5842 = vrot.slane %v5449, 7
      %v5843 = vrot.slane %v5842, 2
      %v5844 = vrot.slane %v5491, 7
      %v5845 = vrot.slane %v5844, 2
      %v5846 = vrot.slane %v5499, 7
      %v5847 = vrot.slane %v5846, 2
      %v5848 = vrot.slane %v5498, 7
      %v5849 = vrot.slane %v5848, 2
      %v5850 = vrot.slane %v5500, 7
      %v5851 = vrot.slane %v5850, 2
      %v5852 = vrot.slane %v5508, 7
      %v5853 = vrot.slane %v5852, 2
      %v5854 = vrot.slane %v5516, 7
      %v5855 = vrot.slane %v5854, 2
      %v5856 = vrot.slane %v5515, 7
      %v5857 = vrot.slane %v5856, 2
      %v5858 = vrot.slane %v5517, 7
      %v5859 = vrot.slane %v5858, 2
      %v5860 = vrot.slane %v5559, 7
      %v5861 = vrot.slane %v5860, 2
      %v5862 = vrot.slane %v5567, 7
      %v5863 = vrot.slane %v5862, 2
      %v5864 = vrot.slane %v5566, 7
      %v5865 = vrot.slane %v5864, 2
      %v5866 = vrot.slane %v5568, 7
      %v5867 = vrot.slane %v5866, 2
      %v5868 = vrot.slane %v5576, 7
      %v5869 = vrot.slane %v5868, 2
      %v5870 = vrot.slane %v5584, 7
      %v5871 = vrot.slane %v5870, 2
      %v5872 = vrot.slane %v5583, 7
      %v5873 = vrot.slane %v5872, 2
      %v5874 = vrot.slane %v5585, 7
      %v5875 = vrot.slane %v5874, 2
      %v5940 = vadd.f32 %v5083, %v5749
      %v5941 = vadd.f32 %v5091, %v5751
      %v5942 = vadd.f32 %v5090, %v5753
      %v5943 = vadd.f32 %v5092, %v5755
      %v5944 = vadd.f32 %v5100, %v5757
      %v5945 = vadd.f32 %v5108, %v5759
      %v5946 = vadd.f32 %v5107, %v5761
      %v5947 = vadd.f32 %v5109, %v5763
      %v5948 = vadd.f32 %v5151, %v5765
      %v5949 = vadd.f32 %v5159, %v5767
      %v5950 = vadd.f32 %v5158, %v5769
      %v5951 = vadd.f32 %v5160, %v5771
      %v5952 = vadd.f32 %v5168, %v5773
      %v5953 = vadd.f32 %v5176, %v5775
      %v5954 = vadd.f32 %v5175, %v5777
      %v5955 = vadd.f32 %v5177, %v5779
      %v5956 = vadd.f32 %v5219, %v5781
      %v5957 = vadd.f32 %v5227, %v5783
      %v5958 = vadd.f32 %v5226, %v5785
      %v5959 = vadd.f32 %v5228, %v5787
      %v5960 = vadd.f32 %v5236, %v5789
      %v5961 = vadd.f32 %v5244, %v5791
      %v5962 = vadd.f32 %v5243, %v5793
      %v5963 = vadd.f32 %v5245, %v5795
      %v5964 = vadd.f32 %v5287, %v5797
      %v5965 = vadd.f32 %v5295, %v5799
      %v5966 = vadd.f32 %v5294, %v5801
      %v5967 = vadd.f32 %v5296, %v5803
      %v5968 = vadd.f32 %v5304, %v5805
      %v5969 = vadd.f32 %v5312, %v5807
      %v5970 = vadd.f32 %v5311, %v5809
      %v5971 = vadd.f32 %v5313, %v5811
      %v5972 = vadd.f32 %v5355, %v5813
      %v5973 = vadd.f32 %v5363, %v5815
      %v5974 = vadd.f32 %v5362, %v5817
      %v5975 = vadd.f32 %v5364, %v5819
      %v5976 = vadd.f32 %v5372, %v5821
      %v5977 = vadd.f32 %v5380, %v5823
      %v5978 = vadd.f32 %v5379, %v5825
      %v5979 = vadd.f32 %v5381, %v5827
      %v5980 = vadd.f32 %v5423, %v5829
      %v5981 = vadd.f32 %v5431, %v5831
      %v5982 = vadd.f32 %v5430, %v5833
      %v5983 = vadd.f32 %v5432, %v5835
      %v5984 = vadd.f32 %v5440, %v5837
      %v5985 = vadd.f32 %v5448, %v5839
      %v5986 = vadd.f32 %v5447, %v5841
      %v5987 = vadd.f32 %v5449, %v5843
      %v5988 = vadd.f32 %v5491, %v5845
      %v5989 = vadd.f32 %v5499, %v5847
      %v5990 = vadd.f32 %v5498, %v5849
      %v5991 = vadd.f32 %v5500, %v5851
      %v5992 = vadd.f32 %v5508, %v5853
      %v5993 = vadd.f32 %v5516, %v5855
      %v5994 = vadd.f32 %v5515, %v5857
      %v5995 = vadd.f32 %v5517, %v5859
      %v5996 = vadd.f32 %v5559, %v5861
      %v5997 = vadd.f32 %v5567, %v5863
      %v5998 = vadd.f32 %v5566, %v5865
      %v5999 = vadd.f32 %v5568, %v5867
      %v6000 = vadd.f32 %v5576, %v5869
      %v6001 = vadd.f32 %v5584, %v5871
      %v6002 = vadd.f32 %v5583, %v5873
      %v6003 = vadd.f32 %v5585, %v5875
      %v6004 = vadd.f32 %v5940, %v5117
      %v6005 = vadd.f32 %v5941, %v5125
      %v6006 = vadd.f32 %v5942, %v5124
      %v6007 = vadd.f32 %v5943, %v5126
      %v6008 = vadd.f32 %v5944, %v5134
      %v6009 = vadd.f32 %v5945, %v5142
      %v6010 = vadd.f32 %v5946, %v5141
      %v6011 = vadd.f32 %v5947, %v5143
      %v6012 = vadd.f32 %v5948, %v5185
      %v6013 = vadd.f32 %v5949, %v5193
      %v6014 = vadd.f32 %v5950, %v5192
      %v6015 = vadd.f32 %v5951, %v5194
      %v6016 = vadd.f32 %v5952, %v5202
      %v6017 = vadd.f32 %v5953, %v5210
      %v6018 = vadd.f32 %v5954, %v5209
      %v6019 = vadd.f32 %v5955, %v5211
      %v6020 = vadd.f32 %v5956, %v5253
      %v6021 = vadd.f32 %v5957, %v5261
      %v6022 = vadd.f32 %v5958, %v5260
      %v6023 = vadd.f32 %v5959, %v5262
      %v6024 = vadd.f32 %v5960, %v5270
      %v6025 = vadd.f32 %v5961, %v5278
      %v6026 = vadd.f32 %v5962, %v5277
      %v6027 = vadd.f32 %v5963, %v5279
      %v6028 = vadd.f32 %v5964, %v5321
      %v6029 = vadd.f32 %v5965, %v5329
      %v6030 = vadd.f32 %v5966, %v5328
      %v6031 = vadd.f32 %v5967, %v5330
      %v6032 = vadd.f32 %v5968, %v5338
      %v6033 = vadd.f32 %v5969, %v5346
      %v6034 = vadd.f32 %v5970, %v5345
      %v6035 = vadd.f32 %v5971, %v5347
      %v6036 = vadd.f32 %v5972, %v5389
      %v6037 = vadd.f32 %v5973, %v5397
      %v6038 = vadd.f32 %v5974, %v5396
      %v6039 = vadd.f32 %v5975, %v5398
      %v6040 = vadd.f32 %v5976, %v5406
      %v6041 = vadd.f32 %v5977, %v5414
      %v6042 = vadd.f32 %v5978, %v5413
      %v6043 = vadd.f32 %v5979, %v5415
      %v6044 = vadd.f32 %v5980, %v5457
      %v6045 = vadd.f32 %v5981, %v5465
      %v6046 = vadd.f32 %v5982, %v5464
      %v6047 = vadd.f32 %v5983, %v5466
      %v6048 = vadd.f32 %v5984, %v5474
      %v6049 = vadd.f32 %v5985, %v5482
      %v6050 = vadd.f32 %v5986, %v5481
      %v6051 = vadd.f32 %v5987, %v5483
      %v6052 = vadd.f32 %v5988, %v5525
      %v6053 = vadd.f32 %v5989, %v5533
      %v6054 = vadd.f32 %v5990, %v5532
      %v6055 = vadd.f32 %v5991, %v5534
      %v6056 = vadd.f32 %v5992, %v5542
      %v6057 = vadd.f32 %v5993, %v5550
      %v6058 = vadd.f32 %v5994, %v5549
      %v6059 = vadd.f32 %v5995, %v5551
      %v6060 = vadd.f32 %v5996, %v5593
      %v6061 = vadd.f32 %v5997, %v5601
      %v6062 = vadd.f32 %v5998, %v5600
      %v6063 = vadd.f32 %v5999, %v5602
      %v6064 = vadd.f32 %v6000, %v5610
      %v6065 = vadd.f32 %v6001, %v5618
      %v6066 = vadd.f32 %v6002, %v5617
      %v6067 = vadd.f32 %v6003, %v5619
      %v6068 = vrot.slane %v5117, 7
      %v6069 = vrot.slane %v6068, 2
      %v6070 = vrot.slane %v5125, 7
      %v6071 = vrot.slane %v6070, 2
      %v6072 = vrot.slane %v5124, 7
      %v6073 = vrot.slane %v6072, 2
      %v6074 = vrot.slane %v5126, 7
      %v6075 = vrot.slane %v6074, 2
      %v6076 = vrot.slane %v5134, 7
      %v6077 = vrot.slane %v6076, 2
      %v6078 = vrot.slane %v5142, 7
      %v6079 = vrot.slane %v6078, 2
      %v6080 = vrot.slane %v5141, 7
      %v6081 = vrot.slane %v6080, 2
      %v6082 = vrot.slane %v5143, 7
      %v6083 = vrot.slane %v6082, 2
      %v6084 = vrot.slane %v5185, 7
      %v6085 = vrot.slane %v6084, 2
      %v6086 = vrot.slane %v5193, 7
      %v6087 = vrot.slane %v6086, 2
      %v6088 = vrot.slane %v5192, 7
      %v6089 = vrot.slane %v6088, 2
      %v6090 = vrot.slane %v5194, 7
      %v6091 = vrot.slane %v6090, 2
      %v6092 = vrot.slane %v5202, 7
      %v6093 = vrot.slane %v6092, 2
      %v6094 = vrot.slane %v5210, 7
      %v6095 = vrot.slane %v6094, 2
      %v6096 = vrot.slane %v5209, 7
      %v6097 = vrot.slane %v6096, 2
      %v6098 = vrot.slane %v5211, 7
      %v6099 = vrot.slane %v6098, 2
      %v6100 = vrot.slane %v5253, 7
      %v6101 = vrot.slane %v6100, 2
      %v6102 = vrot.slane %v5261, 7
      %v6103 = vrot.slane %v6102, 2
      %v6104 = vrot.slane %v5260, 7
      %v6105 = vrot.slane %v6104, 2
      %v6106 = vrot.slane %v5262, 7
      %v6107 = vrot.slane %v6106, 2
      %v6108 = vrot.slane %v5270, 7
      %v6109 = vrot.slane %v6108, 2
      %v6110 = vrot.slane %v5278, 7
      %v6111 = vrot.slane %v6110, 2
      %v6112 = vrot.slane %v5277, 7
      %v6113 = vrot.slane %v6112, 2
      %v6114 = vrot.slane %v5279, 7
      %v6115 = vrot.slane %v6114, 2
      %v6116 = vrot.slane %v5321, 7
      %v6117 = vrot.slane %v6116, 2
      %v6118 = vrot.slane %v5329, 7
      %v6119 = vrot.slane %v6118, 2
      %v6120 = vrot.slane %v5328, 7
      %v6121 = vrot.slane %v6120, 2
      %v6122 = vrot.slane %v5330, 7
      %v6123 = vrot.slane %v6122, 2
      %v6124 = vrot.slane %v5338, 7
      %v6125 = vrot.slane %v6124, 2
      %v6126 = vrot.slane %v5346, 7
      %v6127 = vrot.slane %v6126, 2
      %v6128 = vrot.slane %v5345, 7
      %v6129 = vrot.slane %v6128, 2
      %v6130 = vrot.slane %v5347, 7
      %v6131 = vrot.slane %v6130, 2
      %v6132 = vrot.slane %v5389, 7
      %v6133 = vrot.slane %v6132, 2
      %v6134 = vrot.slane %v5397, 7
      %v6135 = vrot.slane %v6134, 2
      %v6136 = vrot.slane %v5396, 7
      %v6137 = vrot.slane %v6136, 2
      %v6138 = vrot.slane %v5398, 7
      %v6139 = vrot.slane %v6138, 2
      %v6140 = vrot.slane %v5406, 7
      %v6141 = vrot.slane %v6140, 2
      %v6142 = vrot.slane %v5414, 7
      %v6143 = vrot.slane %v6142, 2
      %v6144 = vrot.slane %v5413, 7
      %v6145 = vrot.slane %v6144, 2
      %v6146 = vrot.slane %v5415, 7
      %v6147 = vrot.slane %v6146, 2
      %v6148 = vrot.slane %v5457, 7
      %v6149 = vrot.slane %v6148, 2
      %v6150 = vrot.slane %v5465, 7
      %v6151 = vrot.slane %v6150, 2
      %v6152 = vrot.slane %v5464, 7
      %v6153 = vrot.slane %v6152, 2
      %v6154 = vrot.slane %v5466, 7
      %v6155 = vrot.slane %v6154, 2
      %v6156 = vrot.slane %v5474, 7
      %v6157 = vrot.slane %v6156, 2
      %v6158 = vrot.slane %v5482, 7
      %v6159 = vrot.slane %v6158, 2
      %v6160 = vrot.slane %v5481, 7
      %v6161 = vrot.slane %v6160, 2
      %v6162 = vrot.slane %v5483, 7
      %v6163 = vrot.slane %v6162, 2
      %v6164 = vrot.slane %v5525, 7
      %v6165 = vrot.slane %v6164, 2
      %v6166 = vrot.slane %v5533, 7
      %v6167 = vrot.slane %v6166, 2
      %v6168 = vrot.slane %v5532, 7
      %v6169 = vrot.slane %v6168, 2
      %v6170 = vrot.slane %v5534, 7
      %v6171 = vrot.slane %v6170, 2
      %v6172 = vrot.slane %v5542, 7
      %v6173 = vrot.slane %v6172, 2
      %v6174 = vrot.slane %v5550, 7
      %v6175 = vrot.slane %v6174, 2
      %v6176 = vrot.slane %v5549, 7
      %v6177 = vrot.slane %v6176, 2
      %v6178 = vrot.slane %v5551, 7
      %v6179 = vrot.slane %v6178, 2
      %v6180 = vrot.slane %v5593, 7
      %v6181 = vrot.slane %v6180, 2
      %v6182 = vrot.slane %v5601, 7
      %v6183 = vrot.slane %v6182, 2
      %v6184 = vrot.slane %v5600, 7
      %v6185 = vrot.slane %v6184, 2
      %v6186 = vrot.slane %v5602, 7
      %v6187 = vrot.slane %v6186, 2
      %v6188 = vrot.slane %v5610, 7
      %v6189 = vrot.slane %v6188, 2
      %v6190 = vrot.slane %v5618, 7
      %v6191 = vrot.slane %v6190, 2
      %v6192 = vrot.slane %v5617, 7
      %v6193 = vrot.slane %v6192, 2
      %v6194 = vrot.slane %v5619, 7
      %v6195 = vrot.slane %v6194, 2
      %v6260 = vadd.f32 %v6004, %v6069
      %v6261 = vadd.f32 %v6005, %v6071
      %v6262 = vadd.f32 %v6006, %v6073
      %v6263 = vadd.f32 %v6007, %v6075
      %v6264 = vadd.f32 %v6008, %v6077
      %v6265 = vadd.f32 %v6009, %v6079
      %v6266 = vadd.f32 %v6010, %v6081
      %v6267 = vadd.f32 %v6011, %v6083
      %v6268 = vadd.f32 %v6012, %v6085
      %v6269 = vadd.f32 %v6013, %v6087
      %v6270 = vadd.f32 %v6014, %v6089
      %v6271 = vadd.f32 %v6015, %v6091
      %v6272 = vadd.f32 %v6016, %v6093
      %v6273 = vadd.f32 %v6017, %v6095
      %v6274 = vadd.f32 %v6018, %v6097
      %v6275 = vadd.f32 %v6019, %v6099
      %v6276 = vadd.f32 %v6020, %v6101
      %v6277 = vadd.f32 %v6021, %v6103
      %v6278 = vadd.f32 %v6022, %v6105
      %v6279 = vadd.f32 %v6023, %v6107
      %v6280 = vadd.f32 %v6024, %v6109
      %v6281 = vadd.f32 %v6025, %v6111
      %v6282 = vadd.f32 %v6026, %v6113
      %v6283 = vadd.f32 %v6027, %v6115
      %v6284 = vadd.f32 %v6028, %v6117
      %v6285 = vadd.f32 %v6029, %v6119
      %v6286 = vadd.f32 %v6030, %v6121
      %v6287 = vadd.f32 %v6031, %v6123
      %v6288 = vadd.f32 %v6032, %v6125
      %v6289 = vadd.f32 %v6033, %v6127
      %v6290 = vadd.f32 %v6034, %v6129
      %v6291 = vadd.f32 %v6035, %v6131
      %v6292 = vadd.f32 %v6036, %v6133
      %v6293 = vadd.f32 %v6037, %v6135
      %v6294 = vadd.f32 %v6038, %v6137
      %v6295 = vadd.f32 %v6039, %v6139
      %v6296 = vadd.f32 %v6040, %v6141
      %v6297 = vadd.f32 %v6041, %v6143
      %v6298 = vadd.f32 %v6042, %v6145
      %v6299 = vadd.f32 %v6043, %v6147
      %v6300 = vadd.f32 %v6044, %v6149
      %v6301 = vadd.f32 %v6045, %v6151
      %v6302 = vadd.f32 %v6046, %v6153
      %v6303 = vadd.f32 %v6047, %v6155
      %v6304 = vadd.f32 %v6048, %v6157
      %v6305 = vadd.f32 %v6049, %v6159
      %v6306 = vadd.f32 %v6050, %v6161
      %v6307 = vadd.f32 %v6051, %v6163
      %v6308 = vadd.f32 %v6052, %v6165
      %v6309 = vadd.f32 %v6053, %v6167
      %v6310 = vadd.f32 %v6054, %v6169
      %v6311 = vadd.f32 %v6055, %v6171
      %v6312 = vadd.f32 %v6056, %v6173
      %v6313 = vadd.f32 %v6057, %v6175
      %v6314 = vadd.f32 %v6058, %v6177
      %v6315 = vadd.f32 %v6059, %v6179
      %v6316 = vadd.f32 %v6060, %v6181
      %v6317 = vadd.f32 %v6061, %v6183
      %v6318 = vadd.f32 %v6062, %v6185
      %v6319 = vadd.f32 %v6063, %v6187
      %v6320 = vadd.f32 %v6064, %v6189
      %v6321 = vadd.f32 %v6065, %v6191
      %v6322 = vadd.f32 %v6066, %v6193
      %v6323 = vadd.f32 %v6067, %v6195
      %v6324 = vmul.f32 %v6260, 0.25
      %v6325 = vmul.f32 %v6261, 0.25
      %v6326 = vmul.f32 %v6262, 0.25
      %v6327 = vmul.f32 %v6263, 0.25
      %v6328 = vmul.f32 %v6264, 0.25
      %v6329 = vmul.f32 %v6265, 0.25
      %v6330 = vmul.f32 %v6266, 0.25
      %v6331 = vmul.f32 %v6267, 0.25
      %v6332 = vmul.f32 %v6268, 0.25
      %v6333 = vmul.f32 %v6269, 0.25
      %v6334 = vmul.f32 %v6270, 0.25
      %v6335 = vmul.f32 %v6271, 0.25
      %v6336 = vmul.f32 %v6272, 0.25
      %v6337 = vmul.f32 %v6273, 0.25
      %v6338 = vmul.f32 %v6274, 0.25
      %v6339 = vmul.f32 %v6275, 0.25
      %v6340 = vmul.f32 %v6276, 0.25
      %v6341 = vmul.f32 %v6277, 0.25
      %v6342 = vmul.f32 %v6278, 0.25
      %v6343 = vmul.f32 %v6279, 0.25
      %v6344 = vmul.f32 %v6280, 0.25
      %v6345 = vmul.f32 %v6281, 0.25
      %v6346 = vmul.f32 %v6282, 0.25
      %v6347 = vmul.f32 %v6283, 0.25
      %v6348 = vmul.f32 %v6284, 0.25
      %v6349 = vmul.f32 %v6285, 0.25
      %v6350 = vmul.f32 %v6286, 0.25
      %v6351 = vmul.f32 %v6287, 0.25
      %v6352 = vmul.f32 %v6288, 0.25
      %v6353 = vmul.f32 %v6289, 0.25
      %v6354 = vmul.f32 %v6290, 0.25
      %v6355 = vmul.f32 %v6291, 0.25
      %v6356 = vmul.f32 %v6292, 0.25
      %v6357 = vmul.f32 %v6293, 0.25
      %v6358 = vmul.f32 %v6294, 0.25
      %v6359 = vmul.f32 %v6295, 0.25
      %v6360 = vmul.f32 %v6296, 0.25
      %v6361 = vmul.f32 %v6297, 0.25
      %v6362 = vmul.f32 %v6298, 0.25
      %v6363 = vmul.f32 %v6299, 0.25
      %v6364 = vmul.f32 %v6300, 0.25
      %v6365 = vmul.f32 %v6301, 0.25
      %v6366 = vmul.f32 %v6302, 0.25
      %v6367 = vmul.f32 %v6303, 0.25
      %v6368 = vmul.f32 %v6304, 0.25
      %v6369 = vmul.f32 %v6305, 0.25
      %v6370 = vmul.f32 %v6306, 0.25
      %v6371 = vmul.f32 %v6307, 0.25
      %v6372 = vmul.f32 %v6308, 0.25
      %v6373 = vmul.f32 %v6309, 0.25
      %v6374 = vmul.f32 %v6310, 0.25
      %v6375 = vmul.f32 %v6311, 0.25
      %v6376 = vmul.f32 %v6312, 0.25
      %v6377 = vmul.f32 %v6313, 0.25
      %v6378 = vmul.f32 %v6314, 0.25
      %v6379 = vmul.f32 %v6315, 0.25
      %v6380 = vmul.f32 %v6316, 0.25
      %v6381 = vmul.f32 %v6317, 0.25
      %v6382 = vmul.f32 %v6318, 0.25
      %v6383 = vmul.f32 %v6319, 0.25
      %v6384 = vmul.f32 %v6320, 0.25
      %v6385 = vmul.f32 %v6321, 0.25
      %v6386 = vmul.f32 %v6322, 0.25
      %v6387 = vmul.f32 %v6323, 0.25
      %v6388 = vpack.c.bf16 %v6324, %v6324
      %v6389 = vpack.c.bf16 %v6325, %v6325
      %v6390 = vpack.c.bf16 %v6326, %v6326
      %v6391 = vpack.c.bf16 %v6327, %v6327
      %v6392 = vpack.c.bf16 %v6328, %v6328
      %v6393 = vpack.c.bf16 %v6329, %v6329
      %v6394 = vpack.c.bf16 %v6330, %v6330
      %v6395 = vpack.c.bf16 %v6331, %v6331
      %v6396 = vpack.c.bf16 %v6332, %v6332
      %v6397 = vpack.c.bf16 %v6333, %v6333
      %v6398 = vpack.c.bf16 %v6334, %v6334
      %v6399 = vpack.c.bf16 %v6335, %v6335
      %v6400 = vpack.c.bf16 %v6336, %v6336
      %v6401 = vpack.c.bf16 %v6337, %v6337
      %v6402 = vpack.c.bf16 %v6338, %v6338
      %v6403 = vpack.c.bf16 %v6339, %v6339
      %v6404 = vpack.c.bf16 %v6340, %v6340
      %v6405 = vpack.c.bf16 %v6341, %v6341
      %v6406 = vpack.c.bf16 %v6342, %v6342
      %v6407 = vpack.c.bf16 %v6343, %v6343
      %v6408 = vpack.c.bf16 %v6344, %v6344
      %v6409 = vpack.c.bf16 %v6345, %v6345
      %v6410 = vpack.c.bf16 %v6346, %v6346
      %v6411 = vpack.c.bf16 %v6347, %v6347
      %v6412 = vpack.c.bf16 %v6348, %v6348
      %v6413 = vpack.c.bf16 %v6349, %v6349
      %v6414 = vpack.c.bf16 %v6350, %v6350
      %v6415 = vpack.c.bf16 %v6351, %v6351
      %v6416 = vpack.c.bf16 %v6352, %v6352
      %v6417 = vpack.c.bf16 %v6353, %v6353
      %v6418 = vpack.c.bf16 %v6354, %v6354
      %v6419 = vpack.c.bf16 %v6355, %v6355
      %v6420 = vpack.c.bf16 %v6356, %v6356
      %v6421 = vpack.c.bf16 %v6357, %v6357
      %v6422 = vpack.c.bf16 %v6358, %v6358
      %v6423 = vpack.c.bf16 %v6359, %v6359
      %v6424 = vpack.c.bf16 %v6360, %v6360
      %v6425 = vpack.c.bf16 %v6361, %v6361
      %v6426 = vpack.c.bf16 %v6362, %v6362
      %v6427 = vpack.c.bf16 %v6363, %v6363
      %v6428 = vpack.c.bf16 %v6364, %v6364
      %v6429 = vpack.c.bf16 %v6365, %v6365
      %v6430 = vpack.c.bf16 %v6366, %v6366
      %v6431 = vpack.c.bf16 %v6367, %v6367
      %v6432 = vpack.c.bf16 %v6368, %v6368
      %v6433 = vpack.c.bf16 %v6369, %v6369
      %v6434 = vpack.c.bf16 %v6370, %v6370
      %v6435 = vpack.c.bf16 %v6371, %v6371
      %v6436 = vpack.c.bf16 %v6372, %v6372
      %v6437 = vpack.c.bf16 %v6373, %v6373
      %v6438 = vpack.c.bf16 %v6374, %v6374
      %v6439 = vpack.c.bf16 %v6375, %v6375
      %v6440 = vpack.c.bf16 %v6376, %v6376
      %v6441 = vpack.c.bf16 %v6377, %v6377
      %v6442 = vpack.c.bf16 %v6378, %v6378
      %v6443 = vpack.c.bf16 %v6379, %v6379
      %v6444 = vpack.c.bf16 %v6380, %v6380
      %v6445 = vpack.c.bf16 %v6381, %v6381
      %v6446 = vpack.c.bf16 %v6382, %v6382
      %v6447 = vpack.c.bf16 %v6383, %v6383
      %v6448 = vpack.c.bf16 %v6384, %v6384
      %v6449 = vpack.c.bf16 %v6385, %v6385
      %v6450 = vpack.c.bf16 %v6386, %v6386
      %v6451 = vpack.c.bf16 %v6387, %v6387
      %v6452 = vld [vmem:[%s5] sm:$0x3]
      %v6453 = vld [vmem:[%s6] sm:$0x1]
      %v6455 = vlaneseq
      %v6456 = vshrl.u32 %v6455, 7
      %v6457 = vsub.s32 0, %v6456
      %v6458 = vrot.slane %v6453, %v6457
      %v6524 = vunpack.c.l.b16 %v6388
      %v6525 = vunpack.c.l.b16 %v6389
      %v6526 = vunpack.c.l.b16 %v6390
      %v6527 = vunpack.c.l.b16 %v6391
      %v6528 = vunpack.c.l.b16 %v6392
      %v6529 = vunpack.c.l.b16 %v6393
      %v6530 = vunpack.c.l.b16 %v6394
      %v6531 = vunpack.c.l.b16 %v6395
      %v6532 = vunpack.c.l.b16 %v6396
      %v6533 = vunpack.c.l.b16 %v6397
      %v6534 = vunpack.c.l.b16 %v6398
      %v6535 = vunpack.c.l.b16 %v6399
      %v6536 = vunpack.c.l.b16 %v6400
      %v6537 = vunpack.c.l.b16 %v6401
      %v6538 = vunpack.c.l.b16 %v6402
      %v6539 = vunpack.c.l.b16 %v6403
      %v6540 = vunpack.c.l.b16 %v6404
      %v6541 = vunpack.c.l.b16 %v6405
      %v6542 = vunpack.c.l.b16 %v6406
      %v6543 = vunpack.c.l.b16 %v6407
      %v6544 = vunpack.c.l.b16 %v6408
      %v6545 = vunpack.c.l.b16 %v6409
      %v6546 = vunpack.c.l.b16 %v6410
      %v6547 = vunpack.c.l.b16 %v6411
      %v6548 = vunpack.c.l.b16 %v6412
      %v6549 = vunpack.c.l.b16 %v6413
      %v6550 = vunpack.c.l.b16 %v6414
      %v6551 = vunpack.c.l.b16 %v6415
      %v6552 = vunpack.c.l.b16 %v6416
      %v6553 = vunpack.c.l.b16 %v6417
      %v6554 = vunpack.c.l.b16 %v6418
      %v6555 = vunpack.c.l.b16 %v6419
      %v6556 = vunpack.c.l.b16 %v6420
      %v6557 = vunpack.c.l.b16 %v6421
      %v6558 = vunpack.c.l.b16 %v6422
      %v6559 = vunpack.c.l.b16 %v6423
      %v6560 = vunpack.c.l.b16 %v6424
      %v6561 = vunpack.c.l.b16 %v6425
      %v6562 = vunpack.c.l.b16 %v6426
      %v6563 = vunpack.c.l.b16 %v6427
      %v6564 = vunpack.c.l.b16 %v6428
      %v6565 = vunpack.c.l.b16 %v6429
      %v6566 = vunpack.c.l.b16 %v6430
      %v6567 = vunpack.c.l.b16 %v6431
      %v6568 = vunpack.c.l.b16 %v6432
      %v6569 = vunpack.c.l.b16 %v6433
      %v6570 = vunpack.c.l.b16 %v6434
      %v6571 = vunpack.c.l.b16 %v6435
      %v6572 = vunpack.c.l.b16 %v6436
      %v6573 = vunpack.c.l.b16 %v6437
      %v6574 = vunpack.c.l.b16 %v6438
      %v6575 = vunpack.c.l.b16 %v6439
      %v6576 = vunpack.c.l.b16 %v6440
      %v6577 = vunpack.c.l.b16 %v6441
      %v6578 = vunpack.c.l.b16 %v6442
      %v6579 = vunpack.c.l.b16 %v6443
      %v6580 = vunpack.c.l.b16 %v6444
      %v6581 = vunpack.c.l.b16 %v6445
      %v6582 = vunpack.c.l.b16 %v6446
      %v6583 = vunpack.c.l.b16 %v6447
      %v6584 = vunpack.c.l.b16 %v6448
      %v6585 = vunpack.c.l.b16 %v6449
      %v6586 = vunpack.c.l.b16 %v6450
      %v6587 = vunpack.c.l.b16 %v6451
      %v6588 = vrot.slane %v6525, 7
      %vm6589 = vcmask 1041409
      %v6590 = vsel %vm6589, %v6588, %v6524
      %v6591 = vrot.slane %v6526, 6
      %vm6592 = vcmask 1042434
      %v6593 = vsel %vm6592, %v6591, %v6590
      %v6594 = vrot.slane %v6527, 5
      %vm6595 = vcmask 1043459
      %v6596 = vsel %vm6595, %v6594, %v6593
      %v6597 = vrot.slane %v6528, 4
      %vm6598 = vcmask 1044484
      %v6599 = vsel %vm6598, %v6597, %v6596
      %v6600 = vrot.slane %v6529, 3
      %vm6601 = vcmask 1045509
      %v6602 = vsel %vm6601, %v6600, %v6599
      %v6603 = vrot.slane %v6530, 2
      %vm6604 = vcmask 1046534
      %v6605 = vsel %vm6604, %v6603, %v6602
      %v6606 = vrot.slane %v6531, 1
      %vm6607 = vcmask 1047559
      %v6608 = vsel %vm6607, %v6606, %v6605
      %v6609 = vrot.slane %v6533, 7
      %v6610 = vsel %vm6589, %v6609, %v6532
      %v6611 = vrot.slane %v6534, 6
      %v6612 = vsel %vm6592, %v6611, %v6610
      %v6613 = vrot.slane %v6535, 5
      %v6614 = vsel %vm6595, %v6613, %v6612
      %v6615 = vrot.slane %v6536, 4
      %v6616 = vsel %vm6598, %v6615, %v6614
      %v6617 = vrot.slane %v6537, 3
      %v6618 = vsel %vm6601, %v6617, %v6616
      %v6619 = vrot.slane %v6538, 2
      %v6620 = vsel %vm6604, %v6619, %v6618
      %v6621 = vrot.slane %v6539, 1
      %v6622 = vsel %vm6607, %v6621, %v6620
      %v6623 = vrot.slane %v6541, 7
      %v6624 = vsel %vm6589, %v6623, %v6540
      %v6625 = vrot.slane %v6542, 6
      %v6626 = vsel %vm6592, %v6625, %v6624
      %v6627 = vrot.slane %v6543, 5
      %v6628 = vsel %vm6595, %v6627, %v6626
      %v6629 = vrot.slane %v6544, 4
      %v6630 = vsel %vm6598, %v6629, %v6628
      %v6631 = vrot.slane %v6545, 3
      %v6632 = vsel %vm6601, %v6631, %v6630
      %v6633 = vrot.slane %v6546, 2
      %v6634 = vsel %vm6604, %v6633, %v6632
      %v6635 = vrot.slane %v6547, 1
      %v6636 = vsel %vm6607, %v6635, %v6634
      %v6637 = vrot.slane %v6549, 7
      %v6638 = vsel %vm6589, %v6637, %v6548
      %v6639 = vrot.slane %v6550, 6
      %v6640 = vsel %vm6592, %v6639, %v6638
      %v6641 = vrot.slane %v6551, 5
      %v6642 = vsel %vm6595, %v6641, %v6640
      %v6643 = vrot.slane %v6552, 4
      %v6644 = vsel %vm6598, %v6643, %v6642
      %v6645 = vrot.slane %v6553, 3
      %v6646 = vsel %vm6601, %v6645, %v6644
      %v6647 = vrot.slane %v6554, 2
      %v6648 = vsel %vm6604, %v6647, %v6646
      %v6649 = vrot.slane %v6555, 1
      %v6650 = vsel %vm6607, %v6649, %v6648
      %v6651 = vrot.slane %v6557, 7
      %v6652 = vsel %vm6589, %v6651, %v6556
      %v6653 = vrot.slane %v6558, 6
      %v6654 = vsel %vm6592, %v6653, %v6652
      %v6655 = vrot.slane %v6559, 5
      %v6656 = vsel %vm6595, %v6655, %v6654
      %v6657 = vrot.slane %v6560, 4
      %v6658 = vsel %vm6598, %v6657, %v6656
      %v6659 = vrot.slane %v6561, 3
      %v6660 = vsel %vm6601, %v6659, %v6658
      %v6661 = vrot.slane %v6562, 2
      %v6662 = vsel %vm6604, %v6661, %v6660
      %v6663 = vrot.slane %v6563, 1
      %v6664 = vsel %vm6607, %v6663, %v6662
      %v6665 = vrot.slane %v6565, 7
      %v6666 = vsel %vm6589, %v6665, %v6564
      %v6667 = vrot.slane %v6566, 6
      %v6668 = vsel %vm6592, %v6667, %v6666
      %v6669 = vrot.slane %v6567, 5
      %v6670 = vsel %vm6595, %v6669, %v6668
      %v6671 = vrot.slane %v6568, 4
      %v6672 = vsel %vm6598, %v6671, %v6670
      %v6673 = vrot.slane %v6569, 3
      %v6674 = vsel %vm6601, %v6673, %v6672
      %v6675 = vrot.slane %v6570, 2
      %v6676 = vsel %vm6604, %v6675, %v6674
      %v6677 = vrot.slane %v6571, 1
      %v6678 = vsel %vm6607, %v6677, %v6676
      %v6679 = vrot.slane %v6573, 7
      %v6680 = vsel %vm6589, %v6679, %v6572
      %v6681 = vrot.slane %v6574, 6
      %v6682 = vsel %vm6592, %v6681, %v6680
      %v6683 = vrot.slane %v6575, 5
      %v6684 = vsel %vm6595, %v6683, %v6682
      %v6685 = vrot.slane %v6576, 4
      %v6686 = vsel %vm6598, %v6685, %v6684
      %v6687 = vrot.slane %v6577, 3
      %v6688 = vsel %vm6601, %v6687, %v6686
      %v6689 = vrot.slane %v6578, 2
      %v6690 = vsel %vm6604, %v6689, %v6688
      %v6691 = vrot.slane %v6579, 1
      %v6692 = vsel %vm6607, %v6691, %v6690
      %v6693 = vrot.slane %v6581, 7
      %v6694 = vsel %vm6589, %v6693, %v6580
      %v6695 = vrot.slane %v6582, 6
      %v6696 = vsel %vm6592, %v6695, %v6694
      %v6697 = vrot.slane %v6583, 5
      %v6698 = vsel %vm6595, %v6697, %v6696
      %v6699 = vrot.slane %v6584, 4
      %v6700 = vsel %vm6598, %v6699, %v6698
      %v6701 = vrot.slane %v6585, 3
      %v6702 = vsel %vm6601, %v6701, %v6700
      %v6703 = vrot.slane %v6586, 2
      %v6704 = vsel %vm6604, %v6703, %v6702
      %v6705 = vrot.slane %v6587, 1
      %v6706 = vsel %vm6607, %v6705, %v6704
      %v6707 = vpack.c.b16 %v6622, %v6608
      %v6708 = vpack.c.b16 %v6650, %v6636
      %v6709 = vpack.c.b16 %v6678, %v6664
      %v6710 = vpack.c.b16 %v6706, %v6692
      %v6712 = vsel %vm312, %v6707, 0
      %v6715 = vsel %vm312, %v6708, 0
      %v6718 = vsel %vm312, %v6709, 0
      %v6721 = vsel %vm312, %v6710, 0
      %v6724 = vsel %vm1881, %v6452, 0
      %6726 = vmatprep.subr.bf16.mxu0 0
      %6727 = vmatpush1.bf16.msra.mxu0 %v6724
      %6728 = vmatprep.subr.bf16.mxu0 0
      %6729 = vmatpush1.bf16.msra.mxu0 0
      %6730 = vmatprep.subr.bf16.mxu0 0
      %6731 = vmatpush1.bf16.msra.mxu0 0
      %6732 = vmatprep.subr.bf16.mxu0 0
      %6733 = vmatpush1.bf16.msra.mxu0 0
      %6734 = vmatprep.subr.bf16.mxu0 0
      %6735 = vmatpush1.bf16.msra.mxu0 0
      %6736 = vmatprep.subr.bf16.mxu0 0
      %6737 = vmatpush1.bf16.msra.mxu0 0
      %6738 = vmatprep.subr.bf16.mxu0 0
      %6739 = vmatpush1.bf16.msra.mxu0 0
      %6740 = vmatprep.subr.bf16.mxu0 0
      %6741 = vmatpush1.bf16.msra.mxu0 0
      %6742 = vmatprep.subr.bf16.mxu0 0
      %6743 = vmatpush1.bf16.msra.mxu0 0
      %6744 = vmatprep.subr.bf16.mxu0 0
      %6745 = vmatpush1.bf16.msra.mxu0 0
      %6746 = vmatprep.subr.bf16.mxu0 0
      %6747 = vmatpush1.bf16.msra.mxu0 0
      %6748 = vmatprep.subr.bf16.mxu0 0
      %6749 = vmatpush1.bf16.msra.mxu0 0
      %6750 = vmatprep.subr.bf16.mxu0 0
      %6751 = vmatpush1.bf16.msra.mxu0 0
      %6752 = vmatprep.subr.bf16.mxu0 0
      %6753 = vmatpush1.bf16.msra.mxu0 0
      %6754 = vmatprep.subr.bf16.mxu0 0
      %6755 = vmatpush1.bf16.msra.mxu0 0
      %6756 = vmatprep.subr.bf16.mxu0 0
      %6757 = vmatpush1.bf16.msra.mxu0 0
      %6758 = vmatprep.mubr.bf16.mxu0 0
      %6759 = vmatmul.mubr.bf16.gmra.mrb[0].mxu0 %v6712
      %v6760 = vpop.f32.mrb[0].mxu0
      %v6761 = vadd.f32 %v6458, %v6760
      %v6762 = vpop.f32.mrb[0].mxu0
      %v6763 = vpop.f32.mrb[0].mxu0
      %v6764 = vadd.f32 %v6458, %v6763
      %v6765 = vpop.f32.mrb[0].mxu0
      %6766 = vmatprep.mubr.bf16.mxu0 0
      %6767 = vmatmul.mubr.bf16.gmra.mrb[0].mxu0 %v6715
      %v6768 = vpop.f32.mrb[0].mxu0
      %v6769 = vadd.f32 %v6458, %v6768
      %v6770 = vpop.f32.mrb[0].mxu0
      %v6771 = vpop.f32.mrb[0].mxu0
      %v6772 = vadd.f32 %v6458, %v6771
      %v6773 = vpop.f32.mrb[0].mxu0
      %6774 = vmatprep.mubr.bf16.mxu0 0
      %6775 = vmatmul.mubr.bf16.gmra.mrb[0].mxu0 %v6718
      %v6776 = vpop.f32.mrb[0].mxu0
      %v6777 = vadd.f32 %v6458, %v6776
      %v6778 = vpop.f32.mrb[0].mxu0
      %v6779 = vpop.f32.mrb[0].mxu0
      %v6780 = vadd.f32 %v6458, %v6779
      %v6781 = vpop.f32.mrb[0].mxu0
      %6782 = vmatprep.mubr.bf16.mxu0 0
      %6783 = vmatmul.mubr.bf16.gmra.mrb[0].mxu0 %v6721
      %v6784 = vpop.f32.mrb[0].mxu0
      %v6785 = vadd.f32 %v6458, %v6784
      %v6786 = vpop.f32.mrb[0].mxu0
      %v6787 = vpop.f32.mrb[0].mxu0
      %v6788 = vadd.f32 %v6458, %v6787
      %v6789 = vpop.f32.mrb[0].mxu0
      %6790 = vdwg.mxu0
      %v6799 = vcombine.high %v6761, %v6761
      %v6801 = vunpack.c.l.s4 1983009808
      %v6802 = vunpack.c.0.s8 %v6801
      %v6803 = vlaneseq
      %v6804 = vshrl.u32 %v6803, 7
      %v6805 = vsub.s32 %v6802, %v6804
      %v6806 = vrot.slane %v6761, %v6805
      %v6808 = vunpack.c.l.s4 1983009808
      %v6809 = vunpack.c.0.s8 %v6808
      %v6810 = vlaneseq
      %v6811 = vshrl.u32 %v6810, 7
      %v6812 = vsub.s32 %v6809, %v6811
      %v6813 = vrot.slane %v6799, %v6812
      %v6814 = vcombine.high %v6806, %v6806
      %v6815 = vcombine.high %v6813, %v6813
      %v6816 = vcombine.high %v6764, %v6764
      %v6818 = vunpack.c.l.s4 1983009808
      %v6819 = vunpack.c.0.s8 %v6818
      %v6820 = vlaneseq
      %v6821 = vshrl.u32 %v6820, 7
      %v6822 = vsub.s32 %v6819, %v6821
      %v6823 = vrot.slane %v6764, %v6822
      %v6825 = vunpack.c.l.s4 1983009808
      %v6826 = vunpack.c.0.s8 %v6825
      %v6827 = vlaneseq
      %v6828 = vshrl.u32 %v6827, 7
      %v6829 = vsub.s32 %v6826, %v6828
      %v6830 = vrot.slane %v6816, %v6829
      %v6831 = vcombine.high %v6823, %v6823
      %v6832 = vcombine.high %v6830, %v6830
      %v6833 = vcombine.high %v6769, %v6769
      %v6835 = vunpack.c.l.s4 1983009808
      %v6836 = vunpack.c.0.s8 %v6835
      %v6837 = vlaneseq
      %v6838 = vshrl.u32 %v6837, 7
      %v6839 = vsub.s32 %v6836, %v6838
      %v6840 = vrot.slane %v6769, %v6839
      %v6842 = vunpack.c.l.s4 1983009808
      %v6843 = vunpack.c.0.s8 %v6842
      %v6844 = vlaneseq
      %v6845 = vshrl.u32 %v6844, 7
      %v6846 = vsub.s32 %v6843, %v6845
      %v6847 = vrot.slane %v6833, %v6846
      %v6848 = vcombine.high %v6840, %v6840
      %v6849 = vcombine.high %v6847, %v6847
      %v6850 = vcombine.high %v6772, %v6772
      %v6852 = vunpack.c.l.s4 1983009808
      %v6853 = vunpack.c.0.s8 %v6852
      %v6854 = vlaneseq
      %v6855 = vshrl.u32 %v6854, 7
      %v6856 = vsub.s32 %v6853, %v6855
      %v6857 = vrot.slane %v6772, %v6856
      %v6859 = vunpack.c.l.s4 1983009808
      %v6860 = vunpack.c.0.s8 %v6859
      %v6861 = vlaneseq
      %v6862 = vshrl.u32 %v6861, 7
      %v6863 = vsub.s32 %v6860, %v6862
      %v6864 = vrot.slane %v6850, %v6863
      %v6865 = vcombine.high %v6857, %v6857
      %v6866 = vcombine.high %v6864, %v6864
      %v6867 = vcombine.high %v6777, %v6777
      %v6869 = vunpack.c.l.s4 1983009808
      %v6870 = vunpack.c.0.s8 %v6869
      %v6871 = vlaneseq
      %v6872 = vshrl.u32 %v6871, 7
      %v6873 = vsub.s32 %v6870, %v6872
      %v6874 = vrot.slane %v6777, %v6873
      %v6876 = vunpack.c.l.s4 1983009808
      %v6877 = vunpack.c.0.s8 %v6876
      %v6878 = vlaneseq
      %v6879 = vshrl.u32 %v6878, 7
      %v6880 = vsub.s32 %v6877, %v6879
      %v6881 = vrot.slane %v6867, %v6880
      %v6882 = vcombine.high %v6874, %v6874
      %v6883 = vcombine.high %v6881, %v6881
      %v6884 = vcombine.high %v6780, %v6780
      %v6886 = vunpack.c.l.s4 1983009808
      %v6887 = vunpack.c.0.s8 %v6886
      %v6888 = vlaneseq
      %v6889 = vshrl.u32 %v6888, 7
      %v6890 = vsub.s32 %v6887, %v6889
      %v6891 = vrot.slane %v6780, %v6890
      %v6893 = vunpack.c.l.s4 1983009808
      %v6894 = vunpack.c.0.s8 %v6893
      %v6895 = vlaneseq
      %v6896 = vshrl.u32 %v6895, 7
      %v6897 = vsub.s32 %v6894, %v6896
      %v6898 = vrot.slane %v6884, %v6897
      %v6899 = vcombine.high %v6891, %v6891
      %v6900 = vcombine.high %v6898, %v6898
      %v6901 = vcombine.high %v6785, %v6785
      %v6903 = vunpack.c.l.s4 1983009808
      %v6904 = vunpack.c.0.s8 %v6903
      %v6905 = vlaneseq
      %v6906 = vshrl.u32 %v6905, 7
      %v6907 = vsub.s32 %v6904, %v6906
      %v6908 = vrot.slane %v6785, %v6907
      %v6910 = vunpack.c.l.s4 1983009808
      %v6911 = vunpack.c.0.s8 %v6910
      %v6912 = vlaneseq
      %v6913 = vshrl.u32 %v6912, 7
      %v6914 = vsub.s32 %v6911, %v6913
      %v6915 = vrot.slane %v6901, %v6914
      %v6916 = vcombine.high %v6908, %v6908
      %v6917 = vcombine.high %v6915, %v6915
      %v6918 = vcombine.high %v6788, %v6788
      %v6920 = vunpack.c.l.s4 1983009808
      %v6921 = vunpack.c.0.s8 %v6920
      %v6922 = vlaneseq
      %v6923 = vshrl.u32 %v6922, 7
      %v6924 = vsub.s32 %v6921, %v6923
      %v6925 = vrot.slane %v6788, %v6924
      %v6927 = vunpack.c.l.s4 1983009808
      %v6928 = vunpack.c.0.s8 %v6927
      %v6929 = vlaneseq
      %v6930 = vshrl.u32 %v6929, 7
      %v6931 = vsub.s32 %v6928, %v6930
      %v6932 = vrot.slane %v6918, %v6931
      %v6933 = vcombine.high %v6925, %v6925
      %v6934 = vcombine.high %v6932, %v6932
      %v6935 = vrot.slane %v6806, 1
      %v6936 = vrot.slane %v6814, 1
      %v6937 = vrot.slane %v6813, 1
      %v6938 = vrot.slane %v6815, 1
      %v6939 = vrot.slane %v6823, 1
      %v6940 = vrot.slane %v6831, 1
      %v6941 = vrot.slane %v6830, 1
      %v6942 = vrot.slane %v6832, 1
      %v6943 = vrot.slane %v6840, 1
      %v6944 = vrot.slane %v6848, 1
      %v6945 = vrot.slane %v6847, 1
      %v6946 = vrot.slane %v6849, 1
      %v6947 = vrot.slane %v6857, 1
      %v6948 = vrot.slane %v6865, 1
      %v6949 = vrot.slane %v6864, 1
      %v6950 = vrot.slane %v6866, 1
      %v6951 = vrot.slane %v6874, 1
      %v6952 = vrot.slane %v6882, 1
      %v6953 = vrot.slane %v6881, 1
      %v6954 = vrot.slane %v6883, 1
      %v6955 = vrot.slane %v6891, 1
      %v6956 = vrot.slane %v6899, 1
      %v6957 = vrot.slane %v6898, 1
      %v6958 = vrot.slane %v6900, 1
      %v6959 = vrot.slane %v6908, 1
      %v6960 = vrot.slane %v6916, 1
      %v6961 = vrot.slane %v6915, 1
      %v6962 = vrot.slane %v6917, 1
      %v6963 = vrot.slane %v6925, 1
      %v6964 = vrot.slane %v6933, 1
      %v6965 = vrot.slane %v6932, 1
      %v6966 = vrot.slane %v6934, 1
      %v7031 = vadd.f32 %v4980, %v6806
      %v7032 = vadd.f32 %v4981, %v6935
      %v7033 = vadd.f32 %v4982, %v6814
      %v7034 = vadd.f32 %v4983, %v6936
      %v7035 = vadd.f32 %v4984, %v6813
      %v7036 = vadd.f32 %v4985, %v6937
      %v7037 = vadd.f32 %v4986, %v6815
      %v7038 = vadd.f32 %v4987, %v6938
      %v7039 = vadd.f32 %v4988, %v6823
      %v7040 = vadd.f32 %v4989, %v6939
      %v7041 = vadd.f32 %v4990, %v6831
      %v7042 = vadd.f32 %v4991, %v6940
      %v7043 = vadd.f32 %v4992, %v6830
      %v7044 = vadd.f32 %v4993, %v6941
      %v7045 = vadd.f32 %v4994, %v6832
      %v7046 = vadd.f32 %v4995, %v6942
      %v7047 = vadd.f32 %v4996, %v6840
      %v7048 = vadd.f32 %v4997, %v6943
      %v7049 = vadd.f32 %v4998, %v6848
      %v7050 = vadd.f32 %v4999, %v6944
      %v7051 = vadd.f32 %v5000, %v6847
      %v7052 = vadd.f32 %v5001, %v6945
      %v7053 = vadd.f32 %v5002, %v6849
      %v7054 = vadd.f32 %v5003, %v6946
      %v7055 = vadd.f32 %v5004, %v6857
      %v7056 = vadd.f32 %v5005, %v6947
      %v7057 = vadd.f32 %v5006, %v6865
      %v7058 = vadd.f32 %v5007, %v6948
      %v7059 = vadd.f32 %v5008, %v6864
      %v7060 = vadd.f32 %v5009, %v6949
      %v7061 = vadd.f32 %v5010, %v6866
      %v7062 = vadd.f32 %v5011, %v6950
      %v7063 = vadd.f32 %v5012, %v6874
      %v7064 = vadd.f32 %v5013, %v6951
      %v7065 = vadd.f32 %v5014, %v6882
      %v7066 = vadd.f32 %v5015, %v6952
      %v7067 = vadd.f32 %v5016, %v6881
      %v7068 = vadd.f32 %v5017, %v6953
      %v7069 = vadd.f32 %v5018, %v6883
      %v7070 = vadd.f32 %v5019, %v6954
      %v7071 = vadd.f32 %v5020, %v6891
      %v7072 = vadd.f32 %v5021, %v6955
      %v7073 = vadd.f32 %v5022, %v6899
      %v7074 = vadd.f32 %v5023, %v6956
      %v7075 = vadd.f32 %v5024, %v6898
      %v7076 = vadd.f32 %v5025, %v6957
      %v7077 = vadd.f32 %v5026, %v6900
      %v7078 = vadd.f32 %v5027, %v6958
      %v7079 = vadd.f32 %v5028, %v6908
      %v7080 = vadd.f32 %v5029, %v6959
      %v7081 = vadd.f32 %v5030, %v6916
      %v7082 = vadd.f32 %v5031, %v6960
      %v7083 = vadd.f32 %v5032, %v6915
      %v7084 = vadd.f32 %v5033, %v6961
      %v7085 = vadd.f32 %v5034, %v6917
      %v7086 = vadd.f32 %v5035, %v6962
      %v7087 = vadd.f32 %v5036, %v6925
      %v7088 = vadd.f32 %v5037, %v6963
      %v7089 = vadd.f32 %v5038, %v6933
      %v7090 = vadd.f32 %v5039, %v6964
      %v7091 = vadd.f32 %v5040, %v6932
      %v7092 = vadd.f32 %v5041, %v6965
      %v7093 = vadd.f32 %v5042, %v6934
      %v7094 = vadd.f32 %v5043, %v6966
      %v7159 = vlaneseq
      %v7160 = vshrl.u32 %v7159, 7
      %v7161 = vsub.s32 0, %v7160
      %v7162 = vrot.slane %v7031, %v7161
      %v7163 = vlaneseq
      %v7164 = vshrl.u32 %v7163, 7
      %v7165 = vsub.s32 0, %v7164
      %v7166 = vrot.slane %v7032, %v7165
      %v7167 = vlaneseq
      %v7168 = vshrl.u32 %v7167, 7
      %v7169 = vsub.s32 0, %v7168
      %v7170 = vrot.slane %v7033, %v7169
      %v7171 = vlaneseq
      %v7172 = vshrl.u32 %v7171, 7
      %v7173 = vsub.s32 0, %v7172
      %v7174 = vrot.slane %v7034, %v7173
      %v7175 = vlaneseq
      %v7176 = vshrl.u32 %v7175, 7
      %v7177 = vsub.s32 0, %v7176
      %v7178 = vrot.slane %v7035, %v7177
      %v7179 = vlaneseq
      %v7180 = vshrl.u32 %v7179, 7
      %v7181 = vsub.s32 0, %v7180
      %v7182 = vrot.slane %v7036, %v7181
      %v7183 = vlaneseq
      %v7184 = vshrl.u32 %v7183, 7
      %v7185 = vsub.s32 0, %v7184
      %v7186 = vrot.slane %v7037, %v7185
      %v7187 = vlaneseq
      %v7188 = vshrl.u32 %v7187, 7
      %v7189 = vsub.s32 0, %v7188
      %v7190 = vrot.slane %v7038, %v7189
      %v7191 = vlaneseq
      %v7192 = vshrl.u32 %v7191, 7
      %v7193 = vsub.s32 0, %v7192
      %v7194 = vrot.slane %v7039, %v7193
      %v7195 = vlaneseq
      %v7196 = vshrl.u32 %v7195, 7
      %v7197 = vsub.s32 0, %v7196
      %v7198 = vrot.slane %v7040, %v7197
      %v7199 = vlaneseq
      %v7200 = vshrl.u32 %v7199, 7
      %v7201 = vsub.s32 0, %v7200
      %v7202 = vrot.slane %v7041, %v7201
      %v7203 = vlaneseq
      %v7204 = vshrl.u32 %v7203, 7
      %v7205 = vsub.s32 0, %v7204
      %v7206 = vrot.slane %v7042, %v7205
      %v7207 = vlaneseq
      %v7208 = vshrl.u32 %v7207, 7
      %v7209 = vsub.s32 0, %v7208
      %v7210 = vrot.slane %v7043, %v7209
      %v7211 = vlaneseq
      %v7212 = vshrl.u32 %v7211, 7
      %v7213 = vsub.s32 0, %v7212
      %v7214 = vrot.slane %v7044, %v7213
      %v7215 = vlaneseq
      %v7216 = vshrl.u32 %v7215, 7
      %v7217 = vsub.s32 0, %v7216
      %v7218 = vrot.slane %v7045, %v7217
      %v7219 = vlaneseq
      %v7220 = vshrl.u32 %v7219, 7
      %v7221 = vsub.s32 0, %v7220
      %v7222 = vrot.slane %v7046, %v7221
      %v7223 = vlaneseq
      %v7224 = vshrl.u32 %v7223, 7
      %v7225 = vsub.s32 0, %v7224
      %v7226 = vrot.slane %v7047, %v7225
      %v7227 = vlaneseq
      %v7228 = vshrl.u32 %v7227, 7
      %v7229 = vsub.s32 0, %v7228
      %v7230 = vrot.slane %v7048, %v7229
      %v7231 = vlaneseq
      %v7232 = vshrl.u32 %v7231, 7
      %v7233 = vsub.s32 0, %v7232
      %v7234 = vrot.slane %v7049, %v7233
      %v7235 = vlaneseq
      %v7236 = vshrl.u32 %v7235, 7
      %v7237 = vsub.s32 0, %v7236
      %v7238 = vrot.slane %v7050, %v7237
      %v7239 = vlaneseq
      %v7240 = vshrl.u32 %v7239, 7
      %v7241 = vsub.s32 0, %v7240
      %v7242 = vrot.slane %v7051, %v7241
      %v7243 = vlaneseq
      %v7244 = vshrl.u32 %v7243, 7
      %v7245 = vsub.s32 0, %v7244
      %v7246 = vrot.slane %v7052, %v7245
      %v7247 = vlaneseq
      %v7248 = vshrl.u32 %v7247, 7
      %v7249 = vsub.s32 0, %v7248
      %v7250 = vrot.slane %v7053, %v7249
      %v7251 = vlaneseq
      %v7252 = vshrl.u32 %v7251, 7
      %v7253 = vsub.s32 0, %v7252
      %v7254 = vrot.slane %v7054, %v7253
      %v7255 = vlaneseq
      %v7256 = vshrl.u32 %v7255, 7
      %v7257 = vsub.s32 0, %v7256
      %v7258 = vrot.slane %v7055, %v7257
      %v7259 = vlaneseq
      %v7260 = vshrl.u32 %v7259, 7
      %v7261 = vsub.s32 0, %v7260
      %v7262 = vrot.slane %v7056, %v7261
      %v7263 = vlaneseq
      %v7264 = vshrl.u32 %v7263, 7
      %v7265 = vsub.s32 0, %v7264
      %v7266 = vrot.slane %v7057, %v7265
      %v7267 = vlaneseq
      %v7268 = vshrl.u32 %v7267, 7
      %v7269 = vsub.s32 0, %v7268
      %v7270 = vrot.slane %v7058, %v7269
      %v7271 = vlaneseq
      %v7272 = vshrl.u32 %v7271, 7
      %v7273 = vsub.s32 0, %v7272
      %v7274 = vrot.slane %v7059, %v7273
      %v7275 = vlaneseq
      %v7276 = vshrl.u32 %v7275, 7
      %v7277 = vsub.s32 0, %v7276
      %v7278 = vrot.slane %v7060, %v7277
      %v7279 = vlaneseq
      %v7280 = vshrl.u32 %v7279, 7
      %v7281 = vsub.s32 0, %v7280
      %v7282 = vrot.slane %v7061, %v7281
      %v7283 = vlaneseq
      %v7284 = vshrl.u32 %v7283, 7
      %v7285 = vsub.s32 0, %v7284
      %v7286 = vrot.slane %v7062, %v7285
      %v7287 = vlaneseq
      %v7288 = vshrl.u32 %v7287, 7
      %v7289 = vsub.s32 0, %v7288
      %v7290 = vrot.slane %v7063, %v7289
      %v7291 = vlaneseq
      %v7292 = vshrl.u32 %v7291, 7
      %v7293 = vsub.s32 0, %v7292
      %v7294 = vrot.slane %v7064, %v7293
      %v7295 = vlaneseq
      %v7296 = vshrl.u32 %v7295, 7
      %v7297 = vsub.s32 0, %v7296
      %v7298 = vrot.slane %v7065, %v7297
      %v7299 = vlaneseq
      %v7300 = vshrl.u32 %v7299, 7
      %v7301 = vsub.s32 0, %v7300
      %v7302 = vrot.slane %v7066, %v7301
      %v7303 = vlaneseq
      %v7304 = vshrl.u32 %v7303, 7
      %v7305 = vsub.s32 0, %v7304
      %v7306 = vrot.slane %v7067, %v7305
      %v7307 = vlaneseq
      %v7308 = vshrl.u32 %v7307, 7
      %v7309 = vsub.s32 0, %v7308
      %v7310 = vrot.slane %v7068, %v7309
      %v7311 = vlaneseq
      %v7312 = vshrl.u32 %v7311, 7
      %v7313 = vsub.s32 0, %v7312
      %v7314 = vrot.slane %v7069, %v7313
      %v7315 = vlaneseq
      %v7316 = vshrl.u32 %v7315, 7
      %v7317 = vsub.s32 0, %v7316
      %v7318 = vrot.slane %v7070, %v7317
      %v7319 = vlaneseq
      %v7320 = vshrl.u32 %v7319, 7
      %v7321 = vsub.s32 0, %v7320
      %v7322 = vrot.slane %v7071, %v7321
      %v7323 = vlaneseq
      %v7324 = vshrl.u32 %v7323, 7
      %v7325 = vsub.s32 0, %v7324
      %v7326 = vrot.slane %v7072, %v7325
      %v7327 = vlaneseq
      %v7328 = vshrl.u32 %v7327, 7
      %v7329 = vsub.s32 0, %v7328
      %v7330 = vrot.slane %v7073, %v7329
      %v7331 = vlaneseq
      %v7332 = vshrl.u32 %v7331, 7
      %v7333 = vsub.s32 0, %v7332
      %v7334 = vrot.slane %v7074, %v7333
      %v7335 = vlaneseq
      %v7336 = vshrl.u32 %v7335, 7
      %v7337 = vsub.s32 0, %v7336
      %v7338 = vrot.slane %v7075, %v7337
      %v7339 = vlaneseq
      %v7340 = vshrl.u32 %v7339, 7
      %v7341 = vsub.s32 0, %v7340
      %v7342 = vrot.slane %v7076, %v7341
      %v7343 = vlaneseq
      %v7344 = vshrl.u32 %v7343, 7
      %v7345 = vsub.s32 0, %v7344
      %v7346 = vrot.slane %v7077, %v7345
      %v7347 = vlaneseq
      %v7348 = vshrl.u32 %v7347, 7
      %v7349 = vsub.s32 0, %v7348
      %v7350 = vrot.slane %v7078, %v7349
      %v7351 = vlaneseq
      %v7352 = vshrl.u32 %v7351, 7
      %v7353 = vsub.s32 0, %v7352
      %v7354 = vrot.slane %v7079, %v7353
      %v7355 = vlaneseq
      %v7356 = vshrl.u32 %v7355, 7
      %v7357 = vsub.s32 0, %v7356
      %v7358 = vrot.slane %v7080, %v7357
      %v7359 = vlaneseq
      %v7360 = vshrl.u32 %v7359, 7
      %v7361 = vsub.s32 0, %v7360
      %v7362 = vrot.slane %v7081, %v7361
      %v7363 = vlaneseq
      %v7364 = vshrl.u32 %v7363, 7
      %v7365 = vsub.s32 0, %v7364
      %v7366 = vrot.slane %v7082, %v7365
      %v7367 = vlaneseq
      %v7368 = vshrl.u32 %v7367, 7
      %v7369 = vsub.s32 0, %v7368
      %v7370 = vrot.slane %v7083, %v7369
      %v7371 = vlaneseq
      %v7372 = vshrl.u32 %v7371, 7
      %v7373 = vsub.s32 0, %v7372
      %v7374 = vrot.slane %v7084, %v7373
      %v7375 = vlaneseq
      %v7376 = vshrl.u32 %v7375, 7
      %v7377 = vsub.s32 0, %v7376
      %v7378 = vrot.slane %v7085, %v7377
      %v7379 = vlaneseq
      %v7380 = vshrl.u32 %v7379, 7
      %v7381 = vsub.s32 0, %v7380
      %v7382 = vrot.slane %v7086, %v7381
      %v7383 = vlaneseq
      %v7384 = vshrl.u32 %v7383, 7
      %v7385 = vsub.s32 0, %v7384
      %v7386 = vrot.slane %v7087, %v7385
      %v7387 = vlaneseq
      %v7388 = vshrl.u32 %v7387, 7
      %v7389 = vsub.s32 0, %v7388
      %v7390 = vrot.slane %v7088, %v7389
      %v7391 = vlaneseq
      %v7392 = vshrl.u32 %v7391, 7
      %v7393 = vsub.s32 0, %v7392
      %v7394 = vrot.slane %v7089, %v7393
      %v7395 = vlaneseq
      %v7396 = vshrl.u32 %v7395, 7
      %v7397 = vsub.s32 0, %v7396
      %v7398 = vrot.slane %v7090, %v7397
      %v7399 = vlaneseq
      %v7400 = vshrl.u32 %v7399, 7
      %v7401 = vsub.s32 0, %v7400
      %v7402 = vrot.slane %v7091, %v7401
      %v7403 = vlaneseq
      %v7404 = vshrl.u32 %v7403, 7
      %v7405 = vsub.s32 0, %v7404
      %v7406 = vrot.slane %v7092, %v7405
      %v7407 = vlaneseq
      %v7408 = vshrl.u32 %v7407, 7
      %v7409 = vsub.s32 0, %v7408
      %v7410 = vrot.slane %v7093, %v7409
      %v7411 = vlaneseq
      %v7412 = vshrl.u32 %v7411, 7
      %v7413 = vsub.s32 0, %v7412
      %v7414 = vrot.slane %v7094, %v7413
      %v7415 = vsel %vm6589, %v7166, %v7162
      %v7416 = vsel %vm6592, %v7170, %v7415
      %v7417 = vsel %vm6595, %v7174, %v7416
      %v7418 = vsel %vm6598, %v7178, %v7417
      %v7419 = vsel %vm6601, %v7182, %v7418
      %v7420 = vsel %vm6604, %v7186, %v7419
      %v7421 = vsel %vm6607, %v7190, %v7420
      %v7422 = vsel %vm6589, %v7198, %v7194
      %v7423 = vsel %vm6592, %v7202, %v7422
      %v7424 = vsel %vm6595, %v7206, %v7423
      %v7425 = vsel %vm6598, %v7210, %v7424
      %v7426 = vsel %vm6601, %v7214, %v7425
      %v7427 = vsel %vm6604, %v7218, %v7426
      %v7428 = vsel %vm6607, %v7222, %v7427
      %v7429 = vsel %vm6589, %v7230, %v7226
      %v7430 = vsel %vm6592, %v7234, %v7429
      %v7431 = vsel %vm6595, %v7238, %v7430
      %v7432 = vsel %vm6598, %v7242, %v7431
      %v7433 = vsel %vm6601, %v7246, %v7432
      %v7434 = vsel %vm6604, %v7250, %v7433
      %v7435 = vsel %vm6607, %v7254, %v7434
      %v7436 = vsel %vm6589, %v7262, %v7258
      %v7437 = vsel %vm6592, %v7266, %v7436
      %v7438 = vsel %vm6595, %v7270, %v7437
      %v7439 = vsel %vm6598, %v7274, %v7438
      %v7440 = vsel %vm6601, %v7278, %v7439
      %v7441 = vsel %vm6604, %v7282, %v7440
      %v7442 = vsel %vm6607, %v7286, %v7441
      %v7443 = vsel %vm6589, %v7294, %v7290
      %v7444 = vsel %vm6592, %v7298, %v7443
      %v7445 = vsel %vm6595, %v7302, %v7444
      %v7446 = vsel %vm6598, %v7306, %v7445
      %v7447 = vsel %vm6601, %v7310, %v7446
      %v7448 = vsel %vm6604, %v7314, %v7447
      %v7449 = vsel %vm6607, %v7318, %v7448
      %v7450 = vsel %vm6589, %v7326, %v7322
      %v7451 = vsel %vm6592, %v7330, %v7450
      %v7452 = vsel %vm6595, %v7334, %v7451
      %v7453 = vsel %vm6598, %v7338, %v7452
      %v7454 = vsel %vm6601, %v7342, %v7453
      %v7455 = vsel %vm6604, %v7346, %v7454
      %v7456 = vsel %vm6607, %v7350, %v7455
      %v7457 = vsel %vm6589, %v7358, %v7354
      %v7458 = vsel %vm6592, %v7362, %v7457
      %v7459 = vsel %vm6595, %v7366, %v7458
      %v7460 = vsel %vm6598, %v7370, %v7459
      %v7461 = vsel %vm6601, %v7374, %v7460
      %v7462 = vsel %vm6604, %v7378, %v7461
      %v7463 = vsel %vm6607, %v7382, %v7462
      %v7464 = vsel %vm6589, %v7390, %v7386
      %v7465 = vsel %vm6592, %v7394, %v7464
      %v7466 = vsel %vm6595, %v7398, %v7465
      %v7467 = vsel %vm6598, %v7402, %v7466
      %v7468 = vsel %vm6601, %v7406, %v7467
      %v7469 = vsel %vm6604, %v7410, %v7468
      %v7470 = vsel %vm6607, %v7414, %v7469
      %7479 = vst.msk [vmem:[%s278] sm:$0xff] %vm358, %v7421
      %7480 = vst.msk [vmem:[%s278 + $0x8] sm:$0xff] %vm358, %v7428
      %7481 = vst.msk [vmem:[%s278 + $0x10] sm:$0xff] %vm358, %v7435
      %7482 = vst.msk [vmem:[%s278 + $0x18] sm:$0xff] %vm358, %v7442
      %7483 = vst.msk [vmem:[%s278 + $0x20] sm:$0xff] %vm358, %v7449
      %7484 = vst.msk [vmem:[%s278 + $0x28] sm:$0xff] %vm358, %v7456
      %7485 = vst.msk [vmem:[%s278 + $0x30] sm:$0xff] %vm358, %v7463
      %7486 = vst.msk [vmem:[%s278 + $0x38] sm:$0xff] %vm358, %v7470
      %p7487 = scmp.lt.s32.totalorder %s18, 1
      %s7488 = scalar_select %p7487, %s18, 1
      %s7489 = smul.addr %s7488, 8
      %s7490 = smul.addr %s7489, 8
      %s7491 = scalar_lea.vmem %s7, %s7490
      // Predicated region
      $region49: #{tpu_custom_call.1} parent=47 // pred_check
        %p7492 = pneg %p188
      $region50: #{tpu_custom_call.1} parent=47 // pred_check_branch
        %7494 = sbr.rel (%p7492) target = $region52
      $region51: #{tpu_custom_call.1} parent=47 // pred_region
        _
      $region52: #{tpu_custom_call.1} parent=47 // pred_fallthru
        _
    $region48: #{tpu_custom_call.1} parent=5 // pred_fallthru
      _
    %p7495 = scmp.le.s32.totalorder 2, %s13
    // Predicated region
    $region53: #{tpu_custom_call.1} parent=5 // pred_check
      %p7496 = pneg %p7495
    $region54: #{tpu_custom_call.1} parent=5 // pred_check_branch
      %7498 = sbr.rel (%p7496) target = $region56
    $region55: #{tpu_custom_call.1} parent=5 // pred_region
      %s7499 = ssub.s32 %s13, 2
      // Predicated region
      $region57: #{tpu_custom_call.1} parent=55 // pred_check
        %p7500 = pneg %p194
      $region58: #{tpu_custom_call.1} parent=55 // pred_check_branch
        %7502 = sbr.rel (%p7500) target = $region60
      $region59: #{tpu_custom_call.1} parent=55 // pred_region
        %p7503 = scmp.lt.s32.totalorder %s19, 1
        %s7504 = scalar_select %p7503, %s19, 1
        %s7505 = smul.addr %s7504, 8
        %s7506 = smul.addr %s7505, 8
        %s7507 = scalar_lea.vmem %s7, %s7506
      $region60: #{tpu_custom_call.1} parent=55 // pred_fallthru
        _
    $region56: #{tpu_custom_call.1} parent=5 // pred_fallthru
      _
  $region6: #{tpu_custom_call.1} parent=0 // loop_footer
    %s17 = sadd.s32 1, %s13
  $region7: #{tpu_custom_call.1} parent=0 // loop_footer_branch
    %12 = sbr.rel target = $region3
  $region8: #{tpu_custom_call.1} parent=0 // loop_exit
    _

</llo_original>
